<compile_context>
chip_gen: v5e
topology: v5e:2x2
jax: 0.10.0
libtpu: 0.0.40
codegen_flags: <defaults>
</compile_context>

<pallas_src>
import jax
import jax.numpy as jnp
from jax.experimental import pallas as pl
from jax.experimental.pallas import tpu as pltpu


_VMEM = pl.BlockSpec(memory_space=pltpu.MemorySpace.VMEM)
_SMEM = pl.BlockSpec(memory_space=pltpu.MemorySpace.SMEM)


def _round_up(x, m):
    return ((x + m - 1) // m) * m


# ----------------------------------------------------------------------------
# Pallas kernels
# ----------------------------------------------------------------------------
def matmul_stats_kernel(a_ref, w_ref, y_ref, stats_ref):
    """Pass 1: Y = A @ W (bf16 in, f32 acc) + per-tile BatchNorm partial sums.

    A: (TM, K) im2col patches, W: (K, OC). Writes the f32 Y tile and a
    (1, 8, OC) stats tile: row 0 = sum(Y), row 1 = sum(Y*Y) over the tile rows.
    The conv bias is intentionally omitted: it is exactly cancelled by the
    training-mode BatchNorm mean subtraction that follows.
    """
    y = jnp.dot(a_ref[...], w_ref[...], preferred_element_type=jnp.float32)
    y_ref[...] = y
    oc = y.shape[1]
    ssum = jnp.sum(y, axis=0, keepdims=True)        # (1, OC)
    ssq = jnp.sum(y * y, axis=0, keepdims=True)     # (1, OC)
    ridx = jax.lax.broadcasted_iota(jnp.int32, (8, oc), 0)
    stats = jnp.where(ridx == 0, ssum, jnp.where(ridx == 1, ssq, 0.0))
    stats_ref[...] = stats[None]


def bn_lrelu_drop_kernel(seed_ref, scale_ref, shift_ref, y_ref, o_ref):
    """Pass 2: y*scale + shift ; LeakyReLU(0.2) ; Dropout(p=0.5, survivors x2)."""
    y = y_ref[...] * scale_ref[...] + shift_ref[...]
    y = jnp.where(y >= 0.0, y, 0.2 * y)

    # Dropout(0.5) with training semantics. Counter-based integer hash keyed on
    # (global element index, seed) -- works on TPU and in interpret mode.
    # TODO(synk): RNG stream differs from torch's; keep-prob / scaling semantics match.
    tm, oc = y.shape
    row = jax.lax.broadcasted_iota(jnp.int32, (tm, oc), 0).astype(jnp.uint32)
    col = jax.lax.broadcasted_iota(jnp.int32, (tm, oc), 1).astype(jnp.uint32)
    base = (pl.program_id(0) * tm).astype(jnp.uint32)
    gid = (base + row) * jnp.uint32(oc) + col
    seed = seed_ref[0].astype(jnp.uint32)
    h = gid * jnp.uint32(0x9E3779B1) + seed * jnp.uint32(0x85EBCA77)
    h = h ^ (h >> 16)
    h = h * jnp.uint32(0x7FEB352D)
    h = h ^ (h >> 15)
    h = h * jnp.uint32(0x846CA68B)
    h = h ^ (h >> 16)
    keep = (h & jnp.uint32(1)) == jnp.uint32(0)

    o_ref[...] = jnp.where(keep, y + y, 0.0).astype(o_ref.dtype)


def conv4_fc_kernel(a_ref, w4_ref, b4_ref, wfc_ref, bfc_ref, o_ref):
    """Fused head: conv4 over its full 3x3 window (== one matmul) + bias, then fc + bias."""
    h = jnp.dot(a_ref[...], w4_ref[...], preferred_element_type=jnp.float32)
    h = h + b4_ref[...]
    out = jnp.dot(h.astype(jnp.bfloat16), wfc_ref[...],
                  preferred_element_type=jnp.float32)
    o_ref[...] = out + bfc_ref[...]


# ----------------------------------------------------------------------------
# Glue: channels-last im2col + pallas_call wrappers
# ----------------------------------------------------------------------------
def im2col_nhwc(x, kh, kw, stride, pad):
    """Patches from NHWC input -> (M, K), M = N*OH*OW, K = KH*KW*C ordered
    (kh, kw, c), matching weight.transpose(2, 3, 1, 0).reshape(K, OC)."""
    n, h, w, c = x.shape
    if pad:
        x = jnp.pad(x, ((0, 0), (pad, pad), (pad, pad), (0, 0)))
    oh = (h + 2 * pad - kh) // stride + 1
    ow = (w + 2 * pad - kw) // stride + 1
    cols = []
    for i in range(kh):
        for j in range(kw):
            cols.append(x[:, i:i + stride * (oh - 1) + 1:stride,
                             j:j + stride * (ow - 1) + 1:stride, :])  # (N, OH, OW, C)
    p = jnp.stack(cols, axis=3)                   # (N, OH, OW, KH*KW, C)
    return p.reshape(n * oh * ow, kh * kw * c), oh, ow


def conv_bn_lrelu_dropout(x_nhwc, weight, seed_arr, *, stride, pad, tm_cap=256):
    """One conv -> BN -> LeakyReLU -> Dropout layer; channels-last bf16 in/out."""
    oc, c, kh, kw = weight.shape
    n = x_nhwc.shape[0]
    a, oh, ow = im2col_nhwc(x_nhwc, kh, kw, stride, pad)      # (M, K) bf16
    m, k = a.shape
    w_mat = weight.transpose(2, 3, 1, 0).reshape(k, oc).astype(jnp.bfloat16)

    # M-tiling: pad with zero rows so every tile is full; zero rows contribute
    # nothing to the BN partial sums because there is no pre-BN bias.
    tm = min(tm_cap, _round_up(m, 8))
    mp = _round_up(m, tm)
    if mp != m:
        a = jnp.pad(a, ((0, mp - m), (0, 0)))
    nt = mp // tm

    y, stats = pl.pallas_call(
        matmul_stats_kernel,
        grid=(nt,),
        in_specs=[pl.BlockSpec((tm, k), lambda i: (i, 0)),
                  pl.BlockSpec((k, oc), lambda i: (0, 0))],
        out_specs=[pl.BlockSpec((tm, oc), lambda i: (i, 0)),
                   pl.BlockSpec((1, 8, oc), lambda i: (i, 0, 0))],
        out_shape=[jax.ShapeDtypeStruct((mp, oc), jnp.float32),
                   jax.ShapeDtypeStruct((nt, 8, oc), jnp.float32)],
        compiler_params=pltpu.CompilerParams(dimension_semantics=("parallel",)),
    )(a, w_mat)

    # Exact full-batch BatchNorm2d statistics (training mode: biased variance,
    # eps=1e-5, default gamma=1 / beta=0), reduced over the per-tile partials.
    mean = stats[:, 0, :].sum(axis=0) / m
    ex2 = stats[:, 1, :].sum(axis=0) / m
    var = jnp.maximum(ex2 - mean * mean, 0.0)
    inv = jax.lax.rsqrt(var + 1e-5)
    scale = inv.reshape(1, oc).astype(jnp.float32)
    shift = (-mean * inv).reshape(1, oc).astype(jnp.float32)

    out = pl.pallas_call(
        bn_lrelu_drop_kernel,
        grid=(nt,),
        in_specs=[_SMEM,
                  pl.BlockSpec((1, oc), lambda i: (0, 0)),
                  pl.BlockSpec((1, oc), lambda i: (0, 0)),
                  pl.BlockSpec((tm, oc), lambda i: (i, 0))],
        out_specs=pl.BlockSpec((tm, oc), lambda i: (i, 0)),
        out_shape=jax.ShapeDtypeStruct((mp, oc), jnp.bfloat16),
        compiler_params=pltpu.CompilerParams(dimension_semantics=("parallel",)),
    )(seed_arr, scale, shift, y)

    return out[:m].reshape(n, oh, ow, oc)


def conv4_fc_head(x_nhwc, w4, b4, wfc, bfc):
    """conv4 (3x3 valid, stride 1, over a 3x3 input -> 1x1 spatial) fused with fc."""
    n, hh, ww, c = x_nhwc.shape
    oc4 = w4.shape[0]
    kdim = wfc.shape[0]
    a = x_nhwc.reshape(n, hh * ww * c)   # full-window patch, (kh, kw, c)-ordered
    w4_mat = w4.transpose(2, 3, 1, 0).reshape(hh * ww * c, oc4).astype(jnp.bfloat16)
    wfc_mat = wfc.T.astype(jnp.bfloat16)                   # (4d, k)
    out = pl.pallas_call(
        conv4_fc_kernel,
        out_shape=jax.ShapeDtypeStruct((n, kdim), jnp.float32),
        in_specs=[_VMEM, _VMEM, _VMEM, _VMEM, _VMEM],
        out_specs=_VMEM,
    )(a, w4_mat, b4.reshape(1, oc4).astype(jnp.float32),
      wfc_mat, bfc.reshape(1, kdim).astype(jnp.float32))
    return out


# ----------------------------------------------------------------------------
# Module: parameters + forward
# ----------------------------------------------------------------------------
def init_params(key, d=128, k=100):
    """DCGAN-style init: conv weights ~ N(0, 0.02), biases zero. conv1..3 biases
    are kept for parameter parity with the PyTorch module but are not consumed
    by the kernels (a bias added before training-mode BatchNorm cancels exactly)."""
    ks = jax.random.split(key, 5)
    std = 0.02
    return {
        "conv1_w": jax.random.normal(ks[0], (d, 1, 4, 4), jnp.float32) * std,
        "conv1_b": jnp.zeros((d,), jnp.float32),
        "conv2_w": jax.random.normal(ks[1], (2 * d, d, 4, 4), jnp.float32) * std,
        "conv2_b": jnp.zeros((2 * d,), jnp.float32),
        "conv3_w": jax.random.normal(ks[2], (4 * d, 2 * d, 3, 3), jnp.float32) * std,
        "conv3_b": jnp.zeros((4 * d,), jnp.float32),
        "conv4_w": jax.random.normal(ks[3], (4 * d, 4 * d, 3, 3), jnp.float32) * std,
        "conv4_b": jnp.zeros((4 * d,), jnp.float32),
        "fc_w": jax.random.normal(ks[4], (k, 4 * d), jnp.float32) * std,
        "fc_b": jnp.zeros((k,), jnp.float32),
    }


@jax.jit
def inverse_dcgan_forward(params, x, dropout_seed):
    """x: (N, 1, H, W) float32 NCHW. dropout_seed: traced (1,) int32 (no recompiles)."""
    h = jnp.transpose(x, (0, 2, 3, 1)).astype(jnp.bfloat16)    # NHWC once, bf16 matmuls
    h = conv_bn_lrelu_dropout(h, params["conv1_w"], dropout_seed + 1, stride=2, pad=1)
    h = conv_bn_lrelu_dropout(h, params["conv2_w"], dropout_seed + 2, stride=2, pad=1)
    h = conv_bn_lrelu_dropout(h, params["conv3_w"], dropout_seed + 3, stride=2, pad=0)
    out = conv4_fc_head(h, params["conv4_w"], params["conv4_b"],
                        params["fc_w"], params["fc_b"])
    kdim = params["fc_w"].shape[0]
    return out.reshape(-1, kdim, 1, 1)


if __name__ == "__main__":
    key = jax.random.PRNGKey(0)
    k_in, k_par = jax.random.split(key)

    d, kdim, n = 16, 100, 2              # small width; module default d=128, k=100
    x = jax.random.normal(k_in, (n, 1, 28, 28), jnp.float32)   # MNIST-shaped input
    params = init_params(k_par, d=d, k=kdim)
    seed = jnp.array([42], jnp.int32)

    out = inverse_dcgan_forward(params, x, seed)
    out = jax.block_until_ready(out)

    assert out.shape == (n, kdim, 1, 1), out.shape
    assert bool(jnp.all(jnp.isfinite(out)))
    print("KERNEL_OK")
</pallas_src>

<mosaic_0001>
module attributes {stable_mosaic.version = 11 : i64} {
  func.func @matmul_stats_kernel(%arg0: i32, %arg1: memref<256x16xbf16, #tpu.memory_space<vmem>>, %arg2: memref<16x16xbf16, #tpu.memory_space<vmem>>, %arg3: memref<256x16xf32, #tpu.memory_space<vmem>>, %arg4: memref<1x8x16xf32, #tpu.memory_space<vmem>>) attributes {dimension_semantics = [#tpu.dimension_semantics<parallel>], iteration_bounds = array<i64: 2>, scalar_prefetch = 0 : i64, scratch_operands = 0 : i64, tpu.core_type = #tpu.core_type<tc>, window_params = [{transform_indices = @transform_0, window_bounds = array<i64: 256, 16>}, {pipeline_mode = #tpu.pipeline_mode<synchronous>, transform_indices = @transform_1, window_bounds = array<i64: 16, 16>}, {transform_indices = @transform_2, window_bounds = array<i64: 256, 16>}, {transform_indices = @transform_3, window_bounds = array<i64: 1, 8, 16>}]} {
    %c0 = arith.constant 0 : index
    %c0_0 = arith.constant 0 : index
    %0 = vector.load %arg1[%c0, %c0_0] : memref<256x16xbf16, #tpu.memory_space<vmem>>, vector<256x16xbf16>
    %c0_1 = arith.constant 0 : index
    %c0_2 = arith.constant 0 : index
    %1 = vector.load %arg2[%c0_1, %c0_2] : memref<16x16xbf16, #tpu.memory_space<vmem>>, vector<16x16xbf16>
    %cst = arith.constant dense<0.000000e+00> : vector<256x16xf32>
    %2 = tpu.matmul %0, %1, %cst {dimension_numbers = #tpu.dot_dimension_numbers<[1], [0], [0], [1], [0, 0, 1, 1], [], []>} : vector<256x16xbf16>, vector<16x16xbf16>, vector<256x16xf32> -> vector<256x16xf32>
    %c0_3 = arith.constant 0 : index
    %c0_4 = arith.constant 0 : index
    %3 = vector.load %arg3[%c0_3, %c0_4] : memref<256x16xf32, #tpu.memory_space<vmem>>, vector<256x16xf32>
    tpu.vector_store %arg3[%c0_3, %c0_4], %2 {strides = array<i32>} : memref<256x16xf32, #tpu.memory_space<vmem>>, vector<256x16xf32>,
    %cst_5 = arith.constant dense<0.000000e+00> : vector<16xf32>
    %4 = vector.multi_reduction <add>, %2, %cst_5 [0] : vector<256x16xf32> to vector<16xf32>
    %5 = vector.shape_cast %4 : vector<16xf32> to vector<1x16xf32>
    %6 = arith.mulf %2, %2 : vector<256x16xf32>
    %cst_6 = arith.constant dense<0.000000e+00> : vector<16xf32>
    %7 = vector.multi_reduction <add>, %6, %cst_6 [0] : vector<256x16xf32> to vector<16xf32>
    %8 = vector.shape_cast %7 : vector<16xf32> to vector<1x16xf32>
    %9 = tpu.iota {dimensions = array<i32: 0>} : vector<8x16xi32>
    %c0_i32 = arith.constant 0 : i32
    %10 = vector.broadcast %c0_i32 : i32 to vector<8x16xi32>
    %11 = arith.cmpi eq, %9, %10 : vector<8x16xi32>
    %c1_i32 = arith.constant 1 : i32
    %12 = vector.broadcast %c1_i32 : i32 to vector<8x16xi32>
    %13 = arith.cmpi eq, %9, %12 : vector<8x16xi32>
    %cst_7 = arith.constant 0.000000e+00 : f32
    %14 = vector.shape_cast %8 : vector<1x16xf32> to vector<1x16xf32>
    %15 = vector.broadcast %14 : vector<1x16xf32> to vector<8x16xf32>
    %16 = vector.broadcast %cst_7 : f32 to vector<8x16xf32>
    %17 = arith.select %13, %15, %16 : vector<8x16xi1>, vector<8x16xf32>
    %18 = vector.shape_cast %5 : vector<1x16xf32> to vector<1x16xf32>
    %19 = vector.broadcast %18 : vector<1x16xf32> to vector<8x16xf32>
    %20 = arith.select %11, %19, %17 : vector<8x16xi1>, vector<8x16xf32>
    %21 = vector.shape_cast %20 : vector<8x16xf32> to vector<1x8x16xf32>
    %c0_8 = arith.constant 0 : index
    %c0_9 = arith.constant 0 : index
    %c0_10 = arith.constant 0 : index
    %22 = vector.load %arg4[%c0_8, %c0_9, %c0_10] : memref<1x8x16xf32, #tpu.memory_space<vmem>>, vector<1x8x16xf32>
    tpu.vector_store %arg4[%c0_8, %c0_9, %c0_10], %21 {strides = array<i32>} : memref<1x8x16xf32, #tpu.memory_space<vmem>>, vector<1x8x16xf32>,
    return
  }
  func.func @transform_0(%arg0: i32) -> (i32, i32) {
    %c0_i32 = arith.constant 0 : i32
    %c0_i32_0 = arith.constant 0 : i32
    return %arg0, %c0_i32 : i32, i32
  }
  func.func @transform_1(%arg0: i32) -> (i32, i32) {
    %c0_i32 = arith.constant 0 : i32
    %c0_i32_0 = arith.constant 0 : i32
    %c0_i32_1 = arith.constant 0 : i32
    return %c0_i32, %c0_i32_0 : i32, i32
  }
  func.func @transform_2(%arg0: i32) -> (i32, i32) {
    %c0_i32 = arith.constant 0 : i32
    %c0_i32_0 = arith.constant 0 : i32
    return %arg0, %c0_i32 : i32, i32
  }
  func.func @transform_3(%arg0: i32) -> (i32, i32, i32) {
    %c0_i32 = arith.constant 0 : i32
    %c0_i32_0 = arith.constant 0 : i32
    %c0_i32_1 = arith.constant 0 : i32
    return %arg0, %c0_i32, %c0_i32_0 : i32, i32, i32
  }
}

module attributes {stable_mosaic.version = 11 : i64} {
  func.func @bn_lrelu_drop_kernel(%arg0: i32, %arg1: memref<1xi32, #tpu.memory_space<smem>>, %arg2: memref<1x16xf32, #tpu.memory_space<vmem>>, %arg3: memref<1x16xf32, #tpu.memory_space<vmem>>, %arg4: memref<256x16xf32, #tpu.memory_space<vmem>>, %arg5: memref<256x16xbf16, #tpu.memory_space<vmem>>) attributes {dimension_semantics = [#tpu.dimension_semantics<parallel>], iteration_bounds = array<i64: 2>, scalar_prefetch = 0 : i64, scratch_operands = 0 : i64, tpu.core_type = #tpu.core_type<tc>, window_params = [{transform_indices = @transform_0, window_bounds = array<i64: 1>}, {pipeline_mode = #tpu.pipeline_mode<synchronous>, transform_indices = @transform_1, window_bounds = array<i64: 1, 16>}, {pipeline_mode = #tpu.pipeline_mode<synchronous>, transform_indices = @transform_2, window_bounds = array<i64: 1, 16>}, {transform_indices = @transform_3, window_bounds = array<i64: 256, 16>}, {transform_indices = @transform_4, window_bounds = array<i64: 256, 16>}]} {
    %c0 = arith.constant 0 : index
    %c0_0 = arith.constant 0 : index
    %0 = vector.load %arg4[%c0, %c0_0] : memref<256x16xf32, #tpu.memory_space<vmem>>, vector<256x16xf32>
    %c0_1 = arith.constant 0 : index
    %c0_2 = arith.constant 0 : index
    %1 = vector.load %arg2[%c0_1, %c0_2] : memref<1x16xf32, #tpu.memory_space<vmem>>, vector<1x16xf32>
    %2 = vector.broadcast %1 : vector<1x16xf32> to vector<256x16xf32>
    %3 = arith.mulf %0, %2 : vector<256x16xf32>
    %c0_3 = arith.constant 0 : index
    %c0_4 = arith.constant 0 : index
    %4 = vector.load %arg3[%c0_3, %c0_4] : memref<1x16xf32, #tpu.memory_space<vmem>>, vector<1x16xf32>
    %5 = vector.broadcast %4 : vector<1x16xf32> to vector<256x16xf32>
    %6 = arith.addf %3, %5 : vector<256x16xf32>
    %cst = arith.constant 0.000000e+00 : f32
    %7 = vector.broadcast %cst : f32 to vector<256x16xf32>
    %8 = arith.cmpf oge, %6, %7 : vector<256x16xf32>
    %cst_5 = arith.constant 2.000000e-01 : f32
    %9 = vector.broadcast %cst_5 : f32 to vector<256x16xf32>
    %10 = arith.mulf %9, %6 : vector<256x16xf32>
    %11 = arith.select %8, %6, %10 : vector<256x16xi1>, vector<256x16xf32>
    %12 = tpu.iota {dimensions = array<i32: 0>} : vector<256x16xi32>
    %13 = tpu.iota {dimensions = array<i32: 1>} : vector<256x16xi32>
    %c256_i32 = arith.constant 256 : i32
    %14 = arith.muli %arg0, %c256_i32 : i32
    %15 = vector.broadcast %14 : i32 to vector<256x16xi32>
    %16 = arith.addi %15, %12 : vector<256x16xi32>
    %c16_i32 = arith.constant 16 : i32
    %17 = vector.broadcast %c16_i32 : i32 to vector<256x16xi32>
    %18 = arith.muli %16, %17 : vector<256x16xi32>
    %19 = arith.addi %18, %13 : vector<256x16xi32>
    %c0_6 = arith.constant 0 : index
    %20 = memref.load %arg1[%c0_6] : memref<1xi32, #tpu.memory_space<smem>>
    %c-1640531535_i32 = arith.constant -1640531535 : i32
    %21 = vector.broadcast %c-1640531535_i32 : i32 to vector<256x16xi32>
    %22 = arith.muli %19, %21 : vector<256x16xi32>
    %c-2048144777_i32 = arith.constant -2048144777 : i32
    %23 = arith.muli %20, %c-2048144777_i32 : i32
    %24 = vector.broadcast %23 : i32 to vector<256x16xi32>
    %25 = arith.addi %22, %24 : vector<256x16xi32>
    %c16_i32_7 = arith.constant 16 : i32
    %26 = vector.broadcast %c16_i32_7 : i32 to vector<256x16xi32>
    %27 = arith.shrui %25, %26 : vector<256x16xi32>
    %28 = arith.xori %25, %27 : vector<256x16xi32>
    %c2146121005_i32 = arith.constant 2146121005 : i32
    %29 = vector.broadcast %c2146121005_i32 : i32 to vector<256x16xi32>
    %30 = arith.muli %28, %29 : vector<256x16xi32>
    %c15_i32 = arith.constant 15 : i32
    %31 = vector.broadcast %c15_i32 : i32 to vector<256x16xi32>
    %32 = arith.shrui %30, %31 : vector<256x16xi32>
    %33 = arith.xori %30, %32 : vector<256x16xi32>
    %c-2073254261_i32 = arith.constant -2073254261 : i32
    %34 = vector.broadcast %c-2073254261_i32 : i32 to vector<256x16xi32>
    %35 = arith.muli %33, %34 : vector<256x16xi32>
    %c16_i32_8 = arith.constant 16 : i32
    %36 = vector.broadcast %c16_i32_8 : i32 to vector<256x16xi32>
    %37 = arith.shrui %35, %36 : vector<256x16xi32>
    %38 = arith.xori %35, %37 : vector<256x16xi32>
    %c1_i32 = arith.constant 1 : i32
    %39 = vector.broadcast %c1_i32 : i32 to vector<256x16xi32>
    %40 = arith.andi %38, %39 : vector<256x16xi32>
    %c0_i32 = arith.constant 0 : i32
    %41 = vector.broadcast %c0_i32 : i32 to vector<256x16xi32>
    %42 = arith.cmpi eq, %40, %41 : vector<256x16xi32>
    %43 = arith.addf %11, %11 : vector<256x16xf32>
    %cst_9 = arith.constant 0.000000e+00 : f32
    %44 = vector.broadcast %cst_9 : f32 to vector<256x16xf32>
    %45 = arith.select %42, %43, %44 : vector<256x16xi1>, vector<256x16xf32>
    %46 = arith.truncf %45 : vector<256x16xf32> to vector<256x16xbf16>
    %c0_10 = arith.constant 0 : index
    %c0_11 = arith.constant 0 : index
    %47 = vector.load %arg5[%c0_10, %c0_11] : memref<256x16xbf16, #tpu.memory_space<vmem>>, vector<256x16xbf16>
    tpu.vector_store %arg5[%c0_10, %c0_11], %46 {strides = array<i32>} : memref<256x16xbf16, #tpu.memory_space<vmem>>, vector<256x16xbf16>,
    return
  }
  func.func @transform_0(%arg0: i32) -> i32 {
    %c0_i32 = arith.constant 0 : i32
    %c0_i32_0 = arith.constant 0 : i32
    return %c0_i32 : i32
  }
  func.func @transform_1(%arg0: i32) -> (i32, i32) {
    %c0_i32 = arith.constant 0 : i32
    %c0_i32_0 = arith.constant 0 : i32
    %c0_i32_1 = arith.constant 0 : i32
    return %c0_i32, %c0_i32_0 : i32, i32
  }
  func.func @transform_2(%arg0: i32) -> (i32, i32) {
    %c0_i32 = arith.constant 0 : i32
    %c0_i32_0 = arith.constant 0 : i32
    %c0_i32_1 = arith.constant 0 : i32
    return %c0_i32, %c0_i32_0 : i32, i32
  }
  func.func @transform_3(%arg0: i32) -> (i32, i32) {
    %c0_i32 = arith.constant 0 : i32
    %c0_i32_0 = arith.constant 0 : i32
    return %arg0, %c0_i32 : i32, i32
  }
  func.func @transform_4(%arg0: i32) -> (i32, i32) {
    %c0_i32 = arith.constant 0 : i32
    %c0_i32_0 = arith.constant 0 : i32
    return %arg0, %c0_i32 : i32, i32
  }
}

module attributes {stable_mosaic.version = 11 : i64} {
  func.func @matmul_stats_kernel(%arg0: i32, %arg1: memref<104x256xbf16, #tpu.memory_space<vmem>>, %arg2: memref<256x32xbf16, #tpu.memory_space<vmem>>, %arg3: memref<104x32xf32, #tpu.memory_space<vmem>>, %arg4: memref<1x8x32xf32, #tpu.memory_space<vmem>>) attributes {dimension_semantics = [#tpu.dimension_semantics<parallel>], iteration_bounds = array<i64: 1>, scalar_prefetch = 0 : i64, scratch_operands = 0 : i64, tpu.core_type = #tpu.core_type<tc>, window_params = [{transform_indices = @transform_0, window_bounds = array<i64: 104, 256>}, {pipeline_mode = #tpu.pipeline_mode<synchronous>, transform_indices = @transform_1, window_bounds = array<i64: 256, 32>}, {transform_indices = @transform_2, window_bounds = array<i64: 104, 32>}, {transform_indices = @transform_3, window_bounds = array<i64: 1, 8, 32>}]} {
    %c0 = arith.constant 0 : index
    %c0_0 = arith.constant 0 : index
    %0 = vector.load %arg1[%c0, %c0_0] : memref<104x256xbf16, #tpu.memory_space<vmem>>, vector<104x256xbf16>
    %c0_1 = arith.constant 0 : index
    %c0_2 = arith.constant 0 : index
    %1 = vector.load %arg2[%c0_1, %c0_2] : memref<256x32xbf16, #tpu.memory_space<vmem>>, vector<256x32xbf16>
    %cst = arith.constant dense<0.000000e+00> : vector<104x32xf32>
    %2 = tpu.matmul %0, %1, %cst {dimension_numbers = #tpu.dot_dimension_numbers<[1], [0], [0], [1], [0, 0, 1, 1], [], []>} : vector<104x256xbf16>, vector<256x32xbf16>, vector<104x32xf32> -> vector<104x32xf32>
    %c0_3 = arith.constant 0 : index
    %c0_4 = arith.constant 0 : index
    %3 = vector.load %arg3[%c0_3, %c0_4] : memref<104x32xf32, #tpu.memory_space<vmem>>, vector<104x32xf32>
    tpu.vector_store %arg3[%c0_3, %c0_4], %2 {strides = array<i32>} : memref<104x32xf32, #tpu.memory_space<vmem>>, vector<104x32xf32>,
    %cst_5 = arith.constant dense<0.000000e+00> : vector<32xf32>
    %4 = vector.multi_reduction <add>, %2, %cst_5 [0] : vector<104x32xf32> to vector<32xf32>
    %5 = vector.shape_cast %4 : vector<32xf32> to vector<1x32xf32>
    %6 = arith.mulf %2, %2 : vector<104x32xf32>
    %cst_6 = arith.constant dense<0.000000e+00> : vector<32xf32>
    %7 = vector.multi_reduction <add>, %6, %cst_6 [0] : vector<104x32xf32> to vector<32xf32>
    %8 = vector.shape_cast %7 : vector<32xf32> to vector<1x32xf32>
    %9 = tpu.iota {dimensions = array<i32: 0>} : vector<8x32xi32>
    %c0_i32 = arith.constant 0 : i32
    %10 = vector.broadcast %c0_i32 : i32 to vector<8x32xi32>
    %11 = arith.cmpi eq, %9, %10 : vector<8x32xi32>
    %c1_i32 = arith.constant 1 : i32
    %12 = vector.broadcast %c1_i32 : i32 to vector<8x32xi32>
    %13 = arith.cmpi eq, %9, %12 : vector<8x32xi32>
    %cst_7 = arith.constant 0.000000e+00 : f32
    %14 = vector.shape_cast %8 : vector<1x32xf32> to vector<1x32xf32>
    %15 = vector.broadcast %14 : vector<1x32xf32> to vector<8x32xf32>
    %16 = vector.broadcast %cst_7 : f32 to vector<8x32xf32>
    %17 = arith.select %13, %15, %16 : vector<8x32xi1>, vector<8x32xf32>
    %18 = vector.shape_cast %5 : vector<1x32xf32> to vector<1x32xf32>
    %19 = vector.broadcast %18 : vector<1x32xf32> to vector<8x32xf32>
    %20 = arith.select %11, %19, %17 : vector<8x32xi1>, vector<8x32xf32>
    %21 = vector.shape_cast %20 : vector<8x32xf32> to vector<1x8x32xf32>
    %c0_8 = arith.constant 0 : index
    %c0_9 = arith.constant 0 : index
    %c0_10 = arith.constant 0 : index
    %22 = vector.load %arg4[%c0_8, %c0_9, %c0_10] : memref<1x8x32xf32, #tpu.memory_space<vmem>>, vector<1x8x32xf32>
    tpu.vector_store %arg4[%c0_8, %c0_9, %c0_10], %21 {strides = array<i32>} : memref<1x8x32xf32, #tpu.memory_space<vmem>>, vector<1x8x32xf32>,
    return
  }
  func.func @transform_0(%arg0: i32) -> (i32, i32) {
    %c0_i32 = arith.constant 0 : i32
    %c0_i32_0 = arith.constant 0 : i32
    return %arg0, %c0_i32 : i32, i32
  }
  func.func @transform_1(%arg0: i32) -> (i32, i32) {
    %c0_i32 = arith.constant 0 : i32
    %c0_i32_0 = arith.constant 0 : i32
    %c0_i32_1 = arith.constant 0 : i32
    return %c0_i32, %c0_i32_0 : i32, i32
  }
  func.func @transform_2(%arg0: i32) -> (i32, i32) {
    %c0_i32 = arith.constant 0 : i32
    %c0_i32_0 = arith.constant 0 : i32
    return %arg0, %c0_i32 : i32, i32
  }
  func.func @transform_3(%arg0: i32) -> (i32, i32, i32) {
    %c0_i32 = arith.constant 0 : i32
    %c0_i32_0 = arith.constant 0 : i32
    %c0_i32_1 = arith.constant 0 : i32
    return %arg0, %c0_i32, %c0_i32_0 : i32, i32, i32
  }
}

module attributes {stable_mosaic.version = 11 : i64} {
  func.func @bn_lrelu_drop_kernel(%arg0: i32, %arg1: memref<1xi32, #tpu.memory_space<smem>>, %arg2: memref<1x32xf32, #tpu.memory_space<vmem>>, %arg3: memref<1x32xf32, #tpu.memory_space<vmem>>, %arg4: memref<104x32xf32, #tpu.memory_space<vmem>>, %arg5: memref<104x32xbf16, #tpu.memory_space<vmem>>) attributes {dimension_semantics = [#tpu.dimension_semantics<parallel>], iteration_bounds = array<i64: 1>, scalar_prefetch = 0 : i64, scratch_operands = 0 : i64, tpu.core_type = #tpu.core_type<tc>, window_params = [{transform_indices = @transform_0, window_bounds = array<i64: 1>}, {pipeline_mode = #tpu.pipeline_mode<synchronous>, transform_indices = @transform_1, window_bounds = array<i64: 1, 32>}, {pipeline_mode = #tpu.pipeline_mode<synchronous>, transform_indices = @transform_2, window_bounds = array<i64: 1, 32>}, {transform_indices = @transform_3, window_bounds = array<i64: 104, 32>}, {transform_indices = @transform_4, window_bounds = array<i64: 104, 32>}]} {
    %c0 = arith.constant 0 : index
    %c0_0 = arith.constant 0 : index
    %0 = vector.load %arg4[%c0, %c0_0] : memref<104x32xf32, #tpu.memory_space<vmem>>, vector<104x32xf32>
    %c0_1 = arith.constant 0 : index
    %c0_2 = arith.constant 0 : index
    %1 = vector.load %arg2[%c0_1, %c0_2] : memref<1x32xf32, #tpu.memory_space<vmem>>, vector<1x32xf32>
    %2 = vector.broadcast %1 : vector<1x32xf32> to vector<104x32xf32>
    %3 = arith.mulf %0, %2 : vector<104x32xf32>
    %c0_3 = arith.constant 0 : index
    %c0_4 = arith.constant 0 : index
    %4 = vector.load %arg3[%c0_3, %c0_4] : memref<1x32xf32, #tpu.memory_space<vmem>>, vector<1x32xf32>
    %5 = vector.broadcast %4 : vector<1x32xf32> to vector<104x32xf32>
    %6 = arith.addf %3, %5 : vector<104x32xf32>
    %cst = arith.constant 0.000000e+00 : f32
    %7 = vector.broadcast %cst : f32 to vector<104x32xf32>
    %8 = arith.cmpf oge, %6, %7 : vector<104x32xf32>
    %cst_5 = arith.constant 2.000000e-01 : f32
    %9 = vector.broadcast %cst_5 : f32 to vector<104x32xf32>
    %10 = arith.mulf %9, %6 : vector<104x32xf32>
    %11 = arith.select %8, %6, %10 : vector<104x32xi1>, vector<104x32xf32>
    %12 = tpu.iota {dimensions = array<i32: 0>} : vector<104x32xi32>
    %13 = tpu.iota {dimensions = array<i32: 1>} : vector<104x32xi32>
    %c104_i32 = arith.constant 104 : i32
    %14 = arith.muli %arg0, %c104_i32 : i32
    %15 = vector.broadcast %14 : i32 to vector<104x32xi32>
    %16 = arith.addi %15, %12 : vector<104x32xi32>
    %c32_i32 = arith.constant 32 : i32
    %17 = vector.broadcast %c32_i32 : i32 to vector<104x32xi32>
    %18 = arith.muli %16, %17 : vector<104x32xi32>
    %19 = arith.addi %18, %13 : vector<104x32xi32>
    %c0_6 = arith.constant 0 : index
    %20 = memref.load %arg1[%c0_6] : memref<1xi32, #tpu.memory_space<smem>>
    %c-1640531535_i32 = arith.constant -1640531535 : i32
    %21 = vector.broadcast %c-1640531535_i32 : i32 to vector<104x32xi32>
    %22 = arith.muli %19, %21 : vector<104x32xi32>
    %c-2048144777_i32 = arith.constant -2048144777 : i32
    %23 = arith.muli %20, %c-2048144777_i32 : i32
    %24 = vector.broadcast %23 : i32 to vector<104x32xi32>
    %25 = arith.addi %22, %24 : vector<104x32xi32>
    %c16_i32 = arith.constant 16 : i32
    %26 = vector.broadcast %c16_i32 : i32 to vector<104x32xi32>
    %27 = arith.shrui %25, %26 : vector<104x32xi32>
    %28 = arith.xori %25, %27 : vector<104x32xi32>
    %c2146121005_i32 = arith.constant 2146121005 : i32
    %29 = vector.broadcast %c2146121005_i32 : i32 to vector<104x32xi32>
    %30 = arith.muli %28, %29 : vector<104x32xi32>
    %c15_i32 = arith.constant 15 : i32
    %31 = vector.broadcast %c15_i32 : i32 to vector<104x32xi32>
    %32 = arith.shrui %30, %31 : vector<104x32xi32>
    %33 = arith.xori %30, %32 : vector<104x32xi32>
    %c-2073254261_i32 = arith.constant -2073254261 : i32
    %34 = vector.broadcast %c-2073254261_i32 : i32 to vector<104x32xi32>
    %35 = arith.muli %33, %34 : vector<104x32xi32>
    %c16_i32_7 = arith.constant 16 : i32
    %36 = vector.broadcast %c16_i32_7 : i32 to vector<104x32xi32>
    %37 = arith.shrui %35, %36 : vector<104x32xi32>
    %38 = arith.xori %35, %37 : vector<104x32xi32>
    %c1_i32 = arith.constant 1 : i32
    %39 = vector.broadcast %c1_i32 : i32 to vector<104x32xi32>
    %40 = arith.andi %38, %39 : vector<104x32xi32>
    %c0_i32 = arith.constant 0 : i32
    %41 = vector.broadcast %c0_i32 : i32 to vector<104x32xi32>
    %42 = arith.cmpi eq, %40, %41 : vector<104x32xi32>
    %43 = arith.addf %11, %11 : vector<104x32xf32>
    %cst_8 = arith.constant 0.000000e+00 : f32
    %44 = vector.broadcast %cst_8 : f32 to vector<104x32xf32>
    %45 = arith.select %42, %43, %44 : vector<104x32xi1>, vector<104x32xf32>
    %46 = arith.truncf %45 : vector<104x32xf32> to vector<104x32xbf16>
    %c0_9 = arith.constant 0 : index
    %c0_10 = arith.constant 0 : index
    %47 = vector.load %arg5[%c0_9, %c0_10] : memref<104x32xbf16, #tpu.memory_space<vmem>>, vector<104x32xbf16>
    tpu.vector_store %arg5[%c0_9, %c0_10], %46 {strides = array<i32>} : memref<104x32xbf16, #tpu.memory_space<vmem>>, vector<104x32xbf16>,
    return
  }
  func.func @transform_0(%arg0: i32) -> i32 {
    %c0_i32 = arith.constant 0 : i32
    %c0_i32_0 = arith.constant 0 : i32
    return %c0_i32 : i32
  }
  func.func @transform_1(%arg0: i32) -> (i32, i32) {
    %c0_i32 = arith.constant 0 : i32
    %c0_i32_0 = arith.constant 0 : i32
    %c0_i32_1 = arith.constant 0 : i32
    return %c0_i32, %c0_i32_0 : i32, i32
  }
  func.func @transform_2(%arg0: i32) -> (i32, i32) {
    %c0_i32 = arith.constant 0 : i32
    %c0_i32_0 = arith.constant 0 : i32
    %c0_i32_1 = arith.constant 0 : i32
    return %c0_i32, %c0_i32_0 : i32, i32
  }
  func.func @transform_3(%arg0: i32) -> (i32, i32) {
    %c0_i32 = arith.constant 0 : i32
    %c0_i32_0 = arith.constant 0 : i32
    return %arg0, %c0_i32 : i32, i32
  }
  func.func @transform_4(%arg0: i32) -> (i32, i32) {
    %c0_i32 = arith.constant 0 : i32
    %c0_i32_0 = arith.constant 0 : i32
    return %arg0, %c0_i32 : i32, i32
  }
}

module attributes {stable_mosaic.version = 11 : i64} {
  func.func @matmul_stats_kernel(%arg0: i32, %arg1: memref<24x288xbf16, #tpu.memory_space<vmem>>, %arg2: memref<288x64xbf16, #tpu.memory_space<vmem>>, %arg3: memref<24x64xf32, #tpu.memory_space<vmem>>, %arg4: memref<1x8x64xf32, #tpu.memory_space<vmem>>) attributes {dimension_semantics = [#tpu.dimension_semantics<parallel>], iteration_bounds = array<i64: 1>, scalar_prefetch = 0 : i64, scratch_operands = 0 : i64, tpu.core_type = #tpu.core_type<tc>, window_params = [{transform_indices = @transform_0, window_bounds = array<i64: 24, 288>}, {pipeline_mode = #tpu.pipeline_mode<synchronous>, transform_indices = @transform_1, window_bounds = array<i64: 288, 64>}, {transform_indices = @transform_2, window_bounds = array<i64: 24, 64>}, {transform_indices = @transform_3, window_bounds = array<i64: 1, 8, 64>}]} {
    %c0 = arith.constant 0 : index
    %c0_0 = arith.constant 0 : index
    %0 = vector.load %arg1[%c0, %c0_0] : memref<24x288xbf16, #tpu.memory_space<vmem>>, vector<24x288xbf16>
    %c0_1 = arith.constant 0 : index
    %c0_2 = arith.constant 0 : index
    %1 = vector.load %arg2[%c0_1, %c0_2] : memref<288x64xbf16, #tpu.memory_space<vmem>>, vector<288x64xbf16>
    %cst = arith.constant dense<0.000000e+00> : vector<24x64xf32>
    %2 = tpu.matmul %0, %1, %cst {dimension_numbers = #tpu.dot_dimension_numbers<[1], [0], [0], [1], [0, 0, 1, 1], [], []>} : vector<24x288xbf16>, vector<288x64xbf16>, vector<24x64xf32> -> vector<24x64xf32>
    %c0_3 = arith.constant 0 : index
    %c0_4 = arith.constant 0 : index
    %3 = vector.load %arg3[%c0_3, %c0_4] : memref<24x64xf32, #tpu.memory_space<vmem>>, vector<24x64xf32>
    tpu.vector_store %arg3[%c0_3, %c0_4], %2 {strides = array<i32>} : memref<24x64xf32, #tpu.memory_space<vmem>>, vector<24x64xf32>,
    %cst_5 = arith.constant dense<0.000000e+00> : vector<64xf32>
    %4 = vector.multi_reduction <add>, %2, %cst_5 [0] : vector<24x64xf32> to vector<64xf32>
    %5 = vector.shape_cast %4 : vector<64xf32> to vector<1x64xf32>
    %6 = arith.mulf %2, %2 : vector<24x64xf32>
    %cst_6 = arith.constant dense<0.000000e+00> : vector<64xf32>
    %7 = vector.multi_reduction <add>, %6, %cst_6 [0] : vector<24x64xf32> to vector<64xf32>
    %8 = vector.shape_cast %7 : vector<64xf32> to vector<1x64xf32>
    %9 = tpu.iota {dimensions = array<i32: 0>} : vector<8x64xi32>
    %c0_i32 = arith.constant 0 : i32
    %10 = vector.broadcast %c0_i32 : i32 to vector<8x64xi32>
    %11 = arith.cmpi eq, %9, %10 : vector<8x64xi32>
    %c1_i32 = arith.constant 1 : i32
    %12 = vector.broadcast %c1_i32 : i32 to vector<8x64xi32>
    %13 = arith.cmpi eq, %9, %12 : vector<8x64xi32>
    %cst_7 = arith.constant 0.000000e+00 : f32
    %14 = vector.shape_cast %8 : vector<1x64xf32> to vector<1x64xf32>
    %15 = vector.broadcast %14 : vector<1x64xf32> to vector<8x64xf32>
    %16 = vector.broadcast %cst_7 : f32 to vector<8x64xf32>
    %17 = arith.select %13, %15, %16 : vector<8x64xi1>, vector<8x64xf32>
    %18 = vector.shape_cast %5 : vector<1x64xf32> to vector<1x64xf32>
    %19 = vector.broadcast %18 : vector<1x64xf32> to vector<8x64xf32>
    %20 = arith.select %11, %19, %17 : vector<8x64xi1>, vector<8x64xf32>
    %21 = vector.shape_cast %20 : vector<8x64xf32> to vector<1x8x64xf32>
    %c0_8 = arith.constant 0 : index
    %c0_9 = arith.constant 0 : index
    %c0_10 = arith.constant 0 : index
    %22 = vector.load %arg4[%c0_8, %c0_9, %c0_10] : memref<1x8x64xf32, #tpu.memory_space<vmem>>, vector<1x8x64xf32>
    tpu.vector_store %arg4[%c0_8, %c0_9, %c0_10], %21 {strides = array<i32>} : memref<1x8x64xf32, #tpu.memory_space<vmem>>, vector<1x8x64xf32>,
    return
  }
  func.func @transform_0(%arg0: i32) -> (i32, i32) {
    %c0_i32 = arith.constant 0 : i32
    %c0_i32_0 = arith.constant 0 : i32
    return %arg0, %c0_i32 : i32, i32
  }
  func.func @transform_1(%arg0: i32) -> (i32, i32) {
    %c0_i32 = arith.constant 0 : i32
    %c0_i32_0 = arith.constant 0 : i32
    %c0_i32_1 = arith.constant 0 : i32
    return %c0_i32, %c0_i32_0 : i32, i32
  }
  func.func @transform_2(%arg0: i32) -> (i32, i32) {
    %c0_i32 = arith.constant 0 : i32
    %c0_i32_0 = arith.constant 0 : i32
    return %arg0, %c0_i32 : i32, i32
  }
  func.func @transform_3(%arg0: i32) -> (i32, i32, i32) {
    %c0_i32 = arith.constant 0 : i32
    %c0_i32_0 = arith.constant 0 : i32
    %c0_i32_1 = arith.constant 0 : i32
    return %arg0, %c0_i32, %c0_i32_0 : i32, i32, i32
  }
}

module attributes {stable_mosaic.version = 11 : i64} {
  func.func @bn_lrelu_drop_kernel(%arg0: i32, %arg1: memref<1xi32, #tpu.memory_space<smem>>, %arg2: memref<1x64xf32, #tpu.memory_space<vmem>>, %arg3: memref<1x64xf32, #tpu.memory_space<vmem>>, %arg4: memref<24x64xf32, #tpu.memory_space<vmem>>, %arg5: memref<24x64xbf16, #tpu.memory_space<vmem>>) attributes {dimension_semantics = [#tpu.dimension_semantics<parallel>], iteration_bounds = array<i64: 1>, scalar_prefetch = 0 : i64, scratch_operands = 0 : i64, tpu.core_type = #tpu.core_type<tc>, window_params = [{transform_indices = @transform_0, window_bounds = array<i64: 1>}, {pipeline_mode = #tpu.pipeline_mode<synchronous>, transform_indices = @transform_1, window_bounds = array<i64: 1, 64>}, {pipeline_mode = #tpu.pipeline_mode<synchronous>, transform_indices = @transform_2, window_bounds = array<i64: 1, 64>}, {transform_indices = @transform_3, window_bounds = array<i64: 24, 64>}, {transform_indices = @transform_4, window_bounds = array<i64: 24, 64>}]} {
    %c0 = arith.constant 0 : index
    %c0_0 = arith.constant 0 : index
    %0 = vector.load %arg4[%c0, %c0_0] : memref<24x64xf32, #tpu.memory_space<vmem>>, vector<24x64xf32>
    %c0_1 = arith.constant 0 : index
    %c0_2 = arith.constant 0 : index
    %1 = vector.load %arg2[%c0_1, %c0_2] : memref<1x64xf32, #tpu.memory_space<vmem>>, vector<1x64xf32>
    %2 = vector.broadcast %1 : vector<1x64xf32> to vector<24x64xf32>
    %3 = arith.mulf %0, %2 : vector<24x64xf32>
    %c0_3 = arith.constant 0 : index
    %c0_4 = arith.constant 0 : index
    %4 = vector.load %arg3[%c0_3, %c0_4] : memref<1x64xf32, #tpu.memory_space<vmem>>, vector<1x64xf32>
    %5 = vector.broadcast %4 : vector<1x64xf32> to vector<24x64xf32>
    %6 = arith.addf %3, %5 : vector<24x64xf32>
    %cst = arith.constant 0.000000e+00 : f32
    %7 = vector.broadcast %cst : f32 to vector<24x64xf32>
    %8 = arith.cmpf oge, %6, %7 : vector<24x64xf32>
    %cst_5 = arith.constant 2.000000e-01 : f32
    %9 = vector.broadcast %cst_5 : f32 to vector<24x64xf32>
    %10 = arith.mulf %9, %6 : vector<24x64xf32>
    %11 = arith.select %8, %6, %10 : vector<24x64xi1>, vector<24x64xf32>
    %12 = tpu.iota {dimensions = array<i32: 0>} : vector<24x64xi32>
    %13 = tpu.iota {dimensions = array<i32: 1>} : vector<24x64xi32>
    %c24_i32 = arith.constant 24 : i32
    %14 = arith.muli %arg0, %c24_i32 : i32
    %15 = vector.broadcast %14 : i32 to vector<24x64xi32>
    %16 = arith.addi %15, %12 : vector<24x64xi32>
    %c64_i32 = arith.constant 64 : i32
    %17 = vector.broadcast %c64_i32 : i32 to vector<24x64xi32>
    %18 = arith.muli %16, %17 : vector<24x64xi32>
    %19 = arith.addi %18, %13 : vector<24x64xi32>
    %c0_6 = arith.constant 0 : index
    %20 = memref.load %arg1[%c0_6] : memref<1xi32, #tpu.memory_space<smem>>
    %c-1640531535_i32 = arith.constant -1640531535 : i32
    %21 = vector.broadcast %c-1640531535_i32 : i32 to vector<24x64xi32>
    %22 = arith.muli %19, %21 : vector<24x64xi32>
    %c-2048144777_i32 = arith.constant -2048144777 : i32
    %23 = arith.muli %20, %c-2048144777_i32 : i32
    %24 = vector.broadcast %23 : i32 to vector<24x64xi32>
    %25 = arith.addi %22, %24 : vector<24x64xi32>
    %c16_i32 = arith.constant 16 : i32
    %26 = vector.broadcast %c16_i32 : i32 to vector<24x64xi32>
    %27 = arith.shrui %25, %26 : vector<24x64xi32>
    %28 = arith.xori %25, %27 : vector<24x64xi32>
    %c2146121005_i32 = arith.constant 2146121005 : i32
    %29 = vector.broadcast %c2146121005_i32 : i32 to vector<24x64xi32>
    %30 = arith.muli %28, %29 : vector<24x64xi32>
    %c15_i32 = arith.constant 15 : i32
    %31 = vector.broadcast %c15_i32 : i32 to vector<24x64xi32>
    %32 = arith.shrui %30, %31 : vector<24x64xi32>
    %33 = arith.xori %30, %32 : vector<24x64xi32>
    %c-2073254261_i32 = arith.constant -2073254261 : i32
    %34 = vector.broadcast %c-2073254261_i32 : i32 to vector<24x64xi32>
    %35 = arith.muli %33, %34 : vector<24x64xi32>
    %c16_i32_7 = arith.constant 16 : i32
    %36 = vector.broadcast %c16_i32_7 : i32 to vector<24x64xi32>
    %37 = arith.shrui %35, %36 : vector<24x64xi32>
    %38 = arith.xori %35, %37 : vector<24x64xi32>
    %c1_i32 = arith.constant 1 : i32
    %39 = vector.broadcast %c1_i32 : i32 to vector<24x64xi32>
    %40 = arith.andi %38, %39 : vector<24x64xi32>
    %c0_i32 = arith.constant 0 : i32
    %41 = vector.broadcast %c0_i32 : i32 to vector<24x64xi32>
    %42 = arith.cmpi eq, %40, %41 : vector<24x64xi32>
    %43 = arith.addf %11, %11 : vector<24x64xf32>
    %cst_8 = arith.constant 0.000000e+00 : f32
    %44 = vector.broadcast %cst_8 : f32 to vector<24x64xf32>
    %45 = arith.select %42, %43, %44 : vector<24x64xi1>, vector<24x64xf32>
    %46 = arith.truncf %45 : vector<24x64xf32> to vector<24x64xbf16>
    %c0_9 = arith.constant 0 : index
    %c0_10 = arith.constant 0 : index
    %47 = vector.load %arg5[%c0_9, %c0_10] : memref<24x64xbf16, #tpu.memory_space<vmem>>, vector<24x64xbf16>
    tpu.vector_store %arg5[%c0_9, %c0_10], %46 {strides = array<i32>} : memref<24x64xbf16, #tpu.memory_space<vmem>>, vector<24x64xbf16>,
    return
  }
  func.func @transform_0(%arg0: i32) -> i32 {
    %c0_i32 = arith.constant 0 : i32
    %c0_i32_0 = arith.constant 0 : i32
    return %c0_i32 : i32
  }
  func.func @transform_1(%arg0: i32) -> (i32, i32) {
    %c0_i32 = arith.constant 0 : i32
    %c0_i32_0 = arith.constant 0 : i32
    %c0_i32_1 = arith.constant 0 : i32
    return %c0_i32, %c0_i32_0 : i32, i32
  }
  func.func @transform_2(%arg0: i32) -> (i32, i32) {
    %c0_i32 = arith.constant 0 : i32
    %c0_i32_0 = arith.constant 0 : i32
    %c0_i32_1 = arith.constant 0 : i32
    return %c0_i32, %c0_i32_0 : i32, i32
  }
  func.func @transform_3(%arg0: i32) -> (i32, i32) {
    %c0_i32 = arith.constant 0 : i32
    %c0_i32_0 = arith.constant 0 : i32
    return %arg0, %c0_i32 : i32, i32
  }
  func.func @transform_4(%arg0: i32) -> (i32, i32) {
    %c0_i32 = arith.constant 0 : i32
    %c0_i32_0 = arith.constant 0 : i32
    return %arg0, %c0_i32 : i32, i32
  }
}

module attributes {stable_mosaic.version = 11 : i64} {
  func.func @conv4_fc_kernel(%arg0: memref<2x576xbf16, #tpu.memory_space<vmem>>, %arg1: memref<576x64xbf16, #tpu.memory_space<vmem>>, %arg2: memref<1x64xf32, #tpu.memory_space<vmem>>, %arg3: memref<64x100xbf16, #tpu.memory_space<vmem>>, %arg4: memref<1x100xf32, #tpu.memory_space<vmem>>, %arg5: memref<2x100xf32, #tpu.memory_space<vmem>>) attributes {dimension_semantics = [], scalar_prefetch = 0 : i64, scratch_operands = 0 : i64, tpu.core_type = #tpu.core_type<tc>} {
    %c0 = arith.constant 0 : index
    %c0_0 = arith.constant 0 : index
    %0 = vector.load %arg0[%c0, %c0_0] : memref<2x576xbf16, #tpu.memory_space<vmem>>, vector<2x576xbf16>
    %c0_1 = arith.constant 0 : index
    %c0_2 = arith.constant 0 : index
    %1 = vector.load %arg1[%c0_1, %c0_2] : memref<576x64xbf16, #tpu.memory_space<vmem>>, vector<576x64xbf16>
    %cst = arith.constant dense<0.000000e+00> : vector<2x64xf32>
    %2 = tpu.matmul %0, %1, %cst {dimension_numbers = #tpu.dot_dimension_numbers<[1], [0], [0], [1], [0, 0, 1, 1], [], []>} : vector<2x576xbf16>, vector<576x64xbf16>, vector<2x64xf32> -> vector<2x64xf32>
    %c0_3 = arith.constant 0 : index
    %c0_4 = arith.constant 0 : index
    %3 = vector.load %arg2[%c0_3, %c0_4] : memref<1x64xf32, #tpu.memory_space<vmem>>, vector<1x64xf32>
    %4 = vector.broadcast %3 : vector<1x64xf32> to vector<2x64xf32>
    %5 = arith.addf %2, %4 : vector<2x64xf32>
    %6 = arith.truncf %5 : vector<2x64xf32> to vector<2x64xbf16>
    %c0_5 = arith.constant 0 : index
    %c0_6 = arith.constant 0 : index
    %7 = vector.load %arg3[%c0_5, %c0_6] : memref<64x100xbf16, #tpu.memory_space<vmem>>, vector<64x100xbf16>
    %cst_7 = arith.constant dense<0.000000e+00> : vector<2x100xf32>
    %8 = tpu.matmul %6, %7, %cst_7 {dimension_numbers = #tpu.dot_dimension_numbers<[1], [0], [0], [1], [0, 0, 1, 1], [], []>} : vector<2x64xbf16>, vector<64x100xbf16>, vector<2x100xf32> -> vector<2x100xf32>
    %c0_8 = arith.constant 0 : index
    %c0_9 = arith.constant 0 : index
    %9 = vector.load %arg4[%c0_8, %c0_9] : memref<1x100xf32, #tpu.memory_space<vmem>>, vector<1x100xf32>
    %10 = vector.broadcast %9 : vector<1x100xf32> to vector<2x100xf32>
    %11 = arith.addf %8, %10 : vector<2x100xf32>
    %c0_10 = arith.constant 0 : index
    %c0_11 = arith.constant 0 : index
    %12 = vector.load %arg5[%c0_10, %c0_11] : memref<2x100xf32, #tpu.memory_space<vmem>>, vector<2x100xf32>
    tpu.vector_store %arg5[%c0_10, %c0_11], %11 {strides = array<i32>} : memref<2x100xf32, #tpu.memory_space<vmem>>, vector<2x100xf32>,
    return
  }
}

</mosaic_0001>

<llo_original>
// kernel: inverse_dcgan_forward.7
$region0: #{inverse_dcgan_forward.7}
  #allocation0 [shape = 'u32[]', space=smem, size = 0x4, offset = 0x4, fixed_abs, tag = 'smem constant byte address 0x4 - core index']
  #allocation1 [shape = 'u32[72,128]{1,0:T(1,128)}', space=vmem, size = 0x9000, scoped, tag = 'internal scratch']
  %s0 = inlined_call_operand.vmem [shape: bf16[512,16], index: 0, kind: input, shape index: {}]
  %s1 = inlined_call_operand.vmem [shape: bf16[16,16], index: 1, kind: input, shape index: {}]
  %s2 = inlined_call_operand.vmem [shape: f32[512,16], index: 2, kind: output, shape index: {0}]
  %s3 = inlined_call_operand.vmem [shape: f32[2,8,16], index: 3, kind: output, shape index: {1}]
  %4 = xla_tuple %s2, %s3
  %s5 = sld [smem:[#allocation0]]
  $region49: #{inverse_dcgan_forward.7} parent=0
    _
  %s7 = ssub.s32 1, %s5
  %s8 = scalar_select 0, %s7, %s5
  loop: start=0, step=1, limit=4
  $region2: #{inverse_dcgan_forward.7} parent=0 // loop_pre_header
    _
  $region3: #{inverse_dcgan_forward.7} parent=0 // loop_header
    %s10 = sphi 0, %s14
    %p11 = scmp.ge.s32.totalorder %s10, 4
    %s20 = sphi 0, %s22
    %s23 = sphi 0, %s20
    %s24 = sphi 0, %s23
    %s40 = sphi 0, %s24
    %s44 = sphi 0, %s44
    %s46 = sphi 0, %s44
    %s47 = sphi 0, %s46
    %s61 = sphi 0, %s47
    %s67 = sphi 0, %s69
    %s70 = sphi 0, %s67
    %s71 = sphi 0, %s70
    %s87 = sphi 0, %s71
    %s93 = sphi 0, %s95
    %s96 = sphi 0, %s93
    %s97 = sphi 0, %s96
    %s113 = sphi 0, %s97
  $region4: #{inverse_dcgan_forward.7} parent=0 // loop_header_branch
    %13 = sbr.rel (%p11) target = $region8
  $region5: #{inverse_dcgan_forward.7} parent=0 // loop_body
    %s15 = ssub.s32 %s10, 1
    %s16 = ssub.s32 %s10, 2
    %s17 = sadd.s32 %s10, 1
    %s18 = ssub.s32 %s10, %s17
    %p19 = scmp.eq.s32.totalorder %s18, 0
    %s21 = sadd.s32 %s20, 1
    %s22 = scalar_select %p19, %s20, %s21
    %p25 = pneg %p19
    %p26 = scmp.eq.s32.totalorder %s10, 1
    %p27 = por %p25, %p26
    %p28 = scmp.ne.s32.totalorder %s20, %s23
    %p29 = scmp.eq.s32.totalorder %s10, 0
    %p30 = por %p28, %p29
    %p31 = scmp.ne.s32.totalorder %s20, %s23
    %p32 = scmp.eq.s32.totalorder %s15, 1
    %p33 = por %p31, %p32
    %p34 = scmp.ne.s32.totalorder %s23, %s24
    %p35 = scmp.eq.s32.totalorder %s15, 0
    %p36 = por %p34, %p35
    %p37 = scmp.ne.s32.totalorder %s23, %s24
    %p38 = scmp.eq.s32.totalorder %s16, 1
    %p39 = por %p37, %p38
    %p41 = scmp.ne.s32.totalorder %s24, %s40
    %p42 = scmp.eq.s32.totalorder %s16, 0
    %p43 = por %p41, %p42
    %s45 = sadd.s32 %s44, 1
    %p48 = scmp.eq.s32.totalorder %s10, 1
    %p49 = scmp.ne.s32.totalorder %s44, %s46
    %p50 = scmp.eq.s32.totalorder %s10, 0
    %p51 = por %p49, %p50
    %p52 = scmp.ne.s32.totalorder %s44, %s46
    %p53 = scmp.eq.s32.totalorder %s15, 1
    %p54 = por %p52, %p53
    %p55 = scmp.ne.s32.totalorder %s46, %s47
    %p56 = scmp.eq.s32.totalorder %s15, 0
    %p57 = por %p55, %p56
    %p58 = scmp.ne.s32.totalorder %s46, %s47
    %p59 = scmp.eq.s32.totalorder %s16, 1
    %p60 = por %p58, %p59
    %p62 = scmp.ne.s32.totalorder %s47, %s61
    %p63 = scmp.eq.s32.totalorder %s16, 0
    %p64 = por %p62, %p63
    %s65 = ssub.s32 %s10, %s17
    %p66 = scmp.eq.s32.totalorder %s65, 0
    %s68 = sadd.s32 %s67, 1
    %s69 = scalar_select %p66, %s67, %s68
    %p72 = pneg %p66
    %p73 = scmp.eq.s32.totalorder %s10, 1
    %p74 = por %p72, %p73
    %p75 = scmp.ne.s32.totalorder %s67, %s70
    %p76 = scmp.eq.s32.totalorder %s10, 0
    %p77 = por %p75, %p76
    %p78 = scmp.ne.s32.totalorder %s67, %s70
    %p79 = scmp.eq.s32.totalorder %s15, 1
    %p80 = por %p78, %p79
    %p81 = scmp.ne.s32.totalorder %s70, %s71
    %p82 = scmp.eq.s32.totalorder %s15, 0
    %p83 = por %p81, %p82
    %p84 = scmp.ne.s32.totalorder %s70, %s71
    %p85 = scmp.eq.s32.totalorder %s16, 1
    %p86 = por %p84, %p85
    %p88 = scmp.ne.s32.totalorder %s71, %s87
    %p89 = scmp.eq.s32.totalorder %s16, 0
    %p90 = por %p88, %p89
    %s91 = ssub.s32 %s10, %s17
    %p92 = scmp.eq.s32.totalorder %s91, 0
    %s94 = sadd.s32 %s93, 1
    %s95 = scalar_select %p92, %s93, %s94
    %p98 = pneg %p92
    %p99 = scmp.eq.s32.totalorder %s10, 1
    %p100 = por %p98, %p99
    %p101 = scmp.ne.s32.totalorder %s93, %s96
    %p102 = scmp.eq.s32.totalorder %s10, 0
    %p103 = por %p101, %p102
    %p104 = scmp.ne.s32.totalorder %s93, %s96
    %p105 = scmp.eq.s32.totalorder %s15, 1
    %p106 = por %p104, %p105
    %p107 = scmp.ne.s32.totalorder %s96, %s97
    %p108 = scmp.eq.s32.totalorder %s15, 0
    %p109 = por %p107, %p108
    %p110 = scmp.ne.s32.totalorder %s96, %s97
    %p111 = scmp.eq.s32.totalorder %s16, 1
    %p112 = por %p110, %p111
    %p114 = scmp.ne.s32.totalorder %s97, %s113
    %p115 = scmp.eq.s32.totalorder %s16, 0
    %p116 = por %p114, %p115
    %p117 = scmp.le.s32.totalorder 1, %s10
    %p118 = scmp.lt.s32.totalorder %s10, 3
    %p119 = pnand %p117, %p118
    %p120 = pneg %p119
    // Predicated region
    $region9: #{inverse_dcgan_forward.7} parent=5 // pred_check
      _
    $region10: #{inverse_dcgan_forward.7} parent=5 // pred_check_branch
      %122 = sbr.rel (%p119) target = $region12
    $region11: #{inverse_dcgan_forward.7} parent=5 // pred_region
      %s123 = ssub.s32 %s10, 1
      // Predicated region
      $region13: #{inverse_dcgan_forward.7} parent=11 // pred_check
        %p124 = pneg %p57
      $region14: #{inverse_dcgan_forward.7} parent=11 // pred_check_branch
        %126 = sbr.rel (%p124) target = $region16
      $region15: #{inverse_dcgan_forward.7} parent=11 // pred_region
        _
      $region16: #{inverse_dcgan_forward.7} parent=11 // pred_fallthru
        _
    $region12: #{inverse_dcgan_forward.7} parent=5 // pred_fallthru
      _
    %p127 = scmp.lt.s32.totalorder %s10, 2
    // Predicated region
    $region17: #{inverse_dcgan_forward.7} parent=5 // pred_check
      %p128 = pneg %p127
    $region18: #{inverse_dcgan_forward.7} parent=5 // pred_check_branch
      %130 = sbr.rel (%p128) target = $region20
    $region19: #{inverse_dcgan_forward.7} parent=5 // pred_region
      // Predicated region
      $region21: #{inverse_dcgan_forward.7} parent=19 // pred_check
        %p131 = pneg %p30
      $region22: #{inverse_dcgan_forward.7} parent=19 // pred_check_branch
        %133 = sbr.rel (%p131) target = $region24
      $region23: #{inverse_dcgan_forward.7} parent=19 // pred_region
        %s134 = smul.u32 32, %s10
        %p135 = scmp.lt.s32.totalorder %s134, 63
        %s136 = scalar_select %p135, %s134, 63
        %s137 = smul.addr %s136, 4
        %s138 = scalar_lea.vmem %s0, %s137
        %s139 = smul.u32 32, %s10
      $region24: #{inverse_dcgan_forward.7} parent=19 // pred_fallthru
        _
    $region20: #{inverse_dcgan_forward.7} parent=5 // pred_fallthru
      _
    %p140 = scmp.le.s32.totalorder 1, %s10
    %p141 = scmp.lt.s32.totalorder %s10, 3
    %p142 = pnand %p140, %p141
    %p143 = pneg %p142
    // Predicated region
    $region25: #{inverse_dcgan_forward.7} parent=5 // pred_check
      _
    $region26: #{inverse_dcgan_forward.7} parent=5 // pred_check_branch
      %145 = sbr.rel (%p142) target = $region28
    $region27: #{inverse_dcgan_forward.7} parent=5 // pred_region
      %s146 = ssub.s32 %s10, 1
      %s147 = smul.u32 32, %s15
      %p148 = scmp.lt.s32.totalorder %s147, 63
      %s149 = scalar_select %p148, %s147, 63
      %s150 = smul.addr %s149, 4
      %s151 = scalar_lea.vmem %s0, %s150
      %p152 = pneg %p36
      %p153 = pneg %p33
      %p154 = pneg %p57
      %p155 = pneg %p54
      %p156 = pneg %p83
      %p157 = pneg %p80
      %s158 = smul.u32 32, %s15
      %p159 = scmp.lt.s32.totalorder %s158, 63
      %s160 = scalar_select %p159, %s158, 63
      %s161 = smul.addr %s160, 8
      %s162 = scalar_lea.vmem %s2, %s161
      %p163 = pneg %p109
      %p164 = pneg %p106
      %p165 = scmp.lt.s32.totalorder %s15, 1
      %s166 = scalar_select %p165, %s15, 1
      %s167 = smul.addr %s166, 8
      %s168 = scalar_lea.vmem %s3, %s167
      %s169 = smul.u32 32, %s15
      %p170 = scmp.lt.s32.totalorder %s169, 63
      %s171 = scalar_select %p170, %s169, 63
      %s172 = smul.addr %s171, 4
      %s173 = scalar_lea.vmem %s0, %s172
      %s174 = smul.u32 32, %s15
      %s175 = smul.u32 32, %s15
      %p176 = scmp.lt.s32.totalorder %s175, 63
      %s177 = scalar_select %p176, %s175, 63
      %s178 = smul.addr %s177, 8
      %s179 = scalar_lea.vmem %s2, %s178
      %s180 = smul.u32 32, %s15
      %p181 = scmp.lt.s32.totalorder %s15, 1
      %s182 = scalar_select %p181, %s15, 1
      %s183 = smul.addr %s182, 8
      %s184 = scalar_lea.vmem %s3, %s183
      %v186 = vld [vmem:[%s173] sm:$0xf]
      %v187 = vld [vmem:[%s173 + $0x4] sm:$0xf]
      %v188 = vld [vmem:[%s173 + $0x8] sm:$0xf]
      %v189 = vld [vmem:[%s173 + $0xc] sm:$0xf]
      %v190 = vld [vmem:[%s173 + $0x10] sm:$0xf]
      %v191 = vld [vmem:[%s173 + $0x14] sm:$0xf]
      %v192 = vld [vmem:[%s173 + $0x18] sm:$0xf]
      %v193 = vld [vmem:[%s173 + $0x1c] sm:$0xf]
      %v194 = vld [vmem:[%s173 + $0x20] sm:$0xf]
      %v195 = vld [vmem:[%s173 + $0x24] sm:$0xf]
      %v196 = vld [vmem:[%s173 + $0x28] sm:$0xf]
      %v197 = vld [vmem:[%s173 + $0x2c] sm:$0xf]
      %v198 = vld [vmem:[%s173 + $0x30] sm:$0xf]
      %v199 = vld [vmem:[%s173 + $0x34] sm:$0xf]
      %v200 = vld [vmem:[%s173 + $0x38] sm:$0xf]
      %v201 = vld [vmem:[%s173 + $0x3c] sm:$0xf]
      %v202 = vld [vmem:[%s173 + $0x40] sm:$0xf]
      %v203 = vld [vmem:[%s173 + $0x44] sm:$0xf]
      %v204 = vld [vmem:[%s173 + $0x48] sm:$0xf]
      %v205 = vld [vmem:[%s173 + $0x4c] sm:$0xf]
      %v206 = vld [vmem:[%s173 + $0x50] sm:$0xf]
      %v207 = vld [vmem:[%s173 + $0x54] sm:$0xf]
      %v208 = vld [vmem:[%s173 + $0x58] sm:$0xf]
      %v209 = vld [vmem:[%s173 + $0x5c] sm:$0xf]
      %v210 = vld [vmem:[%s173 + $0x60] sm:$0xf]
      %v211 = vld [vmem:[%s173 + $0x64] sm:$0xf]
      %v212 = vld [vmem:[%s173 + $0x68] sm:$0xf]
      %v213 = vld [vmem:[%s173 + $0x6c] sm:$0xf]
      %v214 = vld [vmem:[%s173 + $0x70] sm:$0xf]
      %v215 = vld [vmem:[%s173 + $0x74] sm:$0xf]
      %v216 = vld [vmem:[%s173 + $0x78] sm:$0xf]
      %v217 = vld [vmem:[%s173 + $0x7c] sm:$0xf]
      %v218 = vld [vmem:[%s1] sm:$0xf]
      %v219 = vld [vmem:[%s1 + $0x4] sm:$0xf]
      %v252 = vunpack.c.l.b16 %v186
      %v253 = vunpack.c.l.b16 %v187
      %v254 = vunpack.c.l.b16 %v188
      %v255 = vunpack.c.l.b16 %v189
      %v256 = vunpack.c.l.b16 %v190
      %v257 = vunpack.c.l.b16 %v191
      %v258 = vunpack.c.l.b16 %v192
      %v259 = vunpack.c.l.b16 %v193
      %v260 = vunpack.c.l.b16 %v194
      %v261 = vunpack.c.l.b16 %v195
      %v262 = vunpack.c.l.b16 %v196
      %v263 = vunpack.c.l.b16 %v197
      %v264 = vunpack.c.l.b16 %v198
      %v265 = vunpack.c.l.b16 %v199
      %v266 = vunpack.c.l.b16 %v200
      %v267 = vunpack.c.l.b16 %v201
      %v268 = vunpack.c.l.b16 %v202
      %v269 = vunpack.c.l.b16 %v203
      %v270 = vunpack.c.l.b16 %v204
      %v271 = vunpack.c.l.b16 %v205
      %v272 = vunpack.c.l.b16 %v206
      %v273 = vunpack.c.l.b16 %v207
      %v274 = vunpack.c.l.b16 %v208
      %v275 = vunpack.c.l.b16 %v209
      %v276 = vunpack.c.l.b16 %v210
      %v277 = vunpack.c.l.b16 %v211
      %v278 = vunpack.c.l.b16 %v212
      %v279 = vunpack.c.l.b16 %v213
      %v280 = vunpack.c.l.b16 %v214
      %v281 = vunpack.c.l.b16 %v215
      %v282 = vunpack.c.l.b16 %v216
      %v283 = vunpack.c.l.b16 %v217
      %v284 = vpack.c.b16 %v253, %v252
      %v285 = vpack.c.b16 %v255, %v254
      %v286 = vpack.c.b16 %v257, %v256
      %v287 = vpack.c.b16 %v259, %v258
      %v288 = vpack.c.b16 %v261, %v260
      %v289 = vpack.c.b16 %v263, %v262
      %v290 = vpack.c.b16 %v265, %v264
      %v291 = vpack.c.b16 %v267, %v266
      %v292 = vpack.c.b16 %v269, %v268
      %v293 = vpack.c.b16 %v271, %v270
      %v294 = vpack.c.b16 %v273, %v272
      %v295 = vpack.c.b16 %v275, %v274
      %v296 = vpack.c.b16 %v277, %v276
      %v297 = vpack.c.b16 %v279, %v278
      %v298 = vpack.c.b16 %v281, %v280
      %v299 = vpack.c.b16 %v283, %v282
      %v302 = vunpack.c.l.b16 %v218
      %v303 = vunpack.c.l.b16 %v219
      %v304 = vpack.c.b16 %v303, %v302
      %vm306 = vcmask 130048
      %v308 = vsel %vm306, %v284, 0
      %v311 = vsel %vm306, %v285, 0
      %v314 = vsel %vm306, %v286, 0
      %v317 = vsel %vm306, %v287, 0
      %v320 = vsel %vm306, %v288, 0
      %v323 = vsel %vm306, %v289, 0
      %v326 = vsel %vm306, %v290, 0
      %v329 = vsel %vm306, %v291, 0
      %v332 = vsel %vm306, %v292, 0
      %v335 = vsel %vm306, %v293, 0
      %v338 = vsel %vm306, %v294, 0
      %v341 = vsel %vm306, %v295, 0
      %v344 = vsel %vm306, %v296, 0
      %v347 = vsel %vm306, %v297, 0
      %v350 = vsel %vm306, %v298, 0
      %v353 = vsel %vm306, %v299, 0
      %355 = vmatpush.bf16.msra.mxu0 0
      %356 = vmatpush.bf16.msra.mxu0 0
      %357 = vmatpush.bf16.msra.mxu0 0
      %358 = vmatpush.bf16.msra.mxu0 0
      %359 = vmatpush.bf16.msra.mxu0 0
      %360 = vmatpush.bf16.msra.mxu0 0
      %361 = vmatpush.bf16.msra.mxu0 0
      %362 = vmatpush.bf16.msra.mxu0 %v304
      %363 = vmatmul.bf16.gmra.mxu0 %v308
      %v364 = vpop.f32.mrf.mxu0
      %v365 = vadd.f32 0.0, %v364
      %v366 = vpop.f32.mrf.mxu0
      %v367 = vadd.f32 0.0, %v366
      %368 = vmatmul.bf16.gmra.mxu0 %v311
      %v369 = vpop.f32.mrf.mxu0
      %v370 = vadd.f32 0.0, %v369
      %v371 = vpop.f32.mrf.mxu0
      %v372 = vadd.f32 0.0, %v371
      %373 = vmatmul.bf16.gmra.mxu0 %v314
      %v374 = vpop.f32.mrf.mxu0
      %v375 = vadd.f32 0.0, %v374
      %v376 = vpop.f32.mrf.mxu0
      %v377 = vadd.f32 0.0, %v376
      %378 = vmatmul.bf16.gmra.mxu0 %v317
      %v379 = vpop.f32.mrf.mxu0
      %v380 = vadd.f32 0.0, %v379
      %v381 = vpop.f32.mrf.mxu0
      %v382 = vadd.f32 0.0, %v381
      %383 = vmatmul.bf16.gmra.mxu0 %v320
      %v384 = vpop.f32.mrf.mxu0
      %v385 = vadd.f32 0.0, %v384
      %v386 = vpop.f32.mrf.mxu0
      %v387 = vadd.f32 0.0, %v386
      %388 = vmatmul.bf16.gmra.mxu0 %v323
      %v389 = vpop.f32.mrf.mxu0
      %v390 = vadd.f32 0.0, %v389
      %v391 = vpop.f32.mrf.mxu0
      %v392 = vadd.f32 0.0, %v391
      %393 = vmatmul.bf16.gmra.mxu0 %v326
      %v394 = vpop.f32.mrf.mxu0
      %v395 = vadd.f32 0.0, %v394
      %v396 = vpop.f32.mrf.mxu0
      %v397 = vadd.f32 0.0, %v396
      %398 = vmatmul.bf16.gmra.mxu0 %v329
      %v399 = vpop.f32.mrf.mxu0
      %v400 = vadd.f32 0.0, %v399
      %v401 = vpop.f32.mrf.mxu0
      %v402 = vadd.f32 0.0, %v401
      %403 = vmatmul.bf16.gmra.mxu0 %v332
      %v404 = vpop.f32.mrf.mxu0
      %v405 = vadd.f32 0.0, %v404
      %v406 = vpop.f32.mrf.mxu0
      %v407 = vadd.f32 0.0, %v406
      %408 = vmatmul.bf16.gmra.mxu0 %v335
      %v409 = vpop.f32.mrf.mxu0
      %v410 = vadd.f32 0.0, %v409
      %v411 = vpop.f32.mrf.mxu0
      %v412 = vadd.f32 0.0, %v411
      %413 = vmatmul.bf16.gmra.mxu0 %v338
      %v414 = vpop.f32.mrf.mxu0
      %v415 = vadd.f32 0.0, %v414
      %v416 = vpop.f32.mrf.mxu0
      %v417 = vadd.f32 0.0, %v416
      %418 = vmatmul.bf16.gmra.mxu0 %v341
      %v419 = vpop.f32.mrf.mxu0
      %v420 = vadd.f32 0.0, %v419
      %v421 = vpop.f32.mrf.mxu0
      %v422 = vadd.f32 0.0, %v421
      %423 = vmatmul.bf16.gmra.mxu0 %v344
      %v424 = vpop.f32.mrf.mxu0
      %v425 = vadd.f32 0.0, %v424
      %v426 = vpop.f32.mrf.mxu0
      %v427 = vadd.f32 0.0, %v426
      %428 = vmatmul.bf16.gmra.mxu0 %v347
      %v429 = vpop.f32.mrf.mxu0
      %v430 = vadd.f32 0.0, %v429
      %v431 = vpop.f32.mrf.mxu0
      %v432 = vadd.f32 0.0, %v431
      %433 = vmatmul.bf16.gmra.mxu0 %v350
      %v434 = vpop.f32.mrf.mxu0
      %v435 = vadd.f32 0.0, %v434
      %v436 = vpop.f32.mrf.mxu0
      %v437 = vadd.f32 0.0, %v436
      %438 = vmatmul.bf16.gmra.mxu0 %v353
      %v439 = vpop.f32.mrf.mxu0
      %v440 = vadd.f32 0.0, %v439
      %v441 = vpop.f32.mrf.mxu0
      %v442 = vadd.f32 0.0, %v441
      %443 = vdwg.mxu0
      %444 = vst.msk [vmem:[%s179] sm:$0xff] %vm306, %v365
      %445 = vst.msk [vmem:[%s179 + $0x8] sm:$0xff] %vm306, %v367
      %446 = vst.msk [vmem:[%s179 + $0x10] sm:$0xff] %vm306, %v370
      %447 = vst.msk [vmem:[%s179 + $0x18] sm:$0xff] %vm306, %v372
      %448 = vst.msk [vmem:[%s179 + $0x20] sm:$0xff] %vm306, %v375
      %449 = vst.msk [vmem:[%s179 + $0x28] sm:$0xff] %vm306, %v377
      %450 = vst.msk [vmem:[%s179 + $0x30] sm:$0xff] %vm306, %v380
      %451 = vst.msk [vmem:[%s179 + $0x38] sm:$0xff] %vm306, %v382
      %452 = vst.msk [vmem:[%s179 + $0x40] sm:$0xff] %vm306, %v385
      %453 = vst.msk [vmem:[%s179 + $0x48] sm:$0xff] %vm306, %v387
      %454 = vst.msk [vmem:[%s179 + $0x50] sm:$0xff] %vm306, %v390
      %455 = vst.msk [vmem:[%s179 + $0x58] sm:$0xff] %vm306, %v392
      %456 = vst.msk [vmem:[%s179 + $0x60] sm:$0xff] %vm306, %v395
      %457 = vst.msk [vmem:[%s179 + $0x68] sm:$0xff] %vm306, %v397
      %458 = vst.msk [vmem:[%s179 + $0x70] sm:$0xff] %vm306, %v400
      %459 = vst.msk [vmem:[%s179 + $0x78] sm:$0xff] %vm306, %v402
      %460 = vst.msk [vmem:[%s179 + $0x80] sm:$0xff] %vm306, %v405
      %461 = vst.msk [vmem:[%s179 + $0x88] sm:$0xff] %vm306, %v407
      %462 = vst.msk [vmem:[%s179 + $0x90] sm:$0xff] %vm306, %v410
      %463 = vst.msk [vmem:[%s179 + $0x98] sm:$0xff] %vm306, %v412
      %464 = vst.msk [vmem:[%s179 + $0xa0] sm:$0xff] %vm306, %v415
      %465 = vst.msk [vmem:[%s179 + $0xa8] sm:$0xff] %vm306, %v417
      %466 = vst.msk [vmem:[%s179 + $0xb0] sm:$0xff] %vm306, %v420
      %467 = vst.msk [vmem:[%s179 + $0xb8] sm:$0xff] %vm306, %v422
      %468 = vst.msk [vmem:[%s179 + $0xc0] sm:$0xff] %vm306, %v425
      %469 = vst.msk [vmem:[%s179 + $0xc8] sm:$0xff] %vm306, %v427
      %470 = vst.msk [vmem:[%s179 + $0xd0] sm:$0xff] %vm306, %v430
      %471 = vst.msk [vmem:[%s179 + $0xd8] sm:$0xff] %vm306, %v432
      %472 = vst.msk [vmem:[%s179 + $0xe0] sm:$0xff] %vm306, %v435
      %473 = vst.msk [vmem:[%s179 + $0xe8] sm:$0xff] %vm306, %v437
      %474 = vst.msk [vmem:[%s179 + $0xf0] sm:$0xff] %vm306, %v440
      %475 = vst.msk [vmem:[%s179 + $0xf8] sm:$0xff] %vm306, %v442
      %v476 = vsel %vm306, %v365, 0.0
      %v477 = vsel %vm306, %v367, 0.0
      %v478 = vadd.f32 %v476, %v477
      %v479 = vsel %vm306, %v370, 0.0
      %v480 = vadd.f32 %v478, %v479
      %v481 = vsel %vm306, %v372, 0.0
      %v482 = vadd.f32 %v480, %v481
      %v483 = vsel %vm306, %v375, 0.0
      %v484 = vadd.f32 %v482, %v483
      %v485 = vsel %vm306, %v377, 0.0
      %v486 = vadd.f32 %v484, %v485
      %v487 = vsel %vm306, %v380, 0.0
      %v488 = vadd.f32 %v486, %v487
      %v489 = vsel %vm306, %v382, 0.0
      %v490 = vadd.f32 %v488, %v489
      %v491 = vsel %vm306, %v385, 0.0
      %v492 = vadd.f32 %v490, %v491
      %v493 = vsel %vm306, %v387, 0.0
      %v494 = vadd.f32 %v492, %v493
      %v495 = vsel %vm306, %v390, 0.0
      %v496 = vadd.f32 %v494, %v495
      %v497 = vsel %vm306, %v392, 0.0
      %v498 = vadd.f32 %v496, %v497
      %v499 = vsel %vm306, %v395, 0.0
      %v500 = vadd.f32 %v498, %v499
      %v501 = vsel %vm306, %v397, 0.0
      %v502 = vadd.f32 %v500, %v501
      %v503 = vsel %vm306, %v400, 0.0
      %v504 = vadd.f32 %v502, %v503
      %v505 = vsel %vm306, %v402, 0.0
      %v506 = vadd.f32 %v504, %v505
      %v507 = vsel %vm306, %v405, 0.0
      %v508 = vadd.f32 %v506, %v507
      %v509 = vsel %vm306, %v407, 0.0
      %v510 = vadd.f32 %v508, %v509
      %v511 = vsel %vm306, %v410, 0.0
      %v512 = vadd.f32 %v510, %v511
      %v513 = vsel %vm306, %v412, 0.0
      %v514 = vadd.f32 %v512, %v513
      %v515 = vsel %vm306, %v415, 0.0
      %v516 = vadd.f32 %v514, %v515
      %v517 = vsel %vm306, %v417, 0.0
      %v518 = vadd.f32 %v516, %v517
      %v519 = vsel %vm306, %v420, 0.0
      %v520 = vadd.f32 %v518, %v519
      %v521 = vsel %vm306, %v422, 0.0
      %v522 = vadd.f32 %v520, %v521
      %v523 = vsel %vm306, %v425, 0.0
      %v524 = vadd.f32 %v522, %v523
      %v525 = vsel %vm306, %v427, 0.0
      %v526 = vadd.f32 %v524, %v525
      %v527 = vsel %vm306, %v430, 0.0
      %v528 = vadd.f32 %v526, %v527
      %v529 = vsel %vm306, %v432, 0.0
      %v530 = vadd.f32 %v528, %v529
      %v531 = vsel %vm306, %v435, 0.0
      %v532 = vadd.f32 %v530, %v531
      %v533 = vsel %vm306, %v437, 0.0
      %v534 = vadd.f32 %v532, %v533
      %v535 = vsel %vm306, %v440, 0.0
      %v536 = vadd.f32 %v534, %v535
      %v537 = vsel %vm306, %v442, 0.0
      %v538 = vadd.f32 %v536, %v537
      %v539 = vrot.slane %v538, 4
      %v540 = vadd.f32 %v538, %v539
      %v541 = vrot.slane %v540, 2
      %v542 = vadd.f32 %v540, %v541
      %v543 = vrot.slane %v542, 1
      %v544 = vadd.f32 %v542, %v543
      %v545 = vmul.f32 %v365, %v365
      %v546 = vmul.f32 %v367, %v367
      %v547 = vmul.f32 %v370, %v370
      %v548 = vmul.f32 %v372, %v372
      %v549 = vmul.f32 %v375, %v375
      %v550 = vmul.f32 %v377, %v377
      %v551 = vmul.f32 %v380, %v380
      %v552 = vmul.f32 %v382, %v382
      %v553 = vmul.f32 %v385, %v385
      %v554 = vmul.f32 %v387, %v387
      %v555 = vmul.f32 %v390, %v390
      %v556 = vmul.f32 %v392, %v392
      %v557 = vmul.f32 %v395, %v395
      %v558 = vmul.f32 %v397, %v397
      %v559 = vmul.f32 %v400, %v400
      %v560 = vmul.f32 %v402, %v402
      %v561 = vmul.f32 %v405, %v405
      %v562 = vmul.f32 %v407, %v407
      %v563 = vmul.f32 %v410, %v410
      %v564 = vmul.f32 %v412, %v412
      %v565 = vmul.f32 %v415, %v415
      %v566 = vmul.f32 %v417, %v417
      %v567 = vmul.f32 %v420, %v420
      %v568 = vmul.f32 %v422, %v422
      %v569 = vmul.f32 %v425, %v425
      %v570 = vmul.f32 %v427, %v427
      %v571 = vmul.f32 %v430, %v430
      %v572 = vmul.f32 %v432, %v432
      %v573 = vmul.f32 %v435, %v435
      %v574 = vmul.f32 %v437, %v437
      %v575 = vmul.f32 %v440, %v440
      %v576 = vmul.f32 %v442, %v442
      %v577 = vsel %vm306, %v545, 0.0
      %v578 = vsel %vm306, %v546, 0.0
      %v579 = vadd.f32 %v577, %v578
      %v580 = vsel %vm306, %v547, 0.0
      %v581 = vadd.f32 %v579, %v580
      %v582 = vsel %vm306, %v548, 0.0
      %v583 = vadd.f32 %v581, %v582
      %v584 = vsel %vm306, %v549, 0.0
      %v585 = vadd.f32 %v583, %v584
      %v586 = vsel %vm306, %v550, 0.0
      %v587 = vadd.f32 %v585, %v586
      %v588 = vsel %vm306, %v551, 0.0
      %v589 = vadd.f32 %v587, %v588
      %v590 = vsel %vm306, %v552, 0.0
      %v591 = vadd.f32 %v589, %v590
      %v592 = vsel %vm306, %v553, 0.0
      %v593 = vadd.f32 %v591, %v592
      %v594 = vsel %vm306, %v554, 0.0
      %v595 = vadd.f32 %v593, %v594
      %v596 = vsel %vm306, %v555, 0.0
      %v597 = vadd.f32 %v595, %v596
      %v598 = vsel %vm306, %v556, 0.0
      %v599 = vadd.f32 %v597, %v598
      %v600 = vsel %vm306, %v557, 0.0
      %v601 = vadd.f32 %v599, %v600
      %v602 = vsel %vm306, %v558, 0.0
      %v603 = vadd.f32 %v601, %v602
      %v604 = vsel %vm306, %v559, 0.0
      %v605 = vadd.f32 %v603, %v604
      %v606 = vsel %vm306, %v560, 0.0
      %v607 = vadd.f32 %v605, %v606
      %v608 = vsel %vm306, %v561, 0.0
      %v609 = vadd.f32 %v607, %v608
      %v610 = vsel %vm306, %v562, 0.0
      %v611 = vadd.f32 %v609, %v610
      %v612 = vsel %vm306, %v563, 0.0
      %v613 = vadd.f32 %v611, %v612
      %v614 = vsel %vm306, %v564, 0.0
      %v615 = vadd.f32 %v613, %v614
      %v616 = vsel %vm306, %v565, 0.0
      %v617 = vadd.f32 %v615, %v616
      %v618 = vsel %vm306, %v566, 0.0
      %v619 = vadd.f32 %v617, %v618
      %v620 = vsel %vm306, %v567, 0.0
      %v621 = vadd.f32 %v619, %v620
      %v622 = vsel %vm306, %v568, 0.0
      %v623 = vadd.f32 %v621, %v622
      %v624 = vsel %vm306, %v569, 0.0
      %v625 = vadd.f32 %v623, %v624
      %v626 = vsel %vm306, %v570, 0.0
      %v627 = vadd.f32 %v625, %v626
      %v628 = vsel %vm306, %v571, 0.0
      %v629 = vadd.f32 %v627, %v628
      %v630 = vsel %vm306, %v572, 0.0
      %v631 = vadd.f32 %v629, %v630
      %v632 = vsel %vm306, %v573, 0.0
      %v633 = vadd.f32 %v631, %v632
      %v634 = vsel %vm306, %v574, 0.0
      %v635 = vadd.f32 %v633, %v634
      %v636 = vsel %vm306, %v575, 0.0
      %v637 = vadd.f32 %v635, %v636
      %v638 = vsel %vm306, %v576, 0.0
      %v639 = vadd.f32 %v637, %v638
      %v640 = vrot.slane %v639, 4
      %v641 = vadd.f32 %v639, %v640
      %v642 = vrot.slane %v641, 2
      %v643 = vadd.f32 %v641, %v642
      %v644 = vrot.slane %v643, 1
      %v645 = vadd.f32 %v643, %v644
      %v646 = vlaneseq
      %v647 = vshrl.u32 %v646, 7
      %vm648 = vcmp.eq.s32.totalorder %v647, 0
      %vm649 = vcmp.eq.s32.totalorder %v647, 1
      %v650 = vsel %vm649, %v645, 0.0
      %v651 = vsel %vm648, %v544, %v650
      %652 = vst.msk [vmem:[%s184] sm:$0xff] %vm306, %v651
      %s653 = smul.u32 32, %s15
      %p654 = scmp.lt.s32.totalorder %s653, 63
      %s655 = scalar_select %p654, %s653, 63
      %s656 = smul.addr %s655, 8
      %s657 = scalar_lea.vmem %s2, %s656
      %p658 = scmp.lt.s32.totalorder %s15, 1
      %s659 = scalar_select %p658, %s15, 1
      %s660 = smul.addr %s659, 8
      %s661 = scalar_lea.vmem %s3, %s660
      // Predicated region
      $region29: #{inverse_dcgan_forward.7} parent=27 // pred_check
        %p662 = pneg %p80
      $region30: #{inverse_dcgan_forward.7} parent=27 // pred_check_branch
        %664 = sbr.rel (%p662) target = $region32
      $region31: #{inverse_dcgan_forward.7} parent=27 // pred_region
        %s665 = smul.u32 32, %s15
      $region32: #{inverse_dcgan_forward.7} parent=27 // pred_fallthru
        _
      // Predicated region
      $region33: #{inverse_dcgan_forward.7} parent=27 // pred_check
        %p666 = pneg %p106
      $region34: #{inverse_dcgan_forward.7} parent=27 // pred_check_branch
        %668 = sbr.rel (%p666) target = $region36
      $region35: #{inverse_dcgan_forward.7} parent=27 // pred_region
        _
      $region36: #{inverse_dcgan_forward.7} parent=27 // pred_fallthru
        _
    $region28: #{inverse_dcgan_forward.7} parent=5 // pred_fallthru
      _
    %p669 = scmp.le.s32.totalorder 2, %s10
    // Predicated region
    $region37: #{inverse_dcgan_forward.7} parent=5 // pred_check
      %p670 = pneg %p669
    $region38: #{inverse_dcgan_forward.7} parent=5 // pred_check_branch
      %672 = sbr.rel (%p670) target = $region40
    $region39: #{inverse_dcgan_forward.7} parent=5 // pred_region
      %s673 = ssub.s32 %s10, 2
      // Predicated region
      $region41: #{inverse_dcgan_forward.7} parent=39 // pred_check
        %p674 = pneg %p86
      $region42: #{inverse_dcgan_forward.7} parent=39 // pred_check_branch
        %676 = sbr.rel (%p674) target = $region44
      $region43: #{inverse_dcgan_forward.7} parent=39 // pred_region
        %s677 = smul.u32 32, %s16
        %p678 = scmp.lt.s32.totalorder %s677, 63
        %s679 = scalar_select %p678, %s677, 63
        %s680 = smul.addr %s679, 8
        %s681 = scalar_lea.vmem %s2, %s680
      $region44: #{inverse_dcgan_forward.7} parent=39 // pred_fallthru
        _
      // Predicated region
      $region45: #{inverse_dcgan_forward.7} parent=39 // pred_check
        %p682 = pneg %p112
      $region46: #{inverse_dcgan_forward.7} parent=39 // pred_check_branch
        %684 = sbr.rel (%p682) target = $region48
      $region47: #{inverse_dcgan_forward.7} parent=39 // pred_region
        %p685 = scmp.lt.s32.totalorder %s16, 1
        %s686 = scalar_select %p685, %s16, 1
        %s687 = smul.addr %s686, 8
        %s688 = scalar_lea.vmem %s3, %s687
      $region48: #{inverse_dcgan_forward.7} parent=39 // pred_fallthru
        _
    $region40: #{inverse_dcgan_forward.7} parent=5 // pred_fallthru
      _
  $region6: #{inverse_dcgan_forward.7} parent=0 // loop_footer
    %s14 = sadd.s32 1, %s10
  $region7: #{inverse_dcgan_forward.7} parent=0 // loop_footer_branch
    %9 = sbr.rel target = $region3
  $region8: #{inverse_dcgan_forward.7} parent=0 // loop_exit
    _

// kernel: inverse_dcgan_forward.8
$region0: #{inverse_dcgan_forward.8}
  #allocation0 [shape = 'u32[]', space=smem, size = 0x4, offset = 0x4, fixed_abs, tag = 'smem constant byte address 0x4 - core index']
  #allocation1 [shape = 'u32[72,128]{1,0:T(1,128)}', space=vmem, size = 0x9000, scoped, tag = 'internal scratch']
  #allocation2 [shape = 's32[1]{0:T(128)S(6)}', space=smem, size = 0x200, scoped, tag = 'scoped memory for inverse_dcgan_forward.8']
  %s0 = inlined_call_operand.<no memory space> [shape: s32[1], index: 0, kind: input, shape index: {}]
  %s1 = inlined_call_operand.vmem [shape: f32[1,16], index: 1, kind: input, shape index: {}]
  %s2 = inlined_call_operand.vmem [shape: f32[1,16], index: 2, kind: input, shape index: {}]
  %s3 = inlined_call_operand.vmem [shape: f32[512,16], index: 3, kind: input, shape index: {}]
  %s4 = inlined_call_operand.vmem [shape: bf16[512,16], index: 4, kind: output, shape index: {}]
  %s5 = sld [smem:[#allocation0]]
  $region49: #{inverse_dcgan_forward.8} parent=0
    _
  %s7 = ssub.s32 1, %s5
  %s8 = scalar_select 0, %s7, %s5
  %9 = sst [smem:[#allocation2]] %s0
  loop: start=0, step=1, limit=4
  $region2: #{inverse_dcgan_forward.8} parent=0 // loop_pre_header
    _
  $region3: #{inverse_dcgan_forward.8} parent=0 // loop_header
    %s11 = sphi 0, %s15
    %p12 = scmp.ge.s32.totalorder %s11, 4
    %s19 = sphi 0, %s19
    %s21 = sphi 0, %s19
    %s22 = sphi 0, %s21
    %s36 = sphi 0, %s22
    %s40 = sphi 0, %s40
    %s42 = sphi 0, %s40
    %s43 = sphi 0, %s42
    %s57 = sphi 0, %s43
    %s61 = sphi 0, %s61
    %s63 = sphi 0, %s61
    %s64 = sphi 0, %s63
    %s78 = sphi 0, %s64
    %s84 = sphi 0, %s86
    %s87 = sphi 0, %s84
    %s88 = sphi 0, %s87
    %s104 = sphi 0, %s88
    %s110 = sphi 0, %s112
    %s113 = sphi 0, %s110
    %s114 = sphi 0, %s113
    %s130 = sphi 0, %s114
  $region4: #{inverse_dcgan_forward.8} parent=0 // loop_header_branch
    %14 = sbr.rel (%p12) target = $region8
  $region5: #{inverse_dcgan_forward.8} parent=0 // loop_body
    %s16 = ssub.s32 %s11, 1
    %s17 = ssub.s32 %s11, 2
    %s18 = sadd.s32 %s11, 1
    %s20 = sadd.s32 %s19, 1
    %p23 = scmp.eq.s32.totalorder %s11, 1
    %p24 = scmp.ne.s32.totalorder %s19, %s21
    %p25 = scmp.eq.s32.totalorder %s11, 0
    %p26 = por %p24, %p25
    %p27 = scmp.ne.s32.totalorder %s19, %s21
    %p28 = scmp.eq.s32.totalorder %s16, 1
    %p29 = por %p27, %p28
    %p30 = scmp.ne.s32.totalorder %s21, %s22
    %p31 = scmp.eq.s32.totalorder %s16, 0
    %p32 = por %p30, %p31
    %p33 = scmp.ne.s32.totalorder %s21, %s22
    %p34 = scmp.eq.s32.totalorder %s17, 1
    %p35 = por %p33, %p34
    %p37 = scmp.ne.s32.totalorder %s22, %s36
    %p38 = scmp.eq.s32.totalorder %s17, 0
    %p39 = por %p37, %p38
    %s41 = sadd.s32 %s40, 1
    %p44 = scmp.eq.s32.totalorder %s11, 1
    %p45 = scmp.ne.s32.totalorder %s40, %s42
    %p46 = scmp.eq.s32.totalorder %s11, 0
    %p47 = por %p45, %p46
    %p48 = scmp.ne.s32.totalorder %s40, %s42
    %p49 = scmp.eq.s32.totalorder %s16, 1
    %p50 = por %p48, %p49
    %p51 = scmp.ne.s32.totalorder %s42, %s43
    %p52 = scmp.eq.s32.totalorder %s16, 0
    %p53 = por %p51, %p52
    %p54 = scmp.ne.s32.totalorder %s42, %s43
    %p55 = scmp.eq.s32.totalorder %s17, 1
    %p56 = por %p54, %p55
    %p58 = scmp.ne.s32.totalorder %s43, %s57
    %p59 = scmp.eq.s32.totalorder %s17, 0
    %p60 = por %p58, %p59
    %s62 = sadd.s32 %s61, 1
    %p65 = scmp.eq.s32.totalorder %s11, 1
    %p66 = scmp.ne.s32.totalorder %s61, %s63
    %p67 = scmp.eq.s32.totalorder %s11, 0
    %p68 = por %p66, %p67
    %p69 = scmp.ne.s32.totalorder %s61, %s63
    %p70 = scmp.eq.s32.totalorder %s16, 1
    %p71 = por %p69, %p70
    %p72 = scmp.ne.s32.totalorder %s63, %s64
    %p73 = scmp.eq.s32.totalorder %s16, 0
    %p74 = por %p72, %p73
    %p75 = scmp.ne.s32.totalorder %s63, %s64
    %p76 = scmp.eq.s32.totalorder %s17, 1
    %p77 = por %p75, %p76
    %p79 = scmp.ne.s32.totalorder %s64, %s78
    %p80 = scmp.eq.s32.totalorder %s17, 0
    %p81 = por %p79, %p80
    %s82 = ssub.s32 %s11, %s18
    %p83 = scmp.eq.s32.totalorder %s82, 0
    %s85 = sadd.s32 %s84, 1
    %s86 = scalar_select %p83, %s84, %s85
    %p89 = pneg %p83
    %p90 = scmp.eq.s32.totalorder %s11, 1
    %p91 = por %p89, %p90
    %p92 = scmp.ne.s32.totalorder %s84, %s87
    %p93 = scmp.eq.s32.totalorder %s11, 0
    %p94 = por %p92, %p93
    %p95 = scmp.ne.s32.totalorder %s84, %s87
    %p96 = scmp.eq.s32.totalorder %s16, 1
    %p97 = por %p95, %p96
    %p98 = scmp.ne.s32.totalorder %s87, %s88
    %p99 = scmp.eq.s32.totalorder %s16, 0
    %p100 = por %p98, %p99
    %p101 = scmp.ne.s32.totalorder %s87, %s88
    %p102 = scmp.eq.s32.totalorder %s17, 1
    %p103 = por %p101, %p102
    %p105 = scmp.ne.s32.totalorder %s88, %s104
    %p106 = scmp.eq.s32.totalorder %s17, 0
    %p107 = por %p105, %p106
    %s108 = ssub.s32 %s11, %s18
    %p109 = scmp.eq.s32.totalorder %s108, 0
    %s111 = sadd.s32 %s110, 1
    %s112 = scalar_select %p109, %s110, %s111
    %p115 = pneg %p109
    %p116 = scmp.eq.s32.totalorder %s11, 1
    %p117 = por %p115, %p116
    %p118 = scmp.ne.s32.totalorder %s110, %s113
    %p119 = scmp.eq.s32.totalorder %s11, 0
    %p120 = por %p118, %p119
    %p121 = scmp.ne.s32.totalorder %s110, %s113
    %p122 = scmp.eq.s32.totalorder %s16, 1
    %p123 = por %p121, %p122
    %p124 = scmp.ne.s32.totalorder %s113, %s114
    %p125 = scmp.eq.s32.totalorder %s16, 0
    %p126 = por %p124, %p125
    %p127 = scmp.ne.s32.totalorder %s113, %s114
    %p128 = scmp.eq.s32.totalorder %s17, 1
    %p129 = por %p127, %p128
    %p131 = scmp.ne.s32.totalorder %s114, %s130
    %p132 = scmp.eq.s32.totalorder %s17, 0
    %p133 = por %p131, %p132
    %p134 = scmp.le.s32.totalorder 1, %s11
    %p135 = scmp.lt.s32.totalorder %s11, 3
    %p136 = pnand %p134, %p135
    %p137 = pneg %p136
    // Predicated region
    $region9: #{inverse_dcgan_forward.8} parent=5 // pred_check
      _
    $region10: #{inverse_dcgan_forward.8} parent=5 // pred_check_branch
      %139 = sbr.rel (%p136) target = $region12
    $region11: #{inverse_dcgan_forward.8} parent=5 // pred_region
      %s140 = ssub.s32 %s11, 1
      // Predicated region
      $region13: #{inverse_dcgan_forward.8} parent=11 // pred_check
        %p141 = pneg %p32
      $region14: #{inverse_dcgan_forward.8} parent=11 // pred_check_branch
        %143 = sbr.rel (%p141) target = $region16
      $region15: #{inverse_dcgan_forward.8} parent=11 // pred_region
        _
      $region16: #{inverse_dcgan_forward.8} parent=11 // pred_fallthru
        _
      // Predicated region
      $region17: #{inverse_dcgan_forward.8} parent=11 // pred_check
        %p144 = pneg %p53
      $region18: #{inverse_dcgan_forward.8} parent=11 // pred_check_branch
        %146 = sbr.rel (%p144) target = $region20
      $region19: #{inverse_dcgan_forward.8} parent=11 // pred_region
        _
      $region20: #{inverse_dcgan_forward.8} parent=11 // pred_fallthru
        _
      // Predicated region
      $region21: #{inverse_dcgan_forward.8} parent=11 // pred_check
        %p147 = pneg %p74
      $region22: #{inverse_dcgan_forward.8} parent=11 // pred_check_branch
        %149 = sbr.rel (%p147) target = $region24
      $region23: #{inverse_dcgan_forward.8} parent=11 // pred_region
        _
      $region24: #{inverse_dcgan_forward.8} parent=11 // pred_fallthru
        _
    $region12: #{inverse_dcgan_forward.8} parent=5 // pred_fallthru
      _
    %p150 = scmp.lt.s32.totalorder %s11, 2
    // Predicated region
    $region25: #{inverse_dcgan_forward.8} parent=5 // pred_check
      %p151 = pneg %p150
    $region26: #{inverse_dcgan_forward.8} parent=5 // pred_check_branch
      %153 = sbr.rel (%p151) target = $region28
    $region27: #{inverse_dcgan_forward.8} parent=5 // pred_region
      // Predicated region
      $region29: #{inverse_dcgan_forward.8} parent=27 // pred_check
        %p154 = pneg %p94
      $region30: #{inverse_dcgan_forward.8} parent=27 // pred_check_branch
        %156 = sbr.rel (%p154) target = $region32
      $region31: #{inverse_dcgan_forward.8} parent=27 // pred_region
        %s157 = smul.u32 32, %s11
        %p158 = scmp.lt.s32.totalorder %s157, 63
        %s159 = scalar_select %p158, %s157, 63
        %s160 = smul.addr %s159, 8
        %s161 = scalar_lea.vmem %s3, %s160
        %s162 = smul.u32 32, %s11
      $region32: #{inverse_dcgan_forward.8} parent=27 // pred_fallthru
        _
    $region28: #{inverse_dcgan_forward.8} parent=5 // pred_fallthru
      _
    %p163 = scmp.le.s32.totalorder 1, %s11
    %p164 = scmp.lt.s32.totalorder %s11, 3
    %p165 = pnand %p163, %p164
    %p166 = pneg %p165
    // Predicated region
    $region33: #{inverse_dcgan_forward.8} parent=5 // pred_check
      _
    $region34: #{inverse_dcgan_forward.8} parent=5 // pred_check_branch
      %168 = sbr.rel (%p165) target = $region36
    $region35: #{inverse_dcgan_forward.8} parent=5 // pred_region
      %s169 = ssub.s32 %s11, 1
      %p170 = pneg %p32
      %p171 = pneg %p29
      %p172 = pneg %p53
      %p173 = pneg %p50
      %p174 = pneg %p74
      %p175 = pneg %p71
      %s176 = smul.u32 32, %s16
      %p177 = scmp.lt.s32.totalorder %s176, 63
      %s178 = scalar_select %p177, %s176, 63
      %s179 = smul.addr %s178, 8
      %s180 = scalar_lea.vmem %s3, %s179
      %p181 = pneg %p100
      %p182 = pneg %p97
      %p183 = pneg %p126
      %p184 = pneg %p123
      %s185 = smul.u32 32, %s16
      %p186 = scmp.lt.s32.totalorder %s185, 63
      %s187 = scalar_select %p186, %s185, 63
      %s188 = smul.addr %s187, 4
      %s189 = scalar_lea.vmem %s4, %s188
      %s190 = smul.u32 32, %s16
      %p191 = scmp.lt.s32.totalorder %s190, 63
      %s192 = scalar_select %p191, %s190, 63
      %s193 = smul.addr %s192, 8
      %s194 = scalar_lea.vmem %s3, %s193
      %s195 = smul.u32 32, %s16
      %s196 = smul.u32 32, %s16
      %p197 = scmp.lt.s32.totalorder %s196, 63
      %s198 = scalar_select %p197, %s196, 63
      %s199 = smul.addr %s198, 4
      %s200 = scalar_lea.vmem %s4, %s199
      %s201 = smul.u32 32, %s16
      %v202 = vld [vmem:[%s194] sm:$0xff]
      %v203 = vld [vmem:[%s194 + $0x8] sm:$0xff]
      %v204 = vld [vmem:[%s194 + $0x10] sm:$0xff]
      %v205 = vld [vmem:[%s194 + $0x18] sm:$0xff]
      %v206 = vld [vmem:[%s194 + $0x20] sm:$0xff]
      %v207 = vld [vmem:[%s194 + $0x28] sm:$0xff]
      %v208 = vld [vmem:[%s194 + $0x30] sm:$0xff]
      %v209 = vld [vmem:[%s194 + $0x38] sm:$0xff]
      %v210 = vld [vmem:[%s194 + $0x40] sm:$0xff]
      %v211 = vld [vmem:[%s194 + $0x48] sm:$0xff]
      %v212 = vld [vmem:[%s194 + $0x50] sm:$0xff]
      %v213 = vld [vmem:[%s194 + $0x58] sm:$0xff]
      %v214 = vld [vmem:[%s194 + $0x60] sm:$0xff]
      %v215 = vld [vmem:[%s194 + $0x68] sm:$0xff]
      %v216 = vld [vmem:[%s194 + $0x70] sm:$0xff]
      %v217 = vld [vmem:[%s194 + $0x78] sm:$0xff]
      %v218 = vld [vmem:[%s194 + $0x80] sm:$0xff]
      %v219 = vld [vmem:[%s194 + $0x88] sm:$0xff]
      %v220 = vld [vmem:[%s194 + $0x90] sm:$0xff]
      %v221 = vld [vmem:[%s194 + $0x98] sm:$0xff]
      %v222 = vld [vmem:[%s194 + $0xa0] sm:$0xff]
      %v223 = vld [vmem:[%s194 + $0xa8] sm:$0xff]
      %v224 = vld [vmem:[%s194 + $0xb0] sm:$0xff]
      %v225 = vld [vmem:[%s194 + $0xb8] sm:$0xff]
      %v226 = vld [vmem:[%s194 + $0xc0] sm:$0xff]
      %v227 = vld [vmem:[%s194 + $0xc8] sm:$0xff]
      %v228 = vld [vmem:[%s194 + $0xd0] sm:$0xff]
      %v229 = vld [vmem:[%s194 + $0xd8] sm:$0xff]
      %v230 = vld [vmem:[%s194 + $0xe0] sm:$0xff]
      %v231 = vld [vmem:[%s194 + $0xe8] sm:$0xff]
      %v232 = vld [vmem:[%s194 + $0xf0] sm:$0xff]
      %v233 = vld [vmem:[%s194 + $0xf8] sm:$0xff]
      %v234 = vld [vmem:[%s1] sm:$0x1]
      %v236 = vperm.slane %v234, 0
      %v238 = vmul.f32 %v202, %v236
      %v239 = vmul.f32 %v203, %v236
      %v240 = vmul.f32 %v204, %v236
      %v241 = vmul.f32 %v205, %v236
      %v242 = vmul.f32 %v206, %v236
      %v243 = vmul.f32 %v207, %v236
      %v244 = vmul.f32 %v208, %v236
      %v245 = vmul.f32 %v209, %v236
      %v246 = vmul.f32 %v210, %v236
      %v247 = vmul.f32 %v211, %v236
      %v248 = vmul.f32 %v212, %v236
      %v249 = vmul.f32 %v213, %v236
      %v250 = vmul.f32 %v214, %v236
      %v251 = vmul.f32 %v215, %v236
      %v252 = vmul.f32 %v216, %v236
      %v253 = vmul.f32 %v217, %v236
      %v254 = vmul.f32 %v218, %v236
      %v255 = vmul.f32 %v219, %v236
      %v256 = vmul.f32 %v220, %v236
      %v257 = vmul.f32 %v221, %v236
      %v258 = vmul.f32 %v222, %v236
      %v259 = vmul.f32 %v223, %v236
      %v260 = vmul.f32 %v224, %v236
      %v261 = vmul.f32 %v225, %v236
      %v262 = vmul.f32 %v226, %v236
      %v263 = vmul.f32 %v227, %v236
      %v264 = vmul.f32 %v228, %v236
      %v265 = vmul.f32 %v229, %v236
      %v266 = vmul.f32 %v230, %v236
      %v267 = vmul.f32 %v231, %v236
      %v268 = vmul.f32 %v232, %v236
      %v269 = vmul.f32 %v233, %v236
      %v270 = vld [vmem:[%s2] sm:$0x1]
      %v272 = vperm.slane %v270, 0
      %v274 = vadd.f32 %v238, %v272
      %v275 = vadd.f32 %v239, %v272
      %v276 = vadd.f32 %v240, %v272
      %v277 = vadd.f32 %v241, %v272
      %v278 = vadd.f32 %v242, %v272
      %v279 = vadd.f32 %v243, %v272
      %v280 = vadd.f32 %v244, %v272
      %v281 = vadd.f32 %v245, %v272
      %v282 = vadd.f32 %v246, %v272
      %v283 = vadd.f32 %v247, %v272
      %v284 = vadd.f32 %v248, %v272
      %v285 = vadd.f32 %v249, %v272
      %v286 = vadd.f32 %v250, %v272
      %v287 = vadd.f32 %v251, %v272
      %v288 = vadd.f32 %v252, %v272
      %v289 = vadd.f32 %v253, %v272
      %v290 = vadd.f32 %v254, %v272
      %v291 = vadd.f32 %v255, %v272
      %v292 = vadd.f32 %v256, %v272
      %v293 = vadd.f32 %v257, %v272
      %v294 = vadd.f32 %v258, %v272
      %v295 = vadd.f32 %v259, %v272
      %v296 = vadd.f32 %v260, %v272
      %v297 = vadd.f32 %v261, %v272
      %v298 = vadd.f32 %v262, %v272
      %v299 = vadd.f32 %v263, %v272
      %v300 = vadd.f32 %v264, %v272
      %v301 = vadd.f32 %v265, %v272
      %v302 = vadd.f32 %v266, %v272
      %v303 = vadd.f32 %v267, %v272
      %v304 = vadd.f32 %v268, %v272
      %v305 = vadd.f32 %v269, %v272
      %vm306 = vcmp.ge.f32.partialorder %v274, 0.0
      %vm307 = vcmp.ge.f32.partialorder %v275, 0.0
      %vm308 = vcmp.ge.f32.partialorder %v276, 0.0
      %vm309 = vcmp.ge.f32.partialorder %v277, 0.0
      %vm310 = vcmp.ge.f32.partialorder %v278, 0.0
      %vm311 = vcmp.ge.f32.partialorder %v279, 0.0
      %vm312 = vcmp.ge.f32.partialorder %v280, 0.0
      %vm313 = vcmp.ge.f32.partialorder %v281, 0.0
      %vm314 = vcmp.ge.f32.partialorder %v282, 0.0
      %vm315 = vcmp.ge.f32.partialorder %v283, 0.0
      %vm316 = vcmp.ge.f32.partialorder %v284, 0.0
      %vm317 = vcmp.ge.f32.partialorder %v285, 0.0
      %vm318 = vcmp.ge.f32.partialorder %v286, 0.0
      %vm319 = vcmp.ge.f32.partialorder %v287, 0.0
      %vm320 = vcmp.ge.f32.partialorder %v288, 0.0
      %vm321 = vcmp.ge.f32.partialorder %v289, 0.0
      %vm322 = vcmp.ge.f32.partialorder %v290, 0.0
      %vm323 = vcmp.ge.f32.partialorder %v291, 0.0
      %vm324 = vcmp.ge.f32.partialorder %v292, 0.0
      %vm325 = vcmp.ge.f32.partialorder %v293, 0.0
      %vm326 = vcmp.ge.f32.partialorder %v294, 0.0
      %vm327 = vcmp.ge.f32.partialorder %v295, 0.0
      %vm328 = vcmp.ge.f32.partialorder %v296, 0.0
      %vm329 = vcmp.ge.f32.partialorder %v297, 0.0
      %vm330 = vcmp.ge.f32.partialorder %v298, 0.0
      %vm331 = vcmp.ge.f32.partialorder %v299, 0.0
      %vm332 = vcmp.ge.f32.partialorder %v300, 0.0
      %vm333 = vcmp.ge.f32.partialorder %v301, 0.0
      %vm334 = vcmp.ge.f32.partialorder %v302, 0.0
      %vm335 = vcmp.ge.f32.partialorder %v303, 0.0
      %vm336 = vcmp.ge.f32.partialorder %v304, 0.0
      %vm337 = vcmp.ge.f32.partialorder %v305, 0.0
      %v338 = vmul.f32 %v274, 0.2
      %v339 = vmul.f32 %v275, 0.2
      %v340 = vmul.f32 %v276, 0.2
      %v341 = vmul.f32 %v277, 0.2
      %v342 = vmul.f32 %v278, 0.2
      %v343 = vmul.f32 %v279, 0.2
      %v344 = vmul.f32 %v280, 0.2
      %v345 = vmul.f32 %v281, 0.2
      %v346 = vmul.f32 %v282, 0.2
      %v347 = vmul.f32 %v283, 0.2
      %v348 = vmul.f32 %v284, 0.2
      %v349 = vmul.f32 %v285, 0.2
      %v350 = vmul.f32 %v286, 0.2
      %v351 = vmul.f32 %v287, 0.2
      %v352 = vmul.f32 %v288, 0.2
      %v353 = vmul.f32 %v289, 0.2
      %v354 = vmul.f32 %v290, 0.2
      %v355 = vmul.f32 %v291, 0.2
      %v356 = vmul.f32 %v292, 0.2
      %v357 = vmul.f32 %v293, 0.2
      %v358 = vmul.f32 %v294, 0.2
      %v359 = vmul.f32 %v295, 0.2
      %v360 = vmul.f32 %v296, 0.2
      %v361 = vmul.f32 %v297, 0.2
      %v362 = vmul.f32 %v298, 0.2
      %v363 = vmul.f32 %v299, 0.2
      %v364 = vmul.f32 %v300, 0.2
      %v365 = vmul.f32 %v301, 0.2
      %v366 = vmul.f32 %v302, 0.2
      %v367 = vmul.f32 %v303, 0.2
      %v368 = vmul.f32 %v304, 0.2
      %v369 = vmul.f32 %v305, 0.2
      %v370 = vsel %vm306, %v274, %v338
      %v371 = vsel %vm307, %v275, %v339
      %v372 = vsel %vm308, %v276, %v340
      %v373 = vsel %vm309, %v277, %v341
      %v374 = vsel %vm310, %v278, %v342
      %v375 = vsel %vm311, %v279, %v343
      %v376 = vsel %vm312, %v280, %v344
      %v377 = vsel %vm313, %v281, %v345
      %v378 = vsel %vm314, %v282, %v346
      %v379 = vsel %vm315, %v283, %v347
      %v380 = vsel %vm316, %v284, %v348
      %v381 = vsel %vm317, %v285, %v349
      %v382 = vsel %vm318, %v286, %v350
      %v383 = vsel %vm319, %v287, %v351
      %v384 = vsel %vm320, %v288, %v352
      %v385 = vsel %vm321, %v289, %v353
      %v386 = vsel %vm322, %v290, %v354
      %v387 = vsel %vm323, %v291, %v355
      %v388 = vsel %vm324, %v292, %v356
      %v389 = vsel %vm325, %v293, %v357
      %v390 = vsel %vm326, %v294, %v358
      %v391 = vsel %vm327, %v295, %v359
      %v392 = vsel %vm328, %v296, %v360
      %v393 = vsel %vm329, %v297, %v361
      %v394 = vsel %vm330, %v298, %v362
      %v395 = vsel %vm331, %v299, %v363
      %v396 = vsel %vm332, %v300, %v364
      %v397 = vsel %vm333, %v301, %v365
      %v398 = vsel %vm334, %v302, %v366
      %v399 = vsel %vm335, %v303, %v367
      %v400 = vsel %vm336, %v304, %v368
      %v401 = vsel %vm337, %v305, %v369
      %v402 = vlaneseq
      %v403 = vshrl.u32 %v402, 7
      %v404 = vadd.s32 %v403, 8
      %v405 = vadd.s32 %v403, 16
      %v406 = vadd.s32 %v403, 24
      %v407 = vadd.s32 %v403, 32
      %v408 = vadd.s32 %v403, 40
      %v409 = vadd.s32 %v403, 48
      %v410 = vadd.s32 %v403, 56
      %v411 = vadd.s32 %v403, 64
      %v412 = vadd.s32 %v403, 72
      %v413 = vadd.s32 %v403, 80
      %v414 = vadd.s32 %v403, 88
      %v415 = vadd.s32 %v403, 96
      %v416 = vadd.s32 %v403, 104
      %v417 = vadd.s32 %v403, 112
      %v418 = vadd.s32 %v403, 120
      %v419 = vadd.s32 %v403, 128
      %v420 = vadd.s32 %v403, 136
      %v421 = vadd.s32 %v403, 144
      %v422 = vadd.s32 %v403, 152
      %v423 = vadd.s32 %v403, 160
      %v424 = vadd.s32 %v403, 168
      %v425 = vadd.s32 %v403, 176
      %v426 = vadd.s32 %v403, 184
      %v427 = vadd.s32 %v403, 192
      %v428 = vadd.s32 %v403, 200
      %v429 = vadd.s32 %v403, 208
      %v430 = vadd.s32 %v403, 216
      %v431 = vadd.s32 %v403, 224
      %v432 = vadd.s32 %v403, 232
      %v433 = vadd.s32 %v403, 240
      %v434 = vadd.s32 %v403, 248
      %v435 = vlaneseq
      %v436 = vand.u32 %v435, 127
      %s437 = smul.u32 %s16, 256
      %v438 = vstv %s437
      %v439 = vadd.s32 %v438, %v403
      %v440 = vadd.s32 %v438, %v404
      %v441 = vadd.s32 %v438, %v405
      %v442 = vadd.s32 %v438, %v406
      %v443 = vadd.s32 %v438, %v407
      %v444 = vadd.s32 %v438, %v408
      %v445 = vadd.s32 %v438, %v409
      %v446 = vadd.s32 %v438, %v410
      %v447 = vadd.s32 %v438, %v411
      %v448 = vadd.s32 %v438, %v412
      %v449 = vadd.s32 %v438, %v413
      %v450 = vadd.s32 %v438, %v414
      %v451 = vadd.s32 %v438, %v415
      %v452 = vadd.s32 %v438, %v416
      %v453 = vadd.s32 %v438, %v417
      %v454 = vadd.s32 %v438, %v418
      %v455 = vadd.s32 %v438, %v419
      %v456 = vadd.s32 %v438, %v420
      %v457 = vadd.s32 %v438, %v421
      %v458 = vadd.s32 %v438, %v422
      %v459 = vadd.s32 %v438, %v423
      %v460 = vadd.s32 %v438, %v424
      %v461 = vadd.s32 %v438, %v425
      %v462 = vadd.s32 %v438, %v426
      %v463 = vadd.s32 %v438, %v427
      %v464 = vadd.s32 %v438, %v428
      %v465 = vadd.s32 %v438, %v429
      %v466 = vadd.s32 %v438, %v430
      %v467 = vadd.s32 %v438, %v431
      %v468 = vadd.s32 %v438, %v432
      %v469 = vadd.s32 %v438, %v433
      %v470 = vadd.s32 %v438, %v434
      %v471 = vmul.u32 %v439, 16
      %v472 = vmul.u32 %v440, 16
      %v473 = vmul.u32 %v441, 16
      %v474 = vmul.u32 %v442, 16
      %v475 = vmul.u32 %v443, 16
      %v476 = vmul.u32 %v444, 16
      %v477 = vmul.u32 %v445, 16
      %v478 = vmul.u32 %v446, 16
      %v479 = vmul.u32 %v447, 16
      %v480 = vmul.u32 %v448, 16
      %v481 = vmul.u32 %v449, 16
      %v482 = vmul.u32 %v450, 16
      %v483 = vmul.u32 %v451, 16
      %v484 = vmul.u32 %v452, 16
      %v485 = vmul.u32 %v453, 16
      %v486 = vmul.u32 %v454, 16
      %v487 = vmul.u32 %v455, 16
      %v488 = vmul.u32 %v456, 16
      %v489 = vmul.u32 %v457, 16
      %v490 = vmul.u32 %v458, 16
      %v491 = vmul.u32 %v459, 16
      %v492 = vmul.u32 %v460, 16
      %v493 = vmul.u32 %v461, 16
      %v494 = vmul.u32 %v462, 16
      %v495 = vmul.u32 %v463, 16
      %v496 = vmul.u32 %v464, 16
      %v497 = vmul.u32 %v465, 16
      %v498 = vmul.u32 %v466, 16
      %v499 = vmul.u32 %v467, 16
      %v500 = vmul.u32 %v468, 16
      %v501 = vmul.u32 %v469, 16
      %v502 = vmul.u32 %v470, 16
      %v503 = vadd.s32 %v471, %v436
      %v504 = vadd.s32 %v472, %v436
      %v505 = vadd.s32 %v473, %v436
      %v506 = vadd.s32 %v474, %v436
      %v507 = vadd.s32 %v475, %v436
      %v508 = vadd.s32 %v476, %v436
      %v509 = vadd.s32 %v477, %v436
      %v510 = vadd.s32 %v478, %v436
      %v511 = vadd.s32 %v479, %v436
      %v512 = vadd.s32 %v480, %v436
      %v513 = vadd.s32 %v481, %v436
      %v514 = vadd.s32 %v482, %v436
      %v515 = vadd.s32 %v483, %v436
      %v516 = vadd.s32 %v484, %v436
      %v517 = vadd.s32 %v485, %v436
      %v518 = vadd.s32 %v486, %v436
      %v519 = vadd.s32 %v487, %v436
      %v520 = vadd.s32 %v488, %v436
      %v521 = vadd.s32 %v489, %v436
      %v522 = vadd.s32 %v490, %v436
      %v523 = vadd.s32 %v491, %v436
      %v524 = vadd.s32 %v492, %v436
      %v525 = vadd.s32 %v493, %v436
      %v526 = vadd.s32 %v494, %v436
      %v527 = vadd.s32 %v495, %v436
      %v528 = vadd.s32 %v496, %v436
      %v529 = vadd.s32 %v497, %v436
      %v530 = vadd.s32 %v498, %v436
      %v531 = vadd.s32 %v499, %v436
      %v532 = vadd.s32 %v500, %v436
      %v533 = vadd.s32 %v501, %v436
      %v534 = vadd.s32 %v502, %v436
      %s535 = sld [smem:[#allocation2]]
      %v536 = vmul.u32 %v503, 2654435761
      %v537 = vmul.u32 %v504, 2654435761
      %v538 = vmul.u32 %v505, 2654435761
      %v539 = vmul.u32 %v506, 2654435761
      %v540 = vmul.u32 %v507, 2654435761
      %v541 = vmul.u32 %v508, 2654435761
      %v542 = vmul.u32 %v509, 2654435761
      %v543 = vmul.u32 %v510, 2654435761
      %v544 = vmul.u32 %v511, 2654435761
      %v545 = vmul.u32 %v512, 2654435761
      %v546 = vmul.u32 %v513, 2654435761
      %v547 = vmul.u32 %v514, 2654435761
      %v548 = vmul.u32 %v515, 2654435761
      %v549 = vmul.u32 %v516, 2654435761
      %v550 = vmul.u32 %v517, 2654435761
      %v551 = vmul.u32 %v518, 2654435761
      %v552 = vmul.u32 %v519, 2654435761
      %v553 = vmul.u32 %v520, 2654435761
      %v554 = vmul.u32 %v521, 2654435761
      %v555 = vmul.u32 %v522, 2654435761
      %v556 = vmul.u32 %v523, 2654435761
      %v557 = vmul.u32 %v524, 2654435761
      %v558 = vmul.u32 %v525, 2654435761
      %v559 = vmul.u32 %v526, 2654435761
      %v560 = vmul.u32 %v527, 2654435761
      %v561 = vmul.u32 %v528, 2654435761
      %v562 = vmul.u32 %v529, 2654435761
      %v563 = vmul.u32 %v530, 2654435761
      %v564 = vmul.u32 %v531, 2654435761
      %v565 = vmul.u32 %v532, 2654435761
      %v566 = vmul.u32 %v533, 2654435761
      %v567 = vmul.u32 %v534, 2654435761
      %s568 = smul.u32 %s535, 2246822519
      %v569 = vstv %s568
      %v570 = vadd.s32 %v536, %v569
      %v571 = vadd.s32 %v537, %v569
      %v572 = vadd.s32 %v538, %v569
      %v573 = vadd.s32 %v539, %v569
      %v574 = vadd.s32 %v540, %v569
      %v575 = vadd.s32 %v541, %v569
      %v576 = vadd.s32 %v542, %v569
      %v577 = vadd.s32 %v543, %v569
      %v578 = vadd.s32 %v544, %v569
      %v579 = vadd.s32 %v545, %v569
      %v580 = vadd.s32 %v546, %v569
      %v581 = vadd.s32 %v547, %v569
      %v582 = vadd.s32 %v548, %v569
      %v583 = vadd.s32 %v549, %v569
      %v584 = vadd.s32 %v550, %v569
      %v585 = vadd.s32 %v551, %v569
      %v586 = vadd.s32 %v552, %v569
      %v587 = vadd.s32 %v553, %v569
      %v588 = vadd.s32 %v554, %v569
      %v589 = vadd.s32 %v555, %v569
      %v590 = vadd.s32 %v556, %v569
      %v591 = vadd.s32 %v557, %v569
      %v592 = vadd.s32 %v558, %v569
      %v593 = vadd.s32 %v559, %v569
      %v594 = vadd.s32 %v560, %v569
      %v595 = vadd.s32 %v561, %v569
      %v596 = vadd.s32 %v562, %v569
      %v597 = vadd.s32 %v563, %v569
      %v598 = vadd.s32 %v564, %v569
      %v599 = vadd.s32 %v565, %v569
      %v600 = vadd.s32 %v566, %v569
      %v601 = vadd.s32 %v567, %v569
      %v602 = vshrl.u32 %v570, 16
      %v603 = vshrl.u32 %v571, 16
      %v604 = vshrl.u32 %v572, 16
      %v605 = vshrl.u32 %v573, 16
      %v606 = vshrl.u32 %v574, 16
      %v607 = vshrl.u32 %v575, 16
      %v608 = vshrl.u32 %v576, 16
      %v609 = vshrl.u32 %v577, 16
      %v610 = vshrl.u32 %v578, 16
      %v611 = vshrl.u32 %v579, 16
      %v612 = vshrl.u32 %v580, 16
      %v613 = vshrl.u32 %v581, 16
      %v614 = vshrl.u32 %v582, 16
      %v615 = vshrl.u32 %v583, 16
      %v616 = vshrl.u32 %v584, 16
      %v617 = vshrl.u32 %v585, 16
      %v618 = vshrl.u32 %v586, 16
      %v619 = vshrl.u32 %v587, 16
      %v620 = vshrl.u32 %v588, 16
      %v621 = vshrl.u32 %v589, 16
      %v622 = vshrl.u32 %v590, 16
      %v623 = vshrl.u32 %v591, 16
      %v624 = vshrl.u32 %v592, 16
      %v625 = vshrl.u32 %v593, 16
      %v626 = vshrl.u32 %v594, 16
      %v627 = vshrl.u32 %v595, 16
      %v628 = vshrl.u32 %v596, 16
      %v629 = vshrl.u32 %v597, 16
      %v630 = vshrl.u32 %v598, 16
      %v631 = vshrl.u32 %v599, 16
      %v632 = vshrl.u32 %v600, 16
      %v633 = vshrl.u32 %v601, 16
      %v634 = vxor.u32 %v570, %v602
      %v635 = vxor.u32 %v571, %v603
      %v636 = vxor.u32 %v572, %v604
      %v637 = vxor.u32 %v573, %v605
      %v638 = vxor.u32 %v574, %v606
      %v639 = vxor.u32 %v575, %v607
      %v640 = vxor.u32 %v576, %v608
      %v641 = vxor.u32 %v577, %v609
      %v642 = vxor.u32 %v578, %v610
      %v643 = vxor.u32 %v579, %v611
      %v644 = vxor.u32 %v580, %v612
      %v645 = vxor.u32 %v581, %v613
      %v646 = vxor.u32 %v582, %v614
      %v647 = vxor.u32 %v583, %v615
      %v648 = vxor.u32 %v584, %v616
      %v649 = vxor.u32 %v585, %v617
      %v650 = vxor.u32 %v586, %v618
      %v651 = vxor.u32 %v587, %v619
      %v652 = vxor.u32 %v588, %v620
      %v653 = vxor.u32 %v589, %v621
      %v654 = vxor.u32 %v590, %v622
      %v655 = vxor.u32 %v591, %v623
      %v656 = vxor.u32 %v592, %v624
      %v657 = vxor.u32 %v593, %v625
      %v658 = vxor.u32 %v594, %v626
      %v659 = vxor.u32 %v595, %v627
      %v660 = vxor.u32 %v596, %v628
      %v661 = vxor.u32 %v597, %v629
      %v662 = vxor.u32 %v598, %v630
      %v663 = vxor.u32 %v599, %v631
      %v664 = vxor.u32 %v600, %v632
      %v665 = vxor.u32 %v601, %v633
      %v666 = vmul.u32 %v634, 2146121005
      %v667 = vmul.u32 %v635, 2146121005
      %v668 = vmul.u32 %v636, 2146121005
      %v669 = vmul.u32 %v637, 2146121005
      %v670 = vmul.u32 %v638, 2146121005
      %v671 = vmul.u32 %v639, 2146121005
      %v672 = vmul.u32 %v640, 2146121005
      %v673 = vmul.u32 %v641, 2146121005
      %v674 = vmul.u32 %v642, 2146121005
      %v675 = vmul.u32 %v643, 2146121005
      %v676 = vmul.u32 %v644, 2146121005
      %v677 = vmul.u32 %v645, 2146121005
      %v678 = vmul.u32 %v646, 2146121005
      %v679 = vmul.u32 %v647, 2146121005
      %v680 = vmul.u32 %v648, 2146121005
      %v681 = vmul.u32 %v649, 2146121005
      %v682 = vmul.u32 %v650, 2146121005
      %v683 = vmul.u32 %v651, 2146121005
      %v684 = vmul.u32 %v652, 2146121005
      %v685 = vmul.u32 %v653, 2146121005
      %v686 = vmul.u32 %v654, 2146121005
      %v687 = vmul.u32 %v655, 2146121005
      %v688 = vmul.u32 %v656, 2146121005
      %v689 = vmul.u32 %v657, 2146121005
      %v690 = vmul.u32 %v658, 2146121005
      %v691 = vmul.u32 %v659, 2146121005
      %v692 = vmul.u32 %v660, 2146121005
      %v693 = vmul.u32 %v661, 2146121005
      %v694 = vmul.u32 %v662, 2146121005
      %v695 = vmul.u32 %v663, 2146121005
      %v696 = vmul.u32 %v664, 2146121005
      %v697 = vmul.u32 %v665, 2146121005
      %v698 = vshrl.u32 %v666, 15
      %v699 = vshrl.u32 %v667, 15
      %v700 = vshrl.u32 %v668, 15
      %v701 = vshrl.u32 %v669, 15
      %v702 = vshrl.u32 %v670, 15
      %v703 = vshrl.u32 %v671, 15
      %v704 = vshrl.u32 %v672, 15
      %v705 = vshrl.u32 %v673, 15
      %v706 = vshrl.u32 %v674, 15
      %v707 = vshrl.u32 %v675, 15
      %v708 = vshrl.u32 %v676, 15
      %v709 = vshrl.u32 %v677, 15
      %v710 = vshrl.u32 %v678, 15
      %v711 = vshrl.u32 %v679, 15
      %v712 = vshrl.u32 %v680, 15
      %v713 = vshrl.u32 %v681, 15
      %v714 = vshrl.u32 %v682, 15
      %v715 = vshrl.u32 %v683, 15
      %v716 = vshrl.u32 %v684, 15
      %v717 = vshrl.u32 %v685, 15
      %v718 = vshrl.u32 %v686, 15
      %v719 = vshrl.u32 %v687, 15
      %v720 = vshrl.u32 %v688, 15
      %v721 = vshrl.u32 %v689, 15
      %v722 = vshrl.u32 %v690, 15
      %v723 = vshrl.u32 %v691, 15
      %v724 = vshrl.u32 %v692, 15
      %v725 = vshrl.u32 %v693, 15
      %v726 = vshrl.u32 %v694, 15
      %v727 = vshrl.u32 %v695, 15
      %v728 = vshrl.u32 %v696, 15
      %v729 = vshrl.u32 %v697, 15
      %v730 = vxor.u32 %v666, %v698
      %v731 = vxor.u32 %v667, %v699
      %v732 = vxor.u32 %v668, %v700
      %v733 = vxor.u32 %v669, %v701
      %v734 = vxor.u32 %v670, %v702
      %v735 = vxor.u32 %v671, %v703
      %v736 = vxor.u32 %v672, %v704
      %v737 = vxor.u32 %v673, %v705
      %v738 = vxor.u32 %v674, %v706
      %v739 = vxor.u32 %v675, %v707
      %v740 = vxor.u32 %v676, %v708
      %v741 = vxor.u32 %v677, %v709
      %v742 = vxor.u32 %v678, %v710
      %v743 = vxor.u32 %v679, %v711
      %v744 = vxor.u32 %v680, %v712
      %v745 = vxor.u32 %v681, %v713
      %v746 = vxor.u32 %v682, %v714
      %v747 = vxor.u32 %v683, %v715
      %v748 = vxor.u32 %v684, %v716
      %v749 = vxor.u32 %v685, %v717
      %v750 = vxor.u32 %v686, %v718
      %v751 = vxor.u32 %v687, %v719
      %v752 = vxor.u32 %v688, %v720
      %v753 = vxor.u32 %v689, %v721
      %v754 = vxor.u32 %v690, %v722
      %v755 = vxor.u32 %v691, %v723
      %v756 = vxor.u32 %v692, %v724
      %v757 = vxor.u32 %v693, %v725
      %v758 = vxor.u32 %v694, %v726
      %v759 = vxor.u32 %v695, %v727
      %v760 = vxor.u32 %v696, %v728
      %v761 = vxor.u32 %v697, %v729
      %v762 = vmul.u32 %v730, 2221713035
      %v763 = vmul.u32 %v731, 2221713035
      %v764 = vmul.u32 %v732, 2221713035
      %v765 = vmul.u32 %v733, 2221713035
      %v766 = vmul.u32 %v734, 2221713035
      %v767 = vmul.u32 %v735, 2221713035
      %v768 = vmul.u32 %v736, 2221713035
      %v769 = vmul.u32 %v737, 2221713035
      %v770 = vmul.u32 %v738, 2221713035
      %v771 = vmul.u32 %v739, 2221713035
      %v772 = vmul.u32 %v740, 2221713035
      %v773 = vmul.u32 %v741, 2221713035
      %v774 = vmul.u32 %v742, 2221713035
      %v775 = vmul.u32 %v743, 2221713035
      %v776 = vmul.u32 %v744, 2221713035
      %v777 = vmul.u32 %v745, 2221713035
      %v778 = vmul.u32 %v746, 2221713035
      %v779 = vmul.u32 %v747, 2221713035
      %v780 = vmul.u32 %v748, 2221713035
      %v781 = vmul.u32 %v749, 2221713035
      %v782 = vmul.u32 %v750, 2221713035
      %v783 = vmul.u32 %v751, 2221713035
      %v784 = vmul.u32 %v752, 2221713035
      %v785 = vmul.u32 %v753, 2221713035
      %v786 = vmul.u32 %v754, 2221713035
      %v787 = vmul.u32 %v755, 2221713035
      %v788 = vmul.u32 %v756, 2221713035
      %v789 = vmul.u32 %v757, 2221713035
      %v790 = vmul.u32 %v758, 2221713035
      %v791 = vmul.u32 %v759, 2221713035
      %v792 = vmul.u32 %v760, 2221713035
      %v793 = vmul.u32 %v761, 2221713035
      %v794 = vshrl.u32 %v762, 16
      %v795 = vshrl.u32 %v763, 16
      %v796 = vshrl.u32 %v764, 16
      %v797 = vshrl.u32 %v765, 16
      %v798 = vshrl.u32 %v766, 16
      %v799 = vshrl.u32 %v767, 16
      %v800 = vshrl.u32 %v768, 16
      %v801 = vshrl.u32 %v769, 16
      %v802 = vshrl.u32 %v770, 16
      %v803 = vshrl.u32 %v771, 16
      %v804 = vshrl.u32 %v772, 16
      %v805 = vshrl.u32 %v773, 16
      %v806 = vshrl.u32 %v774, 16
      %v807 = vshrl.u32 %v775, 16
      %v808 = vshrl.u32 %v776, 16
      %v809 = vshrl.u32 %v777, 16
      %v810 = vshrl.u32 %v778, 16
      %v811 = vshrl.u32 %v779, 16
      %v812 = vshrl.u32 %v780, 16
      %v813 = vshrl.u32 %v781, 16
      %v814 = vshrl.u32 %v782, 16
      %v815 = vshrl.u32 %v783, 16
      %v816 = vshrl.u32 %v784, 16
      %v817 = vshrl.u32 %v785, 16
      %v818 = vshrl.u32 %v786, 16
      %v819 = vshrl.u32 %v787, 16
      %v820 = vshrl.u32 %v788, 16
      %v821 = vshrl.u32 %v789, 16
      %v822 = vshrl.u32 %v790, 16
      %v823 = vshrl.u32 %v791, 16
      %v824 = vshrl.u32 %v792, 16
      %v825 = vshrl.u32 %v793, 16
      %v826 = vxor.u32 %v762, %v794
      %v827 = vxor.u32 %v763, %v795
      %v828 = vxor.u32 %v764, %v796
      %v829 = vxor.u32 %v765, %v797
      %v830 = vxor.u32 %v766, %v798
      %v831 = vxor.u32 %v767, %v799
      %v832 = vxor.u32 %v768, %v800
      %v833 = vxor.u32 %v769, %v801
      %v834 = vxor.u32 %v770, %v802
      %v835 = vxor.u32 %v771, %v803
      %v836 = vxor.u32 %v772, %v804
      %v837 = vxor.u32 %v773, %v805
      %v838 = vxor.u32 %v774, %v806
      %v839 = vxor.u32 %v775, %v807
      %v840 = vxor.u32 %v776, %v808
      %v841 = vxor.u32 %v777, %v809
      %v842 = vxor.u32 %v778, %v810
      %v843 = vxor.u32 %v779, %v811
      %v844 = vxor.u32 %v780, %v812
      %v845 = vxor.u32 %v781, %v813
      %v846 = vxor.u32 %v782, %v814
      %v847 = vxor.u32 %v783, %v815
      %v848 = vxor.u32 %v784, %v816
      %v849 = vxor.u32 %v785, %v817
      %v850 = vxor.u32 %v786, %v818
      %v851 = vxor.u32 %v787, %v819
      %v852 = vxor.u32 %v788, %v820
      %v853 = vxor.u32 %v789, %v821
      %v854 = vxor.u32 %v790, %v822
      %v855 = vxor.u32 %v791, %v823
      %v856 = vxor.u32 %v792, %v824
      %v857 = vxor.u32 %v793, %v825
      %v858 = vand.u32 %v826, 1
      %v859 = vand.u32 %v827, 1
      %v860 = vand.u32 %v828, 1
      %v861 = vand.u32 %v829, 1
      %v862 = vand.u32 %v830, 1
      %v863 = vand.u32 %v831, 1
      %v864 = vand.u32 %v832, 1
      %v865 = vand.u32 %v833, 1
      %v866 = vand.u32 %v834, 1
      %v867 = vand.u32 %v835, 1
      %v868 = vand.u32 %v836, 1
      %v869 = vand.u32 %v837, 1
      %v870 = vand.u32 %v838, 1
      %v871 = vand.u32 %v839, 1
      %v872 = vand.u32 %v840, 1
      %v873 = vand.u32 %v841, 1
      %v874 = vand.u32 %v842, 1
      %v875 = vand.u32 %v843, 1
      %v876 = vand.u32 %v844, 1
      %v877 = vand.u32 %v845, 1
      %v878 = vand.u32 %v846, 1
      %v879 = vand.u32 %v847, 1
      %v880 = vand.u32 %v848, 1
      %v881 = vand.u32 %v849, 1
      %v882 = vand.u32 %v850, 1
      %v883 = vand.u32 %v851, 1
      %v884 = vand.u32 %v852, 1
      %v885 = vand.u32 %v853, 1
      %v886 = vand.u32 %v854, 1
      %v887 = vand.u32 %v855, 1
      %v888 = vand.u32 %v856, 1
      %v889 = vand.u32 %v857, 1
      %vm890 = vcmp.eq.s32.totalorder %v858, 0
      %vm891 = vcmp.eq.s32.totalorder %v859, 0
      %vm892 = vcmp.eq.s32.totalorder %v860, 0
      %vm893 = vcmp.eq.s32.totalorder %v861, 0
      %vm894 = vcmp.eq.s32.totalorder %v862, 0
      %vm895 = vcmp.eq.s32.totalorder %v863, 0
      %vm896 = vcmp.eq.s32.totalorder %v864, 0
      %vm897 = vcmp.eq.s32.totalorder %v865, 0
      %vm898 = vcmp.eq.s32.totalorder %v866, 0
      %vm899 = vcmp.eq.s32.totalorder %v867, 0
      %vm900 = vcmp.eq.s32.totalorder %v868, 0
      %vm901 = vcmp.eq.s32.totalorder %v869, 0
      %vm902 = vcmp.eq.s32.totalorder %v870, 0
      %vm903 = vcmp.eq.s32.totalorder %v871, 0
      %vm904 = vcmp.eq.s32.totalorder %v872, 0
      %vm905 = vcmp.eq.s32.totalorder %v873, 0
      %vm906 = vcmp.eq.s32.totalorder %v874, 0
      %vm907 = vcmp.eq.s32.totalorder %v875, 0
      %vm908 = vcmp.eq.s32.totalorder %v876, 0
      %vm909 = vcmp.eq.s32.totalorder %v877, 0
      %vm910 = vcmp.eq.s32.totalorder %v878, 0
      %vm911 = vcmp.eq.s32.totalorder %v879, 0
      %vm912 = vcmp.eq.s32.totalorder %v880, 0
      %vm913 = vcmp.eq.s32.totalorder %v881, 0
      %vm914 = vcmp.eq.s32.totalorder %v882, 0
      %vm915 = vcmp.eq.s32.totalorder %v883, 0
      %vm916 = vcmp.eq.s32.totalorder %v884, 0
      %vm917 = vcmp.eq.s32.totalorder %v885, 0
      %vm918 = vcmp.eq.s32.totalorder %v886, 0
      %vm919 = vcmp.eq.s32.totalorder %v887, 0
      %vm920 = vcmp.eq.s32.totalorder %v888, 0
      %vm921 = vcmp.eq.s32.totalorder %v889, 0
      %v922 = vadd.f32 %v370, %v370
      %v923 = vadd.f32 %v371, %v371
      %v924 = vadd.f32 %v372, %v372
      %v925 = vadd.f32 %v373, %v373
      %v926 = vadd.f32 %v374, %v374
      %v927 = vadd.f32 %v375, %v375
      %v928 = vadd.f32 %v376, %v376
      %v929 = vadd.f32 %v377, %v377
      %v930 = vadd.f32 %v378, %v378
      %v931 = vadd.f32 %v379, %v379
      %v932 = vadd.f32 %v380, %v380
      %v933 = vadd.f32 %v381, %v381
      %v934 = vadd.f32 %v382, %v382
      %v935 = vadd.f32 %v383, %v383
      %v936 = vadd.f32 %v384, %v384
      %v937 = vadd.f32 %v385, %v385
      %v938 = vadd.f32 %v386, %v386
      %v939 = vadd.f32 %v387, %v387
      %v940 = vadd.f32 %v388, %v388
      %v941 = vadd.f32 %v389, %v389
      %v942 = vadd.f32 %v390, %v390
      %v943 = vadd.f32 %v391, %v391
      %v944 = vadd.f32 %v392, %v392
      %v945 = vadd.f32 %v393, %v393
      %v946 = vadd.f32 %v394, %v394
      %v947 = vadd.f32 %v395, %v395
      %v948 = vadd.f32 %v396, %v396
      %v949 = vadd.f32 %v397, %v397
      %v950 = vadd.f32 %v398, %v398
      %v951 = vadd.f32 %v399, %v399
      %v952 = vadd.f32 %v400, %v400
      %v953 = vadd.f32 %v401, %v401
      %v954 = vsel %vm890, %v922, 0.0
      %v955 = vsel %vm891, %v923, 0.0
      %v956 = vsel %vm892, %v924, 0.0
      %v957 = vsel %vm893, %v925, 0.0
      %v958 = vsel %vm894, %v926, 0.0
      %v959 = vsel %vm895, %v927, 0.0
      %v960 = vsel %vm896, %v928, 0.0
      %v961 = vsel %vm897, %v929, 0.0
      %v962 = vsel %vm898, %v930, 0.0
      %v963 = vsel %vm899, %v931, 0.0
      %v964 = vsel %vm900, %v932, 0.0
      %v965 = vsel %vm901, %v933, 0.0
      %v966 = vsel %vm902, %v934, 0.0
      %v967 = vsel %vm903, %v935, 0.0
      %v968 = vsel %vm904, %v936, 0.0
      %v969 = vsel %vm905, %v937, 0.0
      %v970 = vsel %vm906, %v938, 0.0
      %v971 = vsel %vm907, %v939, 0.0
      %v972 = vsel %vm908, %v940, 0.0
      %v973 = vsel %vm909, %v941, 0.0
      %v974 = vsel %vm910, %v942, 0.0
      %v975 = vsel %vm911, %v943, 0.0
      %v976 = vsel %vm912, %v944, 0.0
      %v977 = vsel %vm913, %v945, 0.0
      %v978 = vsel %vm914, %v946, 0.0
      %v979 = vsel %vm915, %v947, 0.0
      %v980 = vsel %vm916, %v948, 0.0
      %v981 = vsel %vm917, %v949, 0.0
      %v982 = vsel %vm918, %v950, 0.0
      %v983 = vsel %vm919, %v951, 0.0
      %v984 = vsel %vm920, %v952, 0.0
      %v985 = vsel %vm921, %v953, 0.0
      %v986 = vpack.c.bf16 %v954, %v954
      %v987 = vpack.c.bf16 %v955, %v955
      %v988 = vpack.c.bf16 %v956, %v956
      %v989 = vpack.c.bf16 %v957, %v957
      %v990 = vpack.c.bf16 %v958, %v958
      %v991 = vpack.c.bf16 %v959, %v959
      %v992 = vpack.c.bf16 %v960, %v960
      %v993 = vpack.c.bf16 %v961, %v961
      %v994 = vpack.c.bf16 %v962, %v962
      %v995 = vpack.c.bf16 %v963, %v963
      %v996 = vpack.c.bf16 %v964, %v964
      %v997 = vpack.c.bf16 %v965, %v965
      %v998 = vpack.c.bf16 %v966, %v966
      %v999 = vpack.c.bf16 %v967, %v967
      %v1000 = vpack.c.bf16 %v968, %v968
      %v1001 = vpack.c.bf16 %v969, %v969
      %v1002 = vpack.c.bf16 %v970, %v970
      %v1003 = vpack.c.bf16 %v971, %v971
      %v1004 = vpack.c.bf16 %v972, %v972
      %v1005 = vpack.c.bf16 %v973, %v973
      %v1006 = vpack.c.bf16 %v974, %v974
      %v1007 = vpack.c.bf16 %v975, %v975
      %v1008 = vpack.c.bf16 %v976, %v976
      %v1009 = vpack.c.bf16 %v977, %v977
      %v1010 = vpack.c.bf16 %v978, %v978
      %v1011 = vpack.c.bf16 %v979, %v979
      %v1012 = vpack.c.bf16 %v980, %v980
      %v1013 = vpack.c.bf16 %v981, %v981
      %v1014 = vpack.c.bf16 %v982, %v982
      %v1015 = vpack.c.bf16 %v983, %v983
      %v1016 = vpack.c.bf16 %v984, %v984
      %v1017 = vpack.c.bf16 %v985, %v985
      %vm1018 = vcmask 125952
      %1019 = vst.msk [vmem:[%s200] sm:$0xf] %vm1018, %v986
      %1020 = vst.msk [vmem:[%s200 + $0x4] sm:$0xf] %vm1018, %v987
      %1021 = vst.msk [vmem:[%s200 + $0x8] sm:$0xf] %vm1018, %v988
      %1022 = vst.msk [vmem:[%s200 + $0xc] sm:$0xf] %vm1018, %v989
      %1023 = vst.msk [vmem:[%s200 + $0x10] sm:$0xf] %vm1018, %v990
      %1024 = vst.msk [vmem:[%s200 + $0x14] sm:$0xf] %vm1018, %v991
      %1025 = vst.msk [vmem:[%s200 + $0x18] sm:$0xf] %vm1018, %v992
      %1026 = vst.msk [vmem:[%s200 + $0x1c] sm:$0xf] %vm1018, %v993
      %1027 = vst.msk [vmem:[%s200 + $0x20] sm:$0xf] %vm1018, %v994
      %1028 = vst.msk [vmem:[%s200 + $0x24] sm:$0xf] %vm1018, %v995
      %1029 = vst.msk [vmem:[%s200 + $0x28] sm:$0xf] %vm1018, %v996
      %1030 = vst.msk [vmem:[%s200 + $0x2c] sm:$0xf] %vm1018, %v997
      %1031 = vst.msk [vmem:[%s200 + $0x30] sm:$0xf] %vm1018, %v998
      %1032 = vst.msk [vmem:[%s200 + $0x34] sm:$0xf] %vm1018, %v999
      %1033 = vst.msk [vmem:[%s200 + $0x38] sm:$0xf] %vm1018, %v1000
      %1034 = vst.msk [vmem:[%s200 + $0x3c] sm:$0xf] %vm1018, %v1001
      %1035 = vst.msk [vmem:[%s200 + $0x40] sm:$0xf] %vm1018, %v1002
      %1036 = vst.msk [vmem:[%s200 + $0x44] sm:$0xf] %vm1018, %v1003
      %1037 = vst.msk [vmem:[%s200 + $0x48] sm:$0xf] %vm1018, %v1004
      %1038 = vst.msk [vmem:[%s200 + $0x4c] sm:$0xf] %vm1018, %v1005
      %1039 = vst.msk [vmem:[%s200 + $0x50] sm:$0xf] %vm1018, %v1006
      %1040 = vst.msk [vmem:[%s200 + $0x54] sm:$0xf] %vm1018, %v1007
      %1041 = vst.msk [vmem:[%s200 + $0x58] sm:$0xf] %vm1018, %v1008
      %1042 = vst.msk [vmem:[%s200 + $0x5c] sm:$0xf] %vm1018, %v1009
      %1043 = vst.msk [vmem:[%s200 + $0x60] sm:$0xf] %vm1018, %v1010
      %1044 = vst.msk [vmem:[%s200 + $0x64] sm:$0xf] %vm1018, %v1011
      %1045 = vst.msk [vmem:[%s200 + $0x68] sm:$0xf] %vm1018, %v1012
      %1046 = vst.msk [vmem:[%s200 + $0x6c] sm:$0xf] %vm1018, %v1013
      %1047 = vst.msk [vmem:[%s200 + $0x70] sm:$0xf] %vm1018, %v1014
      %1048 = vst.msk [vmem:[%s200 + $0x74] sm:$0xf] %vm1018, %v1015
      %1049 = vst.msk [vmem:[%s200 + $0x78] sm:$0xf] %vm1018, %v1016
      %1050 = vst.msk [vmem:[%s200 + $0x7c] sm:$0xf] %vm1018, %v1017
      %s1051 = smul.u32 32, %s16
      %p1052 = scmp.lt.s32.totalorder %s1051, 63
      %s1053 = scalar_select %p1052, %s1051, 63
      %s1054 = smul.addr %s1053, 4
      %s1055 = scalar_lea.vmem %s4, %s1054
      // Predicated region
      $region37: #{inverse_dcgan_forward.8} parent=35 // pred_check
        %p1056 = pneg %p123
      $region38: #{inverse_dcgan_forward.8} parent=35 // pred_check_branch
        %1058 = sbr.rel (%p1056) target = $region40
      $region39: #{inverse_dcgan_forward.8} parent=35 // pred_region
        %s1059 = smul.u32 32, %s16
      $region40: #{inverse_dcgan_forward.8} parent=35 // pred_fallthru
        _
    $region36: #{inverse_dcgan_forward.8} parent=5 // pred_fallthru
      _
    %p1060 = scmp.le.s32.totalorder 2, %s11
    // Predicated region
    $region41: #{inverse_dcgan_forward.8} parent=5 // pred_check
      %p1061 = pneg %p1060
    $region42: #{inverse_dcgan_forward.8} parent=5 // pred_check_branch
      %1063 = sbr.rel (%p1061) target = $region44
    $region43: #{inverse_dcgan_forward.8} parent=5 // pred_region
      %s1064 = ssub.s32 %s11, 2
      // Predicated region
      $region45: #{inverse_dcgan_forward.8} parent=43 // pred_check
        %p1065 = pneg %p129
      $region46: #{inverse_dcgan_forward.8} parent=43 // pred_check_branch
        %1067 = sbr.rel (%p1065) target = $region48
      $region47: #{inverse_dcgan_forward.8} parent=43 // pred_region
        %s1068 = smul.u32 32, %s17
        %p1069 = scmp.lt.s32.totalorder %s1068, 63
        %s1070 = scalar_select %p1069, %s1068, 63
        %s1071 = smul.addr %s1070, 4
        %s1072 = scalar_lea.vmem %s4, %s1071
      $region48: #{inverse_dcgan_forward.8} parent=43 // pred_fallthru
        _
    $region44: #{inverse_dcgan_forward.8} parent=5 // pred_fallthru
      _
  $region6: #{inverse_dcgan_forward.8} parent=0 // loop_footer
    %s15 = sadd.s32 1, %s11
  $region7: #{inverse_dcgan_forward.8} parent=0 // loop_footer_branch
    %10 = sbr.rel target = $region3
  $region8: #{inverse_dcgan_forward.8} parent=0 // loop_exit
    _

// kernel: inverse_dcgan_forward.9
$region0: #{inverse_dcgan_forward.9}
  #allocation0 [shape = 'u32[]', space=smem, size = 0x4, offset = 0x4, fixed_abs, tag = 'smem constant byte address 0x4 - core index']
  #allocation1 [shape = 'u32[72,128]{1,0:T(1,128)}', space=vmem, size = 0x9000, scoped, tag = 'internal scratch']
  %s0 = inlined_call_operand.vmem [shape: bf16[104,256], index: 0, kind: input, shape index: {}]
  %s1 = inlined_call_operand.vmem [shape: bf16[256,32], index: 1, kind: input, shape index: {}]
  %s2 = inlined_call_operand.vmem [shape: f32[104,32], index: 2, kind: output, shape index: {0}]
  %s3 = inlined_call_operand.vmem [shape: f32[1,8,32], index: 3, kind: output, shape index: {1}]
  %4 = xla_tuple %s2, %s3
  %s5 = sld [smem:[#allocation0]]
  $region26: #{inverse_dcgan_forward.9} parent=0
    _
  %s7 = ssub.s32 1, %s5
  %s8 = scalar_select 0, %s7, %s5
  // Predicated region
  $region2: #{inverse_dcgan_forward.9} parent=0 // pred_check
    _
  $region3: #{inverse_dcgan_forward.9} parent=0 // pred_check_branch
    %10 = sbr.rel (0) target = $region5
  $region4: #{inverse_dcgan_forward.9} parent=0 // pred_region
    _
  $region5: #{inverse_dcgan_forward.9} parent=0 // pred_fallthru
    _
  // Predicated region
  $region6: #{inverse_dcgan_forward.9} parent=0 // pred_check
    _
  $region7: #{inverse_dcgan_forward.9} parent=0 // pred_check_branch
    %12 = sbr.rel (0) target = $region9
  $region8: #{inverse_dcgan_forward.9} parent=0 // pred_region
    _
  $region9: #{inverse_dcgan_forward.9} parent=0 // pred_fallthru
    _
  %v13 = vld [vmem:[%s0] sm:$0xff]
  %v14 = vld [vmem:[%s0 + $0x8] sm:$0xff]
  %v15 = vld [vmem:[%s0 + $0x10] sm:$0xff]
  %v16 = vld [vmem:[%s0 + $0x18] sm:$0xff]
  %v17 = vld [vmem:[%s0 + $0x20] sm:$0xff]
  %v18 = vld [vmem:[%s0 + $0x28] sm:$0xff]
  %v19 = vld [vmem:[%s0 + $0x30] sm:$0xff]
  %v20 = vld [vmem:[%s0 + $0x38] sm:$0xff]
  %v21 = vld [vmem:[%s0 + $0x40] sm:$0xff]
  %v22 = vld [vmem:[%s0 + $0x48] sm:$0xff]
  %v23 = vld [vmem:[%s0 + $0x50] sm:$0xff]
  %v24 = vld [vmem:[%s0 + $0x58] sm:$0xff]
  %v25 = vld [vmem:[%s0 + $0x60] sm:$0xff]
  %v26 = vld [vmem:[%s1] sm:$0xf]
  %v27 = vld [vmem:[%s1 + $0x4] sm:$0xf]
  %v28 = vld [vmem:[%s1 + $0x8] sm:$0xf]
  %v29 = vld [vmem:[%s1 + $0xc] sm:$0xf]
  %v30 = vld [vmem:[%s1 + $0x10] sm:$0xf]
  %v31 = vld [vmem:[%s1 + $0x14] sm:$0xf]
  %v32 = vld [vmem:[%s1 + $0x18] sm:$0xf]
  %v33 = vld [vmem:[%s1 + $0x1c] sm:$0xf]
  %v34 = vld [vmem:[%s1 + $0x20] sm:$0xf]
  %v35 = vld [vmem:[%s1 + $0x24] sm:$0xf]
  %v36 = vld [vmem:[%s1 + $0x28] sm:$0xf]
  %v37 = vld [vmem:[%s1 + $0x2c] sm:$0xf]
  %v38 = vld [vmem:[%s1 + $0x30] sm:$0xf]
  %v39 = vld [vmem:[%s1 + $0x34] sm:$0xf]
  %v40 = vld [vmem:[%s1 + $0x38] sm:$0xf]
  %v41 = vld [vmem:[%s1 + $0x3c] sm:$0xf]
  %v42 = vld [vmem:[%s1 + $0x40] sm:$0xf]
  %v43 = vld [vmem:[%s1 + $0x44] sm:$0xf]
  %v44 = vld [vmem:[%s1 + $0x48] sm:$0xf]
  %v45 = vld [vmem:[%s1 + $0x4c] sm:$0xf]
  %v46 = vld [vmem:[%s1 + $0x50] sm:$0xf]
  %v47 = vld [vmem:[%s1 + $0x54] sm:$0xf]
  %v48 = vld [vmem:[%s1 + $0x58] sm:$0xf]
  %v49 = vld [vmem:[%s1 + $0x5c] sm:$0xf]
  %v50 = vld [vmem:[%s1 + $0x60] sm:$0xf]
  %v51 = vld [vmem:[%s1 + $0x64] sm:$0xf]
  %v52 = vld [vmem:[%s1 + $0x68] sm:$0xf]
  %v53 = vld [vmem:[%s1 + $0x6c] sm:$0xf]
  %v54 = vld [vmem:[%s1 + $0x70] sm:$0xf]
  %v55 = vld [vmem:[%s1 + $0x74] sm:$0xf]
  %v56 = vld [vmem:[%s1 + $0x78] sm:$0xf]
  %v57 = vld [vmem:[%s1 + $0x7c] sm:$0xf]
  %v71 = vunpack.c.l.b16 %v13
  %v72 = vunpack.c.h.b16 %v13
  %v73 = vunpack.c.l.b16 %v14
  %v74 = vunpack.c.h.b16 %v14
  %v75 = vunpack.c.l.b16 %v15
  %v76 = vunpack.c.h.b16 %v15
  %v77 = vunpack.c.l.b16 %v16
  %v78 = vunpack.c.h.b16 %v16
  %v79 = vunpack.c.l.b16 %v17
  %v80 = vunpack.c.h.b16 %v17
  %v81 = vunpack.c.l.b16 %v18
  %v82 = vunpack.c.h.b16 %v18
  %v83 = vunpack.c.l.b16 %v19
  %v84 = vunpack.c.h.b16 %v19
  %v85 = vunpack.c.l.b16 %v20
  %v86 = vunpack.c.h.b16 %v20
  %v87 = vunpack.c.l.b16 %v21
  %v88 = vunpack.c.h.b16 %v21
  %v89 = vunpack.c.l.b16 %v22
  %v90 = vunpack.c.h.b16 %v22
  %v91 = vunpack.c.l.b16 %v23
  %v92 = vunpack.c.h.b16 %v23
  %v93 = vunpack.c.l.b16 %v24
  %v94 = vunpack.c.h.b16 %v24
  %v95 = vunpack.c.l.b16 %v25
  %v96 = vunpack.c.h.b16 %v25
  %v97 = vpack.c.b16 %v73, %v71
  %v98 = vpack.c.b16 %v74, %v72
  %v99 = vpack.c.b16 %v77, %v75
  %v100 = vpack.c.b16 %v78, %v76
  %v101 = vpack.c.b16 %v81, %v79
  %v102 = vpack.c.b16 %v82, %v80
  %v103 = vpack.c.b16 %v85, %v83
  %v104 = vpack.c.b16 %v86, %v84
  %v105 = vpack.c.b16 %v89, %v87
  %v106 = vpack.c.b16 %v90, %v88
  %v107 = vpack.c.b16 %v93, %v91
  %v108 = vpack.c.b16 %v94, %v92
  %v109 = vpack.c.b16 %v95, %v95
  %v110 = vpack.c.b16 %v96, %v96
  %v157 = vunpack.c.l.b16 %v26
  %v158 = vunpack.c.l.b16 %v27
  %v159 = vunpack.c.l.b16 %v28
  %v160 = vunpack.c.l.b16 %v29
  %v161 = vunpack.c.l.b16 %v30
  %v162 = vunpack.c.l.b16 %v31
  %v163 = vunpack.c.l.b16 %v32
  %v164 = vunpack.c.l.b16 %v33
  %v165 = vunpack.c.l.b16 %v34
  %v166 = vunpack.c.l.b16 %v35
  %v167 = vunpack.c.l.b16 %v36
  %v168 = vunpack.c.l.b16 %v37
  %v169 = vunpack.c.l.b16 %v38
  %v170 = vunpack.c.l.b16 %v39
  %v171 = vunpack.c.l.b16 %v40
  %v172 = vunpack.c.l.b16 %v41
  %v173 = vunpack.c.l.b16 %v42
  %v174 = vunpack.c.l.b16 %v43
  %v175 = vunpack.c.l.b16 %v44
  %v176 = vunpack.c.l.b16 %v45
  %v177 = vunpack.c.l.b16 %v46
  %v178 = vunpack.c.l.b16 %v47
  %v179 = vunpack.c.l.b16 %v48
  %v180 = vunpack.c.l.b16 %v49
  %v181 = vunpack.c.l.b16 %v50
  %v182 = vunpack.c.l.b16 %v51
  %v183 = vunpack.c.l.b16 %v52
  %v184 = vunpack.c.l.b16 %v53
  %v185 = vunpack.c.l.b16 %v54
  %v186 = vunpack.c.l.b16 %v55
  %v187 = vunpack.c.l.b16 %v56
  %v188 = vunpack.c.l.b16 %v57
  %v189 = vpack.c.b16 %v158, %v157
  %v190 = vpack.c.b16 %v160, %v159
  %v191 = vpack.c.b16 %v162, %v161
  %v192 = vpack.c.b16 %v164, %v163
  %v193 = vpack.c.b16 %v166, %v165
  %v194 = vpack.c.b16 %v168, %v167
  %v195 = vpack.c.b16 %v170, %v169
  %v196 = vpack.c.b16 %v172, %v171
  %v197 = vpack.c.b16 %v174, %v173
  %v198 = vpack.c.b16 %v176, %v175
  %v199 = vpack.c.b16 %v178, %v177
  %v200 = vpack.c.b16 %v180, %v179
  %v201 = vpack.c.b16 %v182, %v181
  %v202 = vpack.c.b16 %v184, %v183
  %v203 = vpack.c.b16 %v186, %v185
  %v204 = vpack.c.b16 %v188, %v187
  %221 = vmatpush.bf16.msra.mxu0 %v196
  %222 = vmatpush.bf16.msra.mxu0 %v195
  %223 = vmatpush.bf16.msra.mxu0 %v194
  %224 = vmatpush.bf16.msra.mxu0 %v193
  %225 = vmatpush.bf16.msra.mxu0 %v192
  %226 = vmatpush.bf16.msra.mxu0 %v191
  %227 = vmatpush.bf16.msra.mxu0 %v190
  %228 = vmatpush.bf16.msra.mxu0 %v189
  %229 = vmatmul.bf16.gmra.mxu0 %v97
  %v230 = vpop.f32.mrf.mxu0
  %v231 = vadd.f32 0.0, %v230
  %v232 = vpop.f32.mrf.mxu0
  %v233 = vadd.f32 0.0, %v232
  %234 = vmatmul.bf16.gmra.mxu0 %v99
  %v235 = vpop.f32.mrf.mxu0
  %v236 = vadd.f32 0.0, %v235
  %v237 = vpop.f32.mrf.mxu0
  %v238 = vadd.f32 0.0, %v237
  %239 = vmatmul.bf16.gmra.mxu0 %v101
  %v240 = vpop.f32.mrf.mxu0
  %v241 = vadd.f32 0.0, %v240
  %v242 = vpop.f32.mrf.mxu0
  %v243 = vadd.f32 0.0, %v242
  %244 = vmatmul.bf16.gmra.mxu0 %v103
  %v245 = vpop.f32.mrf.mxu0
  %v246 = vadd.f32 0.0, %v245
  %v247 = vpop.f32.mrf.mxu0
  %v248 = vadd.f32 0.0, %v247
  %249 = vmatmul.bf16.gmra.mxu0 %v105
  %v250 = vpop.f32.mrf.mxu0
  %v251 = vadd.f32 0.0, %v250
  %v252 = vpop.f32.mrf.mxu0
  %v253 = vadd.f32 0.0, %v252
  %254 = vmatmul.bf16.gmra.mxu0 %v107
  %v255 = vpop.f32.mrf.mxu0
  %v256 = vadd.f32 0.0, %v255
  %v257 = vpop.f32.mrf.mxu0
  %v258 = vadd.f32 0.0, %v257
  %259 = vmatmul.bf16.gmra.mxu0 %v109
  %v260 = vpop.f32.mrf.mxu0
  %v261 = vadd.f32 0.0, %v260
  %v262 = vpop.f32.mrf.mxu0
  %263 = vdwg.mxu0
  %264 = vmatpush.bf16.msra.mxu0 %v204
  %265 = vmatpush.bf16.msra.mxu0 %v203
  %266 = vmatpush.bf16.msra.mxu0 %v202
  %267 = vmatpush.bf16.msra.mxu0 %v201
  %268 = vmatpush.bf16.msra.mxu0 %v200
  %269 = vmatpush.bf16.msra.mxu0 %v199
  %270 = vmatpush.bf16.msra.mxu0 %v198
  %271 = vmatpush.bf16.msra.mxu0 %v197
  %272 = vmatmul.bf16.gmra.mxu0 %v98
  %v273 = vpop.f32.mrf.mxu0
  %v274 = vadd.f32 %v231, %v273
  %v275 = vpop.f32.mrf.mxu0
  %v276 = vadd.f32 %v233, %v275
  %277 = vmatmul.bf16.gmra.mxu0 %v100
  %v278 = vpop.f32.mrf.mxu0
  %v279 = vadd.f32 %v236, %v278
  %v280 = vpop.f32.mrf.mxu0
  %v281 = vadd.f32 %v238, %v280
  %282 = vmatmul.bf16.gmra.mxu0 %v102
  %v283 = vpop.f32.mrf.mxu0
  %v284 = vadd.f32 %v241, %v283
  %v285 = vpop.f32.mrf.mxu0
  %v286 = vadd.f32 %v243, %v285
  %287 = vmatmul.bf16.gmra.mxu0 %v104
  %v288 = vpop.f32.mrf.mxu0
  %v289 = vadd.f32 %v246, %v288
  %v290 = vpop.f32.mrf.mxu0
  %v291 = vadd.f32 %v248, %v290
  %292 = vmatmul.bf16.gmra.mxu0 %v106
  %v293 = vpop.f32.mrf.mxu0
  %v294 = vadd.f32 %v251, %v293
  %v295 = vpop.f32.mrf.mxu0
  %v296 = vadd.f32 %v253, %v295
  %297 = vmatmul.bf16.gmra.mxu0 %v108
  %v298 = vpop.f32.mrf.mxu0
  %v299 = vadd.f32 %v256, %v298
  %v300 = vpop.f32.mrf.mxu0
  %v301 = vadd.f32 %v258, %v300
  %302 = vmatmul.bf16.gmra.mxu0 %v110
  %v303 = vpop.f32.mrf.mxu0
  %v304 = vadd.f32 %v261, %v303
  %v305 = vpop.f32.mrf.mxu0
  %306 = vdwg.mxu0
  %vm307 = vcmask 261120
  %308 = vst.msk [vmem:[%s2] sm:$0xff] %vm307, %v274
  %309 = vst.msk [vmem:[%s2 + $0x8] sm:$0xff] %vm307, %v276
  %310 = vst.msk [vmem:[%s2 + $0x10] sm:$0xff] %vm307, %v279
  %311 = vst.msk [vmem:[%s2 + $0x18] sm:$0xff] %vm307, %v281
  %312 = vst.msk [vmem:[%s2 + $0x20] sm:$0xff] %vm307, %v284
  %313 = vst.msk [vmem:[%s2 + $0x28] sm:$0xff] %vm307, %v286
  %314 = vst.msk [vmem:[%s2 + $0x30] sm:$0xff] %vm307, %v289
  %315 = vst.msk [vmem:[%s2 + $0x38] sm:$0xff] %vm307, %v291
  %316 = vst.msk [vmem:[%s2 + $0x40] sm:$0xff] %vm307, %v294
  %317 = vst.msk [vmem:[%s2 + $0x48] sm:$0xff] %vm307, %v296
  %318 = vst.msk [vmem:[%s2 + $0x50] sm:$0xff] %vm307, %v299
  %319 = vst.msk [vmem:[%s2 + $0x58] sm:$0xff] %vm307, %v301
  %320 = vst.msk [vmem:[%s2 + $0x60] sm:$0xff] %vm307, %v304
  %v321 = vsel %vm307, %v274, 0.0
  %v322 = vsel %vm307, %v276, 0.0
  %v323 = vadd.f32 %v321, %v322
  %v324 = vsel %vm307, %v279, 0.0
  %v325 = vadd.f32 %v323, %v324
  %v326 = vsel %vm307, %v281, 0.0
  %v327 = vadd.f32 %v325, %v326
  %v328 = vsel %vm307, %v284, 0.0
  %v329 = vadd.f32 %v327, %v328
  %v330 = vsel %vm307, %v286, 0.0
  %v331 = vadd.f32 %v329, %v330
  %v332 = vsel %vm307, %v289, 0.0
  %v333 = vadd.f32 %v331, %v332
  %v334 = vsel %vm307, %v291, 0.0
  %v335 = vadd.f32 %v333, %v334
  %v336 = vsel %vm307, %v294, 0.0
  %v337 = vadd.f32 %v335, %v336
  %v338 = vsel %vm307, %v296, 0.0
  %v339 = vadd.f32 %v337, %v338
  %v340 = vsel %vm307, %v299, 0.0
  %v341 = vadd.f32 %v339, %v340
  %v342 = vsel %vm307, %v301, 0.0
  %v343 = vadd.f32 %v341, %v342
  %v344 = vsel %vm307, %v304, 0.0
  %v345 = vadd.f32 %v343, %v344
  %v346 = vrot.slane %v345, 4
  %v347 = vadd.f32 %v345, %v346
  %v348 = vrot.slane %v347, 2
  %v349 = vadd.f32 %v347, %v348
  %v350 = vrot.slane %v349, 1
  %v351 = vadd.f32 %v349, %v350
  %v352 = vmul.f32 %v274, %v274
  %v353 = vmul.f32 %v276, %v276
  %v354 = vmul.f32 %v279, %v279
  %v355 = vmul.f32 %v281, %v281
  %v356 = vmul.f32 %v284, %v284
  %v357 = vmul.f32 %v286, %v286
  %v358 = vmul.f32 %v289, %v289
  %v359 = vmul.f32 %v291, %v291
  %v360 = vmul.f32 %v294, %v294
  %v361 = vmul.f32 %v296, %v296
  %v362 = vmul.f32 %v299, %v299
  %v363 = vmul.f32 %v301, %v301
  %v364 = vmul.f32 %v304, %v304
  %v365 = vsel %vm307, %v352, 0.0
  %v366 = vsel %vm307, %v353, 0.0
  %v367 = vadd.f32 %v365, %v366
  %v368 = vsel %vm307, %v354, 0.0
  %v369 = vadd.f32 %v367, %v368
  %v370 = vsel %vm307, %v355, 0.0
  %v371 = vadd.f32 %v369, %v370
  %v372 = vsel %vm307, %v356, 0.0
  %v373 = vadd.f32 %v371, %v372
  %v374 = vsel %vm307, %v357, 0.0
  %v375 = vadd.f32 %v373, %v374
  %v376 = vsel %vm307, %v358, 0.0
  %v377 = vadd.f32 %v375, %v376
  %v378 = vsel %vm307, %v359, 0.0
  %v379 = vadd.f32 %v377, %v378
  %v380 = vsel %vm307, %v360, 0.0
  %v381 = vadd.f32 %v379, %v380
  %v382 = vsel %vm307, %v361, 0.0
  %v383 = vadd.f32 %v381, %v382
  %v384 = vsel %vm307, %v362, 0.0
  %v385 = vadd.f32 %v383, %v384
  %v386 = vsel %vm307, %v363, 0.0
  %v387 = vadd.f32 %v385, %v386
  %v388 = vsel %vm307, %v364, 0.0
  %v389 = vadd.f32 %v387, %v388
  %v390 = vrot.slane %v389, 4
  %v391 = vadd.f32 %v389, %v390
  %v392 = vrot.slane %v391, 2
  %v393 = vadd.f32 %v391, %v392
  %v394 = vrot.slane %v393, 1
  %v395 = vadd.f32 %v393, %v394
  %v396 = vlaneseq
  %v397 = vshrl.u32 %v396, 7
  %vm398 = vcmp.eq.s32.totalorder %v397, 0
  %vm399 = vcmp.eq.s32.totalorder %v397, 1
  %v400 = vsel %vm399, %v395, 0.0
  %v401 = vsel %vm398, %v351, %v400
  %402 = vst.msk [vmem:[%s3] sm:$0xff] %vm307, %v401
  // Predicated region
  $region10: #{inverse_dcgan_forward.9} parent=0 // pred_check
    _
  $region11: #{inverse_dcgan_forward.9} parent=0 // pred_check_branch
    %404 = sbr.rel (0) target = $region13
  $region12: #{inverse_dcgan_forward.9} parent=0 // pred_region
    _
  $region13: #{inverse_dcgan_forward.9} parent=0 // pred_fallthru
    _
  // Predicated region
  $region14: #{inverse_dcgan_forward.9} parent=0 // pred_check
    _
  $region15: #{inverse_dcgan_forward.9} parent=0 // pred_check_branch
    %406 = sbr.rel (0) target = $region17
  $region16: #{inverse_dcgan_forward.9} parent=0 // pred_region
    _
  $region17: #{inverse_dcgan_forward.9} parent=0 // pred_fallthru
    _
  // Predicated region
  $region18: #{inverse_dcgan_forward.9} parent=0 // pred_check
    _
  $region19: #{inverse_dcgan_forward.9} parent=0 // pred_check_branch
    %408 = sbr.rel (0) target = $region21
  $region20: #{inverse_dcgan_forward.9} parent=0 // pred_region
    _
  $region21: #{inverse_dcgan_forward.9} parent=0 // pred_fallthru
    _
  // Predicated region
  $region22: #{inverse_dcgan_forward.9} parent=0 // pred_check
    _
  $region23: #{inverse_dcgan_forward.9} parent=0 // pred_check_branch
    %410 = sbr.rel (0) target = $region25
  $region24: #{inverse_dcgan_forward.9} parent=0 // pred_region
    _
  $region25: #{inverse_dcgan_forward.9} parent=0 // pred_fallthru
    _

// kernel: inverse_dcgan_forward.10
$region0: #{inverse_dcgan_forward.10}
  #allocation0 [shape = 'u32[]', space=smem, size = 0x4, offset = 0x4, fixed_abs, tag = 'smem constant byte address 0x4 - core index']
  #allocation1 [shape = 'u32[72,128]{1,0:T(1,128)}', space=vmem, size = 0x9000, scoped, tag = 'internal scratch']
  #allocation2 [shape = 's32[1]{0:T(128)S(6)}', space=smem, size = 0x200, scoped, tag = 'scoped memory for inverse_dcgan_forward.10']
  %s0 = inlined_call_operand.<no memory space> [shape: s32[1], index: 0, kind: input, shape index: {}]
  %s1 = inlined_call_operand.vmem [shape: f32[1,32], index: 1, kind: input, shape index: {}]
  %s2 = inlined_call_operand.vmem [shape: f32[1,32], index: 2, kind: input, shape index: {}]
  %s3 = inlined_call_operand.vmem [shape: f32[104,32], index: 3, kind: input, shape index: {}]
  %s4 = inlined_call_operand.vmem [shape: bf16[104,32], index: 4, kind: output, shape index: {}]
  %s5 = sld [smem:[#allocation0]]
  $region26: #{inverse_dcgan_forward.10} parent=0
    _
  %s7 = ssub.s32 1, %s5
  %s8 = scalar_select 0, %s7, %s5
  %9 = sst [smem:[#allocation2]] %s0
  // Predicated region
  $region2: #{inverse_dcgan_forward.10} parent=0 // pred_check
    _
  $region3: #{inverse_dcgan_forward.10} parent=0 // pred_check_branch
    %11 = sbr.rel (0) target = $region5
  $region4: #{inverse_dcgan_forward.10} parent=0 // pred_region
    _
  $region5: #{inverse_dcgan_forward.10} parent=0 // pred_fallthru
    _
  // Predicated region
  $region6: #{inverse_dcgan_forward.10} parent=0 // pred_check
    _
  $region7: #{inverse_dcgan_forward.10} parent=0 // pred_check_branch
    %13 = sbr.rel (0) target = $region9
  $region8: #{inverse_dcgan_forward.10} parent=0 // pred_region
    _
  $region9: #{inverse_dcgan_forward.10} parent=0 // pred_fallthru
    _
  // Predicated region
  $region10: #{inverse_dcgan_forward.10} parent=0 // pred_check
    _
  $region11: #{inverse_dcgan_forward.10} parent=0 // pred_check_branch
    %15 = sbr.rel (0) target = $region13
  $region12: #{inverse_dcgan_forward.10} parent=0 // pred_region
    _
  $region13: #{inverse_dcgan_forward.10} parent=0 // pred_fallthru
    _
  // Predicated region
  $region14: #{inverse_dcgan_forward.10} parent=0 // pred_check
    _
  $region15: #{inverse_dcgan_forward.10} parent=0 // pred_check_branch
    %17 = sbr.rel (0) target = $region17
  $region16: #{inverse_dcgan_forward.10} parent=0 // pred_region
    _
  $region17: #{inverse_dcgan_forward.10} parent=0 // pred_fallthru
    _
  %v18 = vld [vmem:[%s3] sm:$0xff]
  %v19 = vld [vmem:[%s3 + $0x8] sm:$0xff]
  %v20 = vld [vmem:[%s3 + $0x10] sm:$0xff]
  %v21 = vld [vmem:[%s3 + $0x18] sm:$0xff]
  %v22 = vld [vmem:[%s3 + $0x20] sm:$0xff]
  %v23 = vld [vmem:[%s3 + $0x28] sm:$0xff]
  %v24 = vld [vmem:[%s3 + $0x30] sm:$0xff]
  %v25 = vld [vmem:[%s3 + $0x38] sm:$0xff]
  %v26 = vld [vmem:[%s3 + $0x40] sm:$0xff]
  %v27 = vld [vmem:[%s3 + $0x48] sm:$0xff]
  %v28 = vld [vmem:[%s3 + $0x50] sm:$0xff]
  %v29 = vld [vmem:[%s3 + $0x58] sm:$0xff]
  %v30 = vld [vmem:[%s3 + $0x60] sm:$0xff]
  %v31 = vld [vmem:[%s1] sm:$0x1]
  %v33 = vperm.slane %v31, 0
  %v35 = vmul.f32 %v18, %v33
  %v36 = vmul.f32 %v19, %v33
  %v37 = vmul.f32 %v20, %v33
  %v38 = vmul.f32 %v21, %v33
  %v39 = vmul.f32 %v22, %v33
  %v40 = vmul.f32 %v23, %v33
  %v41 = vmul.f32 %v24, %v33
  %v42 = vmul.f32 %v25, %v33
  %v43 = vmul.f32 %v26, %v33
  %v44 = vmul.f32 %v27, %v33
  %v45 = vmul.f32 %v28, %v33
  %v46 = vmul.f32 %v29, %v33
  %v47 = vmul.f32 %v30, %v33
  %v48 = vld [vmem:[%s2] sm:$0x1]
  %v50 = vperm.slane %v48, 0
  %v52 = vadd.f32 %v35, %v50
  %v53 = vadd.f32 %v36, %v50
  %v54 = vadd.f32 %v37, %v50
  %v55 = vadd.f32 %v38, %v50
  %v56 = vadd.f32 %v39, %v50
  %v57 = vadd.f32 %v40, %v50
  %v58 = vadd.f32 %v41, %v50
  %v59 = vadd.f32 %v42, %v50
  %v60 = vadd.f32 %v43, %v50
  %v61 = vadd.f32 %v44, %v50
  %v62 = vadd.f32 %v45, %v50
  %v63 = vadd.f32 %v46, %v50
  %v64 = vadd.f32 %v47, %v50
  %vm65 = vcmp.ge.f32.partialorder %v52, 0.0
  %vm66 = vcmp.ge.f32.partialorder %v53, 0.0
  %vm67 = vcmp.ge.f32.partialorder %v54, 0.0
  %vm68 = vcmp.ge.f32.partialorder %v55, 0.0
  %vm69 = vcmp.ge.f32.partialorder %v56, 0.0
  %vm70 = vcmp.ge.f32.partialorder %v57, 0.0
  %vm71 = vcmp.ge.f32.partialorder %v58, 0.0
  %vm72 = vcmp.ge.f32.partialorder %v59, 0.0
  %vm73 = vcmp.ge.f32.partialorder %v60, 0.0
  %vm74 = vcmp.ge.f32.partialorder %v61, 0.0
  %vm75 = vcmp.ge.f32.partialorder %v62, 0.0
  %vm76 = vcmp.ge.f32.partialorder %v63, 0.0
  %vm77 = vcmp.ge.f32.partialorder %v64, 0.0
  %v78 = vmul.f32 %v52, 0.2
  %v79 = vmul.f32 %v53, 0.2
  %v80 = vmul.f32 %v54, 0.2
  %v81 = vmul.f32 %v55, 0.2
  %v82 = vmul.f32 %v56, 0.2
  %v83 = vmul.f32 %v57, 0.2
  %v84 = vmul.f32 %v58, 0.2
  %v85 = vmul.f32 %v59, 0.2
  %v86 = vmul.f32 %v60, 0.2
  %v87 = vmul.f32 %v61, 0.2
  %v88 = vmul.f32 %v62, 0.2
  %v89 = vmul.f32 %v63, 0.2
  %v90 = vmul.f32 %v64, 0.2
  %v91 = vsel %vm65, %v52, %v78
  %v92 = vsel %vm66, %v53, %v79
  %v93 = vsel %vm67, %v54, %v80
  %v94 = vsel %vm68, %v55, %v81
  %v95 = vsel %vm69, %v56, %v82
  %v96 = vsel %vm70, %v57, %v83
  %v97 = vsel %vm71, %v58, %v84
  %v98 = vsel %vm72, %v59, %v85
  %v99 = vsel %vm73, %v60, %v86
  %v100 = vsel %vm74, %v61, %v87
  %v101 = vsel %vm75, %v62, %v88
  %v102 = vsel %vm76, %v63, %v89
  %v103 = vsel %vm77, %v64, %v90
  %v104 = vlaneseq
  %v105 = vshrl.u32 %v104, 7
  %v106 = vadd.s32 %v105, 8
  %v107 = vadd.s32 %v105, 16
  %v108 = vadd.s32 %v105, 24
  %v109 = vadd.s32 %v105, 32
  %v110 = vadd.s32 %v105, 40
  %v111 = vadd.s32 %v105, 48
  %v112 = vadd.s32 %v105, 56
  %v113 = vadd.s32 %v105, 64
  %v114 = vadd.s32 %v105, 72
  %v115 = vadd.s32 %v105, 80
  %v116 = vadd.s32 %v105, 88
  %v117 = vadd.s32 %v105, 96
  %v118 = vlaneseq
  %v119 = vand.u32 %v118, 127
  %s120 = smul.u32 0, 104
  %v121 = vstv %s120
  %v122 = vadd.s32 %v121, %v105
  %v123 = vadd.s32 %v121, %v106
  %v124 = vadd.s32 %v121, %v107
  %v125 = vadd.s32 %v121, %v108
  %v126 = vadd.s32 %v121, %v109
  %v127 = vadd.s32 %v121, %v110
  %v128 = vadd.s32 %v121, %v111
  %v129 = vadd.s32 %v121, %v112
  %v130 = vadd.s32 %v121, %v113
  %v131 = vadd.s32 %v121, %v114
  %v132 = vadd.s32 %v121, %v115
  %v133 = vadd.s32 %v121, %v116
  %v134 = vadd.s32 %v121, %v117
  %v135 = vmul.u32 %v122, 32
  %v136 = vmul.u32 %v123, 32
  %v137 = vmul.u32 %v124, 32
  %v138 = vmul.u32 %v125, 32
  %v139 = vmul.u32 %v126, 32
  %v140 = vmul.u32 %v127, 32
  %v141 = vmul.u32 %v128, 32
  %v142 = vmul.u32 %v129, 32
  %v143 = vmul.u32 %v130, 32
  %v144 = vmul.u32 %v131, 32
  %v145 = vmul.u32 %v132, 32
  %v146 = vmul.u32 %v133, 32
  %v147 = vmul.u32 %v134, 32
  %v148 = vadd.s32 %v135, %v119
  %v149 = vadd.s32 %v136, %v119
  %v150 = vadd.s32 %v137, %v119
  %v151 = vadd.s32 %v138, %v119
  %v152 = vadd.s32 %v139, %v119
  %v153 = vadd.s32 %v140, %v119
  %v154 = vadd.s32 %v141, %v119
  %v155 = vadd.s32 %v142, %v119
  %v156 = vadd.s32 %v143, %v119
  %v157 = vadd.s32 %v144, %v119
  %v158 = vadd.s32 %v145, %v119
  %v159 = vadd.s32 %v146, %v119
  %v160 = vadd.s32 %v147, %v119
  %s161 = sld [smem:[#allocation2]]
  %v162 = vmul.u32 %v148, 2654435761
  %v163 = vmul.u32 %v149, 2654435761
  %v164 = vmul.u32 %v150, 2654435761
  %v165 = vmul.u32 %v151, 2654435761
  %v166 = vmul.u32 %v152, 2654435761
  %v167 = vmul.u32 %v153, 2654435761
  %v168 = vmul.u32 %v154, 2654435761
  %v169 = vmul.u32 %v155, 2654435761
  %v170 = vmul.u32 %v156, 2654435761
  %v171 = vmul.u32 %v157, 2654435761
  %v172 = vmul.u32 %v158, 2654435761
  %v173 = vmul.u32 %v159, 2654435761
  %v174 = vmul.u32 %v160, 2654435761
  %s175 = smul.u32 %s161, 2246822519
  %v176 = vstv %s175
  %v177 = vadd.s32 %v162, %v176
  %v178 = vadd.s32 %v163, %v176
  %v179 = vadd.s32 %v164, %v176
  %v180 = vadd.s32 %v165, %v176
  %v181 = vadd.s32 %v166, %v176
  %v182 = vadd.s32 %v167, %v176
  %v183 = vadd.s32 %v168, %v176
  %v184 = vadd.s32 %v169, %v176
  %v185 = vadd.s32 %v170, %v176
  %v186 = vadd.s32 %v171, %v176
  %v187 = vadd.s32 %v172, %v176
  %v188 = vadd.s32 %v173, %v176
  %v189 = vadd.s32 %v174, %v176
  %v190 = vshrl.u32 %v177, 16
  %v191 = vshrl.u32 %v178, 16
  %v192 = vshrl.u32 %v179, 16
  %v193 = vshrl.u32 %v180, 16
  %v194 = vshrl.u32 %v181, 16
  %v195 = vshrl.u32 %v182, 16
  %v196 = vshrl.u32 %v183, 16
  %v197 = vshrl.u32 %v184, 16
  %v198 = vshrl.u32 %v185, 16
  %v199 = vshrl.u32 %v186, 16
  %v200 = vshrl.u32 %v187, 16
  %v201 = vshrl.u32 %v188, 16
  %v202 = vshrl.u32 %v189, 16
  %v203 = vxor.u32 %v177, %v190
  %v204 = vxor.u32 %v178, %v191
  %v205 = vxor.u32 %v179, %v192
  %v206 = vxor.u32 %v180, %v193
  %v207 = vxor.u32 %v181, %v194
  %v208 = vxor.u32 %v182, %v195
  %v209 = vxor.u32 %v183, %v196
  %v210 = vxor.u32 %v184, %v197
  %v211 = vxor.u32 %v185, %v198
  %v212 = vxor.u32 %v186, %v199
  %v213 = vxor.u32 %v187, %v200
  %v214 = vxor.u32 %v188, %v201
  %v215 = vxor.u32 %v189, %v202
  %v216 = vmul.u32 %v203, 2146121005
  %v217 = vmul.u32 %v204, 2146121005
  %v218 = vmul.u32 %v205, 2146121005
  %v219 = vmul.u32 %v206, 2146121005
  %v220 = vmul.u32 %v207, 2146121005
  %v221 = vmul.u32 %v208, 2146121005
  %v222 = vmul.u32 %v209, 2146121005
  %v223 = vmul.u32 %v210, 2146121005
  %v224 = vmul.u32 %v211, 2146121005
  %v225 = vmul.u32 %v212, 2146121005
  %v226 = vmul.u32 %v213, 2146121005
  %v227 = vmul.u32 %v214, 2146121005
  %v228 = vmul.u32 %v215, 2146121005
  %v229 = vshrl.u32 %v216, 15
  %v230 = vshrl.u32 %v217, 15
  %v231 = vshrl.u32 %v218, 15
  %v232 = vshrl.u32 %v219, 15
  %v233 = vshrl.u32 %v220, 15
  %v234 = vshrl.u32 %v221, 15
  %v235 = vshrl.u32 %v222, 15
  %v236 = vshrl.u32 %v223, 15
  %v237 = vshrl.u32 %v224, 15
  %v238 = vshrl.u32 %v225, 15
  %v239 = vshrl.u32 %v226, 15
  %v240 = vshrl.u32 %v227, 15
  %v241 = vshrl.u32 %v228, 15
  %v242 = vxor.u32 %v216, %v229
  %v243 = vxor.u32 %v217, %v230
  %v244 = vxor.u32 %v218, %v231
  %v245 = vxor.u32 %v219, %v232
  %v246 = vxor.u32 %v220, %v233
  %v247 = vxor.u32 %v221, %v234
  %v248 = vxor.u32 %v222, %v235
  %v249 = vxor.u32 %v223, %v236
  %v250 = vxor.u32 %v224, %v237
  %v251 = vxor.u32 %v225, %v238
  %v252 = vxor.u32 %v226, %v239
  %v253 = vxor.u32 %v227, %v240
  %v254 = vxor.u32 %v228, %v241
  %v255 = vmul.u32 %v242, 2221713035
  %v256 = vmul.u32 %v243, 2221713035
  %v257 = vmul.u32 %v244, 2221713035
  %v258 = vmul.u32 %v245, 2221713035
  %v259 = vmul.u32 %v246, 2221713035
  %v260 = vmul.u32 %v247, 2221713035
  %v261 = vmul.u32 %v248, 2221713035
  %v262 = vmul.u32 %v249, 2221713035
  %v263 = vmul.u32 %v250, 2221713035
  %v264 = vmul.u32 %v251, 2221713035
  %v265 = vmul.u32 %v252, 2221713035
  %v266 = vmul.u32 %v253, 2221713035
  %v267 = vmul.u32 %v254, 2221713035
  %v268 = vshrl.u32 %v255, 16
  %v269 = vshrl.u32 %v256, 16
  %v270 = vshrl.u32 %v257, 16
  %v271 = vshrl.u32 %v258, 16
  %v272 = vshrl.u32 %v259, 16
  %v273 = vshrl.u32 %v260, 16
  %v274 = vshrl.u32 %v261, 16
  %v275 = vshrl.u32 %v262, 16
  %v276 = vshrl.u32 %v263, 16
  %v277 = vshrl.u32 %v264, 16
  %v278 = vshrl.u32 %v265, 16
  %v279 = vshrl.u32 %v266, 16
  %v280 = vshrl.u32 %v267, 16
  %v281 = vxor.u32 %v255, %v268
  %v282 = vxor.u32 %v256, %v269
  %v283 = vxor.u32 %v257, %v270
  %v284 = vxor.u32 %v258, %v271
  %v285 = vxor.u32 %v259, %v272
  %v286 = vxor.u32 %v260, %v273
  %v287 = vxor.u32 %v261, %v274
  %v288 = vxor.u32 %v262, %v275
  %v289 = vxor.u32 %v263, %v276
  %v290 = vxor.u32 %v264, %v277
  %v291 = vxor.u32 %v265, %v278
  %v292 = vxor.u32 %v266, %v279
  %v293 = vxor.u32 %v267, %v280
  %v294 = vand.u32 %v281, 1
  %v295 = vand.u32 %v282, 1
  %v296 = vand.u32 %v283, 1
  %v297 = vand.u32 %v284, 1
  %v298 = vand.u32 %v285, 1
  %v299 = vand.u32 %v286, 1
  %v300 = vand.u32 %v287, 1
  %v301 = vand.u32 %v288, 1
  %v302 = vand.u32 %v289, 1
  %v303 = vand.u32 %v290, 1
  %v304 = vand.u32 %v291, 1
  %v305 = vand.u32 %v292, 1
  %v306 = vand.u32 %v293, 1
  %vm307 = vcmp.eq.s32.totalorder %v294, 0
  %vm308 = vcmp.eq.s32.totalorder %v295, 0
  %vm309 = vcmp.eq.s32.totalorder %v296, 0
  %vm310 = vcmp.eq.s32.totalorder %v297, 0
  %vm311 = vcmp.eq.s32.totalorder %v298, 0
  %vm312 = vcmp.eq.s32.totalorder %v299, 0
  %vm313 = vcmp.eq.s32.totalorder %v300, 0
  %vm314 = vcmp.eq.s32.totalorder %v301, 0
  %vm315 = vcmp.eq.s32.totalorder %v302, 0
  %vm316 = vcmp.eq.s32.totalorder %v303, 0
  %vm317 = vcmp.eq.s32.totalorder %v304, 0
  %vm318 = vcmp.eq.s32.totalorder %v305, 0
  %vm319 = vcmp.eq.s32.totalorder %v306, 0
  %v320 = vadd.f32 %v91, %v91
  %v321 = vadd.f32 %v92, %v92
  %v322 = vadd.f32 %v93, %v93
  %v323 = vadd.f32 %v94, %v94
  %v324 = vadd.f32 %v95, %v95
  %v325 = vadd.f32 %v96, %v96
  %v326 = vadd.f32 %v97, %v97
  %v327 = vadd.f32 %v98, %v98
  %v328 = vadd.f32 %v99, %v99
  %v329 = vadd.f32 %v100, %v100
  %v330 = vadd.f32 %v101, %v101
  %v331 = vadd.f32 %v102, %v102
  %v332 = vadd.f32 %v103, %v103
  %v333 = vsel %vm307, %v320, 0.0
  %v334 = vsel %vm308, %v321, 0.0
  %v335 = vsel %vm309, %v322, 0.0
  %v336 = vsel %vm310, %v323, 0.0
  %v337 = vsel %vm311, %v324, 0.0
  %v338 = vsel %vm312, %v325, 0.0
  %v339 = vsel %vm313, %v326, 0.0
  %v340 = vsel %vm314, %v327, 0.0
  %v341 = vsel %vm315, %v328, 0.0
  %v342 = vsel %vm316, %v329, 0.0
  %v343 = vsel %vm317, %v330, 0.0
  %v344 = vsel %vm318, %v331, 0.0
  %v345 = vsel %vm319, %v332, 0.0
  %v346 = vpack.c.bf16 %v333, %v333
  %v347 = vpack.c.bf16 %v334, %v334
  %v348 = vpack.c.bf16 %v335, %v335
  %v349 = vpack.c.bf16 %v336, %v336
  %v350 = vpack.c.bf16 %v337, %v337
  %v351 = vpack.c.bf16 %v338, %v338
  %v352 = vpack.c.bf16 %v339, %v339
  %v353 = vpack.c.bf16 %v340, %v340
  %v354 = vpack.c.bf16 %v341, %v341
  %v355 = vpack.c.bf16 %v342, %v342
  %v356 = vpack.c.bf16 %v343, %v343
  %v357 = vpack.c.bf16 %v344, %v344
  %v358 = vpack.c.bf16 %v345, %v345
  %vm359 = vcmask 257024
  %360 = vst.msk [vmem:[%s4] sm:$0xf] %vm359, %v346
  %361 = vst.msk [vmem:[%s4 + $0x4] sm:$0xf] %vm359, %v347
  %362 = vst.msk [vmem:[%s4 + $0x8] sm:$0xf] %vm359, %v348
  %363 = vst.msk [vmem:[%s4 + $0xc] sm:$0xf] %vm359, %v349
  %364 = vst.msk [vmem:[%s4 + $0x10] sm:$0xf] %vm359, %v350
  %365 = vst.msk [vmem:[%s4 + $0x14] sm:$0xf] %vm359, %v351
  %366 = vst.msk [vmem:[%s4 + $0x18] sm:$0xf] %vm359, %v352
  %367 = vst.msk [vmem:[%s4 + $0x1c] sm:$0xf] %vm359, %v353
  %368 = vst.msk [vmem:[%s4 + $0x20] sm:$0xf] %vm359, %v354
  %369 = vst.msk [vmem:[%s4 + $0x24] sm:$0xf] %vm359, %v355
  %370 = vst.msk [vmem:[%s4 + $0x28] sm:$0xf] %vm359, %v356
  %371 = vst.msk [vmem:[%s4 + $0x2c] sm:$0xf] %vm359, %v357
  %372 = vst.msk [vmem:[%s4 + $0x30] sm:$0xf] %vm359, %v358
  // Predicated region
  $region18: #{inverse_dcgan_forward.10} parent=0 // pred_check
    _
  $region19: #{inverse_dcgan_forward.10} parent=0 // pred_check_branch
    %374 = sbr.rel (0) target = $region21
  $region20: #{inverse_dcgan_forward.10} parent=0 // pred_region
    _
  $region21: #{inverse_dcgan_forward.10} parent=0 // pred_fallthru
    _
  // Predicated region
  $region22: #{inverse_dcgan_forward.10} parent=0 // pred_check
    _
  $region23: #{inverse_dcgan_forward.10} parent=0 // pred_check_branch
    %376 = sbr.rel (0) target = $region25
  $region24: #{inverse_dcgan_forward.10} parent=0 // pred_region
    _
  $region25: #{inverse_dcgan_forward.10} parent=0 // pred_fallthru
    _

// kernel: inverse_dcgan_forward.11
$region0: #{inverse_dcgan_forward.11}
  #allocation0 [shape = 'u32[]', space=smem, size = 0x4, offset = 0x4, fixed_abs, tag = 'smem constant byte address 0x4 - core index']
  #allocation1 [shape = 'u32[72,128]{1,0:T(1,128)}', space=vmem, size = 0x9000, scoped, tag = 'internal scratch']
  %s0 = inlined_call_operand.vmem [shape: bf16[24,288], index: 0, kind: input, shape index: {}]
  %s1 = inlined_call_operand.vmem [shape: bf16[288,64], index: 1, kind: input, shape index: {}]
  %s2 = inlined_call_operand.vmem [shape: f32[24,64], index: 2, kind: output, shape index: {0}]
  %s3 = inlined_call_operand.vmem [shape: f32[1,8,64], index: 3, kind: output, shape index: {1}]
  %4 = xla_tuple %s2, %s3
  %s5 = sld [smem:[#allocation0]]
  $region26: #{inverse_dcgan_forward.11} parent=0
    _
  %s7 = ssub.s32 1, %s5
  %s8 = scalar_select 0, %s7, %s5
  // Predicated region
  $region2: #{inverse_dcgan_forward.11} parent=0 // pred_check
    _
  $region3: #{inverse_dcgan_forward.11} parent=0 // pred_check_branch
    %10 = sbr.rel (0) target = $region5
  $region4: #{inverse_dcgan_forward.11} parent=0 // pred_region
    _
  $region5: #{inverse_dcgan_forward.11} parent=0 // pred_fallthru
    _
  // Predicated region
  $region6: #{inverse_dcgan_forward.11} parent=0 // pred_check
    _
  $region7: #{inverse_dcgan_forward.11} parent=0 // pred_check_branch
    %12 = sbr.rel (0) target = $region9
  $region8: #{inverse_dcgan_forward.11} parent=0 // pred_region
    _
  $region9: #{inverse_dcgan_forward.11} parent=0 // pred_fallthru
    _
  %v14 = vld [vmem:[%s0] sm:$0xff]
  %v15 = vld [vmem:[%s0 + $0x8] sm:$0xf]
  %v16 = vld [vmem:[%s0 + $0xc] sm:$0xff]
  %v17 = vld [vmem:[%s0 + $0x14] sm:$0xf]
  %v18 = vld [vmem:[%s0 + $0x18] sm:$0xff]
  %v19 = vld [vmem:[%s0 + $0x20] sm:$0xf]
  %v20 = vld [vmem:[%s1] sm:$0xf]
  %v21 = vld [vmem:[%s1 + $0x4] sm:$0xf]
  %v22 = vld [vmem:[%s1 + $0x8] sm:$0xf]
  %v23 = vld [vmem:[%s1 + $0xc] sm:$0xf]
  %v24 = vld [vmem:[%s1 + $0x10] sm:$0xf]
  %v25 = vld [vmem:[%s1 + $0x14] sm:$0xf]
  %v26 = vld [vmem:[%s1 + $0x18] sm:$0xf]
  %v27 = vld [vmem:[%s1 + $0x1c] sm:$0xf]
  %v28 = vld [vmem:[%s1 + $0x20] sm:$0xf]
  %v29 = vld [vmem:[%s1 + $0x24] sm:$0xf]
  %v30 = vld [vmem:[%s1 + $0x28] sm:$0xf]
  %v31 = vld [vmem:[%s1 + $0x2c] sm:$0xf]
  %v32 = vld [vmem:[%s1 + $0x30] sm:$0xf]
  %v33 = vld [vmem:[%s1 + $0x34] sm:$0xf]
  %v34 = vld [vmem:[%s1 + $0x38] sm:$0xf]
  %v35 = vld [vmem:[%s1 + $0x3c] sm:$0xf]
  %v36 = vld [vmem:[%s1 + $0x40] sm:$0xf]
  %v37 = vld [vmem:[%s1 + $0x44] sm:$0xf]
  %v38 = vld [vmem:[%s1 + $0x48] sm:$0xf]
  %v39 = vld [vmem:[%s1 + $0x4c] sm:$0xf]
  %v40 = vld [vmem:[%s1 + $0x50] sm:$0xf]
  %v41 = vld [vmem:[%s1 + $0x54] sm:$0xf]
  %v42 = vld [vmem:[%s1 + $0x58] sm:$0xf]
  %v43 = vld [vmem:[%s1 + $0x5c] sm:$0xf]
  %v44 = vld [vmem:[%s1 + $0x60] sm:$0xf]
  %v45 = vld [vmem:[%s1 + $0x64] sm:$0xf]
  %v46 = vld [vmem:[%s1 + $0x68] sm:$0xf]
  %v47 = vld [vmem:[%s1 + $0x6c] sm:$0xf]
  %v48 = vld [vmem:[%s1 + $0x70] sm:$0xf]
  %v49 = vld [vmem:[%s1 + $0x74] sm:$0xf]
  %v50 = vld [vmem:[%s1 + $0x78] sm:$0xf]
  %v51 = vld [vmem:[%s1 + $0x7c] sm:$0xf]
  %v52 = vld [vmem:[%s1 + $0x80] sm:$0xf]
  %v53 = vld [vmem:[%s1 + $0x84] sm:$0xf]
  %v54 = vld [vmem:[%s1 + $0x88] sm:$0xf]
  %v55 = vld [vmem:[%s1 + $0x8c] sm:$0xf]
  %v62 = vunpack.c.l.b16 %v14
  %v63 = vunpack.c.h.b16 %v14
  %v64 = vunpack.c.l.b16 %v15
  %v65 = vunpack.c.l.b16 %v16
  %v66 = vunpack.c.h.b16 %v16
  %v67 = vunpack.c.l.b16 %v17
  %v68 = vunpack.c.l.b16 %v18
  %v69 = vunpack.c.h.b16 %v18
  %v70 = vunpack.c.l.b16 %v19
  %v71 = vpack.c.b16 %v65, %v62
  %v72 = vpack.c.b16 %v66, %v63
  %v73 = vpack.c.b16 %v67, %v64
  %v74 = vpack.c.b16 %v68, %v68
  %v75 = vpack.c.b16 %v69, %v69
  %v76 = vpack.c.b16 %v70, %v70
  %v117 = vunpack.c.l.b16 %v20
  %v118 = vunpack.c.l.b16 %v21
  %v119 = vunpack.c.l.b16 %v22
  %v120 = vunpack.c.l.b16 %v23
  %v121 = vunpack.c.l.b16 %v24
  %v122 = vunpack.c.l.b16 %v25
  %v123 = vunpack.c.l.b16 %v26
  %v124 = vunpack.c.l.b16 %v27
  %v125 = vunpack.c.l.b16 %v28
  %v126 = vunpack.c.l.b16 %v29
  %v127 = vunpack.c.l.b16 %v30
  %v128 = vunpack.c.l.b16 %v31
  %v129 = vunpack.c.l.b16 %v32
  %v130 = vunpack.c.l.b16 %v33
  %v131 = vunpack.c.l.b16 %v34
  %v132 = vunpack.c.l.b16 %v35
  %v133 = vunpack.c.l.b16 %v36
  %v134 = vunpack.c.l.b16 %v37
  %v135 = vunpack.c.l.b16 %v38
  %v136 = vunpack.c.l.b16 %v39
  %v137 = vunpack.c.l.b16 %v40
  %v138 = vunpack.c.l.b16 %v41
  %v139 = vunpack.c.l.b16 %v42
  %v140 = vunpack.c.l.b16 %v43
  %v141 = vunpack.c.l.b16 %v44
  %v142 = vunpack.c.l.b16 %v45
  %v143 = vunpack.c.l.b16 %v46
  %v144 = vunpack.c.l.b16 %v47
  %v145 = vunpack.c.l.b16 %v48
  %v146 = vunpack.c.l.b16 %v49
  %v147 = vunpack.c.l.b16 %v50
  %v148 = vunpack.c.l.b16 %v51
  %v149 = vunpack.c.l.b16 %v52
  %v150 = vunpack.c.l.b16 %v53
  %v151 = vunpack.c.l.b16 %v54
  %v152 = vunpack.c.l.b16 %v55
  %v153 = vpack.c.b16 %v118, %v117
  %v154 = vpack.c.b16 %v120, %v119
  %v155 = vpack.c.b16 %v122, %v121
  %v156 = vpack.c.b16 %v124, %v123
  %v157 = vpack.c.b16 %v126, %v125
  %v158 = vpack.c.b16 %v128, %v127
  %v159 = vpack.c.b16 %v130, %v129
  %v160 = vpack.c.b16 %v132, %v131
  %v161 = vpack.c.b16 %v134, %v133
  %v162 = vpack.c.b16 %v136, %v135
  %v163 = vpack.c.b16 %v138, %v137
  %v164 = vpack.c.b16 %v140, %v139
  %v165 = vpack.c.b16 %v142, %v141
  %v166 = vpack.c.b16 %v144, %v143
  %v167 = vpack.c.b16 %v146, %v145
  %v168 = vpack.c.b16 %v148, %v147
  %v169 = vpack.c.b16 %v150, %v149
  %v170 = vpack.c.b16 %v152, %v151
  %vm189 = vcmask 261120
  %v191 = vsel %vm189, %v73, 0
  %v194 = vsel %vm189, %v76, 0
  %196 = vmatpush.bf16.msra.mxu0 %v160
  %197 = vmatpush.bf16.msra.mxu0 %v159
  %198 = vmatpush.bf16.msra.mxu0 %v158
  %199 = vmatpush.bf16.msra.mxu0 %v157
  %200 = vmatpush.bf16.msra.mxu0 %v156
  %201 = vmatpush.bf16.msra.mxu0 %v155
  %202 = vmatpush.bf16.msra.mxu0 %v154
  %203 = vmatpush.bf16.msra.mxu0 %v153
  %204 = vmatmul.bf16.gmra.mxu0 %v71
  %v205 = vpop.f32.mrf.mxu0
  %v206 = vadd.f32 0.0, %v205
  %v207 = vpop.f32.mrf.mxu0
  %v208 = vadd.f32 0.0, %v207
  %209 = vmatmul.bf16.gmra.mxu0 %v74
  %v210 = vpop.f32.mrf.mxu0
  %v211 = vadd.f32 0.0, %v210
  %v212 = vpop.f32.mrf.mxu0
  %213 = vdwg.mxu0
  %214 = vmatpush.bf16.msra.mxu0 %v168
  %215 = vmatpush.bf16.msra.mxu0 %v167
  %216 = vmatpush.bf16.msra.mxu0 %v166
  %217 = vmatpush.bf16.msra.mxu0 %v165
  %218 = vmatpush.bf16.msra.mxu0 %v164
  %219 = vmatpush.bf16.msra.mxu0 %v163
  %220 = vmatpush.bf16.msra.mxu0 %v162
  %221 = vmatpush.bf16.msra.mxu0 %v161
  %222 = vmatmul.bf16.gmra.mxu0 %v72
  %v223 = vpop.f32.mrf.mxu0
  %v224 = vadd.f32 %v206, %v223
  %v225 = vpop.f32.mrf.mxu0
  %v226 = vadd.f32 %v208, %v225
  %227 = vmatmul.bf16.gmra.mxu0 %v75
  %v228 = vpop.f32.mrf.mxu0
  %v229 = vadd.f32 %v211, %v228
  %v230 = vpop.f32.mrf.mxu0
  %231 = vdwg.mxu0
  %232 = vmatpush.bf16.msra.mxu0 0
  %233 = vmatpush.bf16.msra.mxu0 0
  %234 = vmatpush.bf16.msra.mxu0 0
  %235 = vmatpush.bf16.msra.mxu0 0
  %236 = vmatpush.bf16.msra.mxu0 0
  %237 = vmatpush.bf16.msra.mxu0 0
  %238 = vmatpush.bf16.msra.mxu0 %v170
  %239 = vmatpush.bf16.msra.mxu0 %v169
  %240 = vmatmul.bf16.gmra.mxu0 %v191
  %v241 = vpop.f32.mrf.mxu0
  %v242 = vadd.f32 %v224, %v241
  %v243 = vpop.f32.mrf.mxu0
  %v244 = vadd.f32 %v226, %v243
  %245 = vmatmul.bf16.gmra.mxu0 %v194
  %v246 = vpop.f32.mrf.mxu0
  %v247 = vadd.f32 %v229, %v246
  %v248 = vpop.f32.mrf.mxu0
  %249 = vdwg.mxu0
  %vm250 = vcmask 523264
  %251 = vst.msk [vmem:[%s2] sm:$0xff] %vm250, %v242
  %252 = vst.msk [vmem:[%s2 + $0x8] sm:$0xff] %vm250, %v244
  %253 = vst.msk [vmem:[%s2 + $0x10] sm:$0xff] %vm250, %v247
  %v254 = vsel %vm250, %v242, 0.0
  %v255 = vsel %vm250, %v244, 0.0
  %v256 = vadd.f32 %v254, %v255
  %v257 = vsel %vm250, %v247, 0.0
  %v258 = vadd.f32 %v256, %v257
  %v259 = vrot.slane %v258, 4
  %v260 = vadd.f32 %v258, %v259
  %v261 = vrot.slane %v260, 2
  %v262 = vadd.f32 %v260, %v261
  %v263 = vrot.slane %v262, 1
  %v264 = vadd.f32 %v262, %v263
  %v265 = vmul.f32 %v242, %v242
  %v266 = vmul.f32 %v244, %v244
  %v267 = vmul.f32 %v247, %v247
  %v268 = vsel %vm250, %v265, 0.0
  %v269 = vsel %vm250, %v266, 0.0
  %v270 = vadd.f32 %v268, %v269
  %v271 = vsel %vm250, %v267, 0.0
  %v272 = vadd.f32 %v270, %v271
  %v273 = vrot.slane %v272, 4
  %v274 = vadd.f32 %v272, %v273
  %v275 = vrot.slane %v274, 2
  %v276 = vadd.f32 %v274, %v275
  %v277 = vrot.slane %v276, 1
  %v278 = vadd.f32 %v276, %v277
  %v279 = vlaneseq
  %v280 = vshrl.u32 %v279, 7
  %vm281 = vcmp.eq.s32.totalorder %v280, 0
  %vm282 = vcmp.eq.s32.totalorder %v280, 1
  %v283 = vsel %vm282, %v278, 0.0
  %v284 = vsel %vm281, %v264, %v283
  %285 = vst.msk [vmem:[%s3] sm:$0xff] %vm250, %v284
  // Predicated region
  $region10: #{inverse_dcgan_forward.11} parent=0 // pred_check
    _
  $region11: #{inverse_dcgan_forward.11} parent=0 // pred_check_branch
    %287 = sbr.rel (0) target = $region13
  $region12: #{inverse_dcgan_forward.11} parent=0 // pred_region
    _
  $region13: #{inverse_dcgan_forward.11} parent=0 // pred_fallthru
    _
  // Predicated region
  $region14: #{inverse_dcgan_forward.11} parent=0 // pred_check
    _
  $region15: #{inverse_dcgan_forward.11} parent=0 // pred_check_branch
    %289 = sbr.rel (0) target = $region17
  $region16: #{inverse_dcgan_forward.11} parent=0 // pred_region
    _
  $region17: #{inverse_dcgan_forward.11} parent=0 // pred_fallthru
    _
  // Predicated region
  $region18: #{inverse_dcgan_forward.11} parent=0 // pred_check
    _
  $region19: #{inverse_dcgan_forward.11} parent=0 // pred_check_branch
    %291 = sbr.rel (0) target = $region21
  $region20: #{inverse_dcgan_forward.11} parent=0 // pred_region
    _
  $region21: #{inverse_dcgan_forward.11} parent=0 // pred_fallthru
    _
  // Predicated region
  $region22: #{inverse_dcgan_forward.11} parent=0 // pred_check
    _
  $region23: #{inverse_dcgan_forward.11} parent=0 // pred_check_branch
    %293 = sbr.rel (0) target = $region25
  $region24: #{inverse_dcgan_forward.11} parent=0 // pred_region
    _
  $region25: #{inverse_dcgan_forward.11} parent=0 // pred_fallthru
    _

// kernel: inverse_dcgan_forward.12
$region0: #{inverse_dcgan_forward.12}
  #allocation0 [shape = 'u32[]', space=smem, size = 0x4, offset = 0x4, fixed_abs, tag = 'smem constant byte address 0x4 - core index']
  #allocation1 [shape = 'u32[72,128]{1,0:T(1,128)}', space=vmem, size = 0x9000, scoped, tag = 'internal scratch']
  #allocation2 [shape = 's32[1]{0:T(128)S(6)}', space=smem, size = 0x200, scoped, tag = 'scoped memory for inverse_dcgan_forward.12']
  %s0 = inlined_call_operand.<no memory space> [shape: s32[1], index: 0, kind: input, shape index: {}]
  %s1 = inlined_call_operand.vmem [shape: f32[1,64], index: 1, kind: input, shape index: {}]
  %s2 = inlined_call_operand.vmem [shape: f32[1,64], index: 2, kind: input, shape index: {}]
  %s3 = inlined_call_operand.vmem [shape: f32[24,64], index: 3, kind: input, shape index: {}]
  %s4 = inlined_call_operand.vmem [shape: bf16[24,64], index: 4, kind: output, shape index: {}]
  %s5 = sld [smem:[#allocation0]]
  $region26: #{inverse_dcgan_forward.12} parent=0
    _
  %s7 = ssub.s32 1, %s5
  %s8 = scalar_select 0, %s7, %s5
  %9 = sst [smem:[#allocation2]] %s0
  // Predicated region
  $region2: #{inverse_dcgan_forward.12} parent=0 // pred_check
    _
  $region3: #{inverse_dcgan_forward.12} parent=0 // pred_check_branch
    %11 = sbr.rel (0) target = $region5
  $region4: #{inverse_dcgan_forward.12} parent=0 // pred_region
    _
  $region5: #{inverse_dcgan_forward.12} parent=0 // pred_fallthru
    _
  // Predicated region
  $region6: #{inverse_dcgan_forward.12} parent=0 // pred_check
    _
  $region7: #{inverse_dcgan_forward.12} parent=0 // pred_check_branch
    %13 = sbr.rel (0) target = $region9
  $region8: #{inverse_dcgan_forward.12} parent=0 // pred_region
    _
  $region9: #{inverse_dcgan_forward.12} parent=0 // pred_fallthru
    _
  // Predicated region
  $region10: #{inverse_dcgan_forward.12} parent=0 // pred_check
    _
  $region11: #{inverse_dcgan_forward.12} parent=0 // pred_check_branch
    %15 = sbr.rel (0) target = $region13
  $region12: #{inverse_dcgan_forward.12} parent=0 // pred_region
    _
  $region13: #{inverse_dcgan_forward.12} parent=0 // pred_fallthru
    _
  // Predicated region
  $region14: #{inverse_dcgan_forward.12} parent=0 // pred_check
    _
  $region15: #{inverse_dcgan_forward.12} parent=0 // pred_check_branch
    %17 = sbr.rel (0) target = $region17
  $region16: #{inverse_dcgan_forward.12} parent=0 // pred_region
    _
  $region17: #{inverse_dcgan_forward.12} parent=0 // pred_fallthru
    _
  %v18 = vld [vmem:[%s3] sm:$0xff]
  %v19 = vld [vmem:[%s3 + $0x8] sm:$0xff]
  %v20 = vld [vmem:[%s3 + $0x10] sm:$0xff]
  %v21 = vld [vmem:[%s1] sm:$0x1]
  %v23 = vperm.slane %v21, 0
  %v25 = vmul.f32 %v18, %v23
  %v26 = vmul.f32 %v19, %v23
  %v27 = vmul.f32 %v20, %v23
  %v28 = vld [vmem:[%s2] sm:$0x1]
  %v30 = vperm.slane %v28, 0
  %v32 = vadd.f32 %v25, %v30
  %v33 = vadd.f32 %v26, %v30
  %v34 = vadd.f32 %v27, %v30
  %vm35 = vcmp.ge.f32.partialorder %v32, 0.0
  %vm36 = vcmp.ge.f32.partialorder %v33, 0.0
  %vm37 = vcmp.ge.f32.partialorder %v34, 0.0
  %v38 = vmul.f32 %v32, 0.2
  %v39 = vmul.f32 %v33, 0.2
  %v40 = vmul.f32 %v34, 0.2
  %v41 = vsel %vm35, %v32, %v38
  %v42 = vsel %vm36, %v33, %v39
  %v43 = vsel %vm37, %v34, %v40
  %v44 = vlaneseq
  %v45 = vshrl.u32 %v44, 7
  %v46 = vadd.s32 %v45, 8
  %v47 = vadd.s32 %v45, 16
  %v48 = vlaneseq
  %v49 = vand.u32 %v48, 127
  %s50 = smul.u32 0, 24
  %v51 = vstv %s50
  %v52 = vadd.s32 %v51, %v45
  %v53 = vadd.s32 %v51, %v46
  %v54 = vadd.s32 %v51, %v47
  %v55 = vmul.u32 %v52, 64
  %v56 = vmul.u32 %v53, 64
  %v57 = vmul.u32 %v54, 64
  %v58 = vadd.s32 %v55, %v49
  %v59 = vadd.s32 %v56, %v49
  %v60 = vadd.s32 %v57, %v49
  %s61 = sld [smem:[#allocation2]]
  %v62 = vmul.u32 %v58, 2654435761
  %v63 = vmul.u32 %v59, 2654435761
  %v64 = vmul.u32 %v60, 2654435761
  %s65 = smul.u32 %s61, 2246822519
  %v66 = vstv %s65
  %v67 = vadd.s32 %v62, %v66
  %v68 = vadd.s32 %v63, %v66
  %v69 = vadd.s32 %v64, %v66
  %v70 = vshrl.u32 %v67, 16
  %v71 = vshrl.u32 %v68, 16
  %v72 = vshrl.u32 %v69, 16
  %v73 = vxor.u32 %v67, %v70
  %v74 = vxor.u32 %v68, %v71
  %v75 = vxor.u32 %v69, %v72
  %v76 = vmul.u32 %v73, 2146121005
  %v77 = vmul.u32 %v74, 2146121005
  %v78 = vmul.u32 %v75, 2146121005
  %v79 = vshrl.u32 %v76, 15
  %v80 = vshrl.u32 %v77, 15
  %v81 = vshrl.u32 %v78, 15
  %v82 = vxor.u32 %v76, %v79
  %v83 = vxor.u32 %v77, %v80
  %v84 = vxor.u32 %v78, %v81
  %v85 = vmul.u32 %v82, 2221713035
  %v86 = vmul.u32 %v83, 2221713035
  %v87 = vmul.u32 %v84, 2221713035
  %v88 = vshrl.u32 %v85, 16
  %v89 = vshrl.u32 %v86, 16
  %v90 = vshrl.u32 %v87, 16
  %v91 = vxor.u32 %v85, %v88
  %v92 = vxor.u32 %v86, %v89
  %v93 = vxor.u32 %v87, %v90
  %v94 = vand.u32 %v91, 1
  %v95 = vand.u32 %v92, 1
  %v96 = vand.u32 %v93, 1
  %vm97 = vcmp.eq.s32.totalorder %v94, 0
  %vm98 = vcmp.eq.s32.totalorder %v95, 0
  %vm99 = vcmp.eq.s32.totalorder %v96, 0
  %v100 = vadd.f32 %v41, %v41
  %v101 = vadd.f32 %v42, %v42
  %v102 = vadd.f32 %v43, %v43
  %v103 = vsel %vm97, %v100, 0.0
  %v104 = vsel %vm98, %v101, 0.0
  %v105 = vsel %vm99, %v102, 0.0
  %v106 = vpack.c.bf16 %v103, %v103
  %v107 = vpack.c.bf16 %v104, %v104
  %v108 = vpack.c.bf16 %v105, %v105
  %vm109 = vcmask 519168
  %110 = vst.msk [vmem:[%s4] sm:$0xf] %vm109, %v106
  %111 = vst.msk [vmem:[%s4 + $0x4] sm:$0xf] %vm109, %v107
  %112 = vst.msk [vmem:[%s4 + $0x8] sm:$0xf] %vm109, %v108
  // Predicated region
  $region18: #{inverse_dcgan_forward.12} parent=0 // pred_check
    _
  $region19: #{inverse_dcgan_forward.12} parent=0 // pred_check_branch
    %114 = sbr.rel (0) target = $region21
  $region20: #{inverse_dcgan_forward.12} parent=0 // pred_region
    _
  $region21: #{inverse_dcgan_forward.12} parent=0 // pred_fallthru
    _
  // Predicated region
  $region22: #{inverse_dcgan_forward.12} parent=0 // pred_check
    _
  $region23: #{inverse_dcgan_forward.12} parent=0 // pred_check_branch
    %116 = sbr.rel (0) target = $region25
  $region24: #{inverse_dcgan_forward.12} parent=0 // pred_region
    _
  $region25: #{inverse_dcgan_forward.12} parent=0 // pred_fallthru
    _

// kernel: inverse_dcgan_forward.13
$region0: #{inverse_dcgan_forward.13}
  #allocation0 [shape = 'u32[]', space=smem, size = 0x4, offset = 0x4, fixed_abs, tag = 'smem constant byte address 0x4 - core index']
  #allocation1 [shape = 'u32[72,128]{1,0:T(1,128)}', space=vmem, size = 0x9000, scoped, tag = 'internal scratch']
  %s0 = inlined_call_operand.vmem [shape: bf16[2,576], index: 0, kind: input, shape index: {}]
  %s1 = inlined_call_operand.vmem [shape: bf16[576,64], index: 1, kind: input, shape index: {}]
  %s2 = inlined_call_operand.vmem [shape: f32[1,64], index: 2, kind: input, shape index: {}]
  %s3 = inlined_call_operand.vmem [shape: bf16[64,100], index: 3, kind: input, shape index: {}]
  %s4 = inlined_call_operand.vmem [shape: f32[1,100], index: 4, kind: input, shape index: {}]
  %s5 = inlined_call_operand.hbm [shape: f32[2,100], index: 5, kind: output, shape index: {}]
  %s6 = sld [smem:[#allocation0]]
  $region30: #{inverse_dcgan_forward.13} parent=0
    _
  %s8 = ssub.s32 1, %s6
  %s9 = scalar_select 0, %s8, %s6
  $region1: #{inverse_dcgan_forward.13} parent=0
    #allocation2 [shape = 'u8[1024]{0}', space=vmem, size = 0x400, scoped, tag = 'output window, operand 0, single buffered']
    #allocation3 [shape = 's32[1]{0}', space=sflag, size = 0x4, scoped, tag = 'scoped memory for inverse_dcgan_forward.13']
    %10 = vsyncpa [#allocation3], 0
    // Predicated region
    $region2: #{inverse_dcgan_forward.13} parent=1 // pred_check
      _
    $region3: #{inverse_dcgan_forward.13} parent=1 // pred_check_branch
      %12 = sbr.rel (0) target = $region5
    $region4: #{inverse_dcgan_forward.13} parent=1 // pred_region
      _
    $region5: #{inverse_dcgan_forward.13} parent=1 // pred_fallthru
      _
    // Predicated region
    $region6: #{inverse_dcgan_forward.13} parent=1 // pred_check
      _
    $region7: #{inverse_dcgan_forward.13} parent=1 // pred_check_branch
      %14 = sbr.rel (0) target = $region9
    $region8: #{inverse_dcgan_forward.13} parent=1 // pred_region
      _
    $region9: #{inverse_dcgan_forward.13} parent=1 // pred_fallthru
      _
    // Predicated region
    $region10: #{inverse_dcgan_forward.13} parent=1 // pred_check
      _
    $region11: #{inverse_dcgan_forward.13} parent=1 // pred_check_branch
      %16 = sbr.rel (0) target = $region13
    $region12: #{inverse_dcgan_forward.13} parent=1 // pred_region
      _
    $region13: #{inverse_dcgan_forward.13} parent=1 // pred_fallthru
      _
    // Predicated region
    $region14: #{inverse_dcgan_forward.13} parent=1 // pred_check
      _
    $region15: #{inverse_dcgan_forward.13} parent=1 // pred_check_branch
      %18 = sbr.rel (0) target = $region17
    $region16: #{inverse_dcgan_forward.13} parent=1 // pred_region
      _
    $region17: #{inverse_dcgan_forward.13} parent=1 // pred_fallthru
      _
    // Predicated region
    $region18: #{inverse_dcgan_forward.13} parent=1 // pred_check
      _
    $region19: #{inverse_dcgan_forward.13} parent=1 // pred_check_branch
      %20 = sbr.rel (0) target = $region21
    $region20: #{inverse_dcgan_forward.13} parent=1 // pred_region
      _
    $region21: #{inverse_dcgan_forward.13} parent=1 // pred_fallthru
      _
    %v22 = vld [vmem:[%s0] sm:$0x1f]
    %v23 = vld [vmem:[%s1] sm:$0xf]
    %v24 = vld [vmem:[%s1 + $0x4] sm:$0xf]
    %v25 = vld [vmem:[%s1 + $0x8] sm:$0xf]
    %v26 = vld [vmem:[%s1 + $0xc] sm:$0xf]
    %v27 = vld [vmem:[%s1 + $0x10] sm:$0xf]
    %v28 = vld [vmem:[%s1 + $0x14] sm:$0xf]
    %v29 = vld [vmem:[%s1 + $0x18] sm:$0xf]
    %v30 = vld [vmem:[%s1 + $0x1c] sm:$0xf]
    %v31 = vld [vmem:[%s1 + $0x20] sm:$0xf]
    %v32 = vld [vmem:[%s1 + $0x24] sm:$0xf]
    %v33 = vld [vmem:[%s1 + $0x28] sm:$0xf]
    %v34 = vld [vmem:[%s1 + $0x2c] sm:$0xf]
    %v35 = vld [vmem:[%s1 + $0x30] sm:$0xf]
    %v36 = vld [vmem:[%s1 + $0x34] sm:$0xf]
    %v37 = vld [vmem:[%s1 + $0x38] sm:$0xf]
    %v38 = vld [vmem:[%s1 + $0x3c] sm:$0xf]
    %v39 = vld [vmem:[%s1 + $0x40] sm:$0xf]
    %v40 = vld [vmem:[%s1 + $0x44] sm:$0xf]
    %v41 = vld [vmem:[%s1 + $0x48] sm:$0xf]
    %v42 = vld [vmem:[%s1 + $0x4c] sm:$0xf]
    %v43 = vld [vmem:[%s1 + $0x50] sm:$0xf]
    %v44 = vld [vmem:[%s1 + $0x54] sm:$0xf]
    %v45 = vld [vmem:[%s1 + $0x58] sm:$0xf]
    %v46 = vld [vmem:[%s1 + $0x5c] sm:$0xf]
    %v47 = vld [vmem:[%s1 + $0x60] sm:$0xf]
    %v48 = vld [vmem:[%s1 + $0x64] sm:$0xf]
    %v49 = vld [vmem:[%s1 + $0x68] sm:$0xf]
    %v50 = vld [vmem:[%s1 + $0x6c] sm:$0xf]
    %v51 = vld [vmem:[%s1 + $0x70] sm:$0xf]
    %v52 = vld [vmem:[%s1 + $0x74] sm:$0xf]
    %v53 = vld [vmem:[%s1 + $0x78] sm:$0xf]
    %v54 = vld [vmem:[%s1 + $0x7c] sm:$0xf]
    %v55 = vld [vmem:[%s1 + $0x80] sm:$0xf]
    %v56 = vld [vmem:[%s1 + $0x84] sm:$0xf]
    %v57 = vld [vmem:[%s1 + $0x88] sm:$0xf]
    %v58 = vld [vmem:[%s1 + $0x8c] sm:$0xf]
    %v59 = vld [vmem:[%s1 + $0x90] sm:$0xf]
    %v60 = vld [vmem:[%s1 + $0x94] sm:$0xf]
    %v61 = vld [vmem:[%s1 + $0x98] sm:$0xf]
    %v62 = vld [vmem:[%s1 + $0x9c] sm:$0xf]
    %v63 = vld [vmem:[%s1 + $0xa0] sm:$0xf]
    %v64 = vld [vmem:[%s1 + $0xa4] sm:$0xf]
    %v65 = vld [vmem:[%s1 + $0xa8] sm:$0xf]
    %v66 = vld [vmem:[%s1 + $0xac] sm:$0xf]
    %v67 = vld [vmem:[%s1 + $0xb0] sm:$0xf]
    %v68 = vld [vmem:[%s1 + $0xb4] sm:$0xf]
    %v69 = vld [vmem:[%s1 + $0xb8] sm:$0xf]
    %v70 = vld [vmem:[%s1 + $0xbc] sm:$0xf]
    %v71 = vld [vmem:[%s1 + $0xc0] sm:$0xf]
    %v72 = vld [vmem:[%s1 + $0xc4] sm:$0xf]
    %v73 = vld [vmem:[%s1 + $0xc8] sm:$0xf]
    %v74 = vld [vmem:[%s1 + $0xcc] sm:$0xf]
    %v75 = vld [vmem:[%s1 + $0xd0] sm:$0xf]
    %v76 = vld [vmem:[%s1 + $0xd4] sm:$0xf]
    %v77 = vld [vmem:[%s1 + $0xd8] sm:$0xf]
    %v78 = vld [vmem:[%s1 + $0xdc] sm:$0xf]
    %v79 = vld [vmem:[%s1 + $0xe0] sm:$0xf]
    %v80 = vld [vmem:[%s1 + $0xe4] sm:$0xf]
    %v81 = vld [vmem:[%s1 + $0xe8] sm:$0xf]
    %v82 = vld [vmem:[%s1 + $0xec] sm:$0xf]
    %v83 = vld [vmem:[%s1 + $0xf0] sm:$0xf]
    %v84 = vld [vmem:[%s1 + $0xf4] sm:$0xf]
    %v85 = vld [vmem:[%s1 + $0xf8] sm:$0xf]
    %v86 = vld [vmem:[%s1 + $0xfc] sm:$0xf]
    %v87 = vld [vmem:[%s1 + $0x100] sm:$0xf]
    %v88 = vld [vmem:[%s1 + $0x104] sm:$0xf]
    %v89 = vld [vmem:[%s1 + $0x108] sm:$0xf]
    %v90 = vld [vmem:[%s1 + $0x10c] sm:$0xf]
    %v91 = vld [vmem:[%s1 + $0x110] sm:$0xf]
    %v92 = vld [vmem:[%s1 + $0x114] sm:$0xf]
    %v93 = vld [vmem:[%s1 + $0x118] sm:$0xf]
    %v94 = vld [vmem:[%s1 + $0x11c] sm:$0xf]
    %v95 = vld [vmem:[%s2] sm:$0x1]
    %v97 = vperm.slane %v95, 0
    %100 = vst [vmem:[#allocation1] ss:$9 sm:$0xff] %v22
    %v101 = vld [vmem:[#allocation1] sm:$0xff]
    %v102 = vld [vmem:[#allocation1 + $0x9] sm:$0xff]
    %v103 = vld [vmem:[#allocation1 + $0x12] sm:$0xff]
    %v104 = vld [vmem:[#allocation1 + $0x1b] sm:$0xff]
    %v105 = vld [vmem:[#allocation1 + $0x24] sm:$0xff]
    %v182 = vunpack.c.l.b16 %v23
    %v183 = vunpack.c.l.b16 %v24
    %v184 = vunpack.c.l.b16 %v25
    %v185 = vunpack.c.l.b16 %v26
    %v186 = vunpack.c.l.b16 %v27
    %v187 = vunpack.c.l.b16 %v28
    %v188 = vunpack.c.l.b16 %v29
    %v189 = vunpack.c.l.b16 %v30
    %v190 = vunpack.c.l.b16 %v31
    %v191 = vunpack.c.l.b16 %v32
    %v192 = vunpack.c.l.b16 %v33
    %v193 = vunpack.c.l.b16 %v34
    %v194 = vunpack.c.l.b16 %v35
    %v195 = vunpack.c.l.b16 %v36
    %v196 = vunpack.c.l.b16 %v37
    %v197 = vunpack.c.l.b16 %v38
    %v198 = vunpack.c.l.b16 %v39
    %v199 = vunpack.c.l.b16 %v40
    %v200 = vunpack.c.l.b16 %v41
    %v201 = vunpack.c.l.b16 %v42
    %v202 = vunpack.c.l.b16 %v43
    %v203 = vunpack.c.l.b16 %v44
    %v204 = vunpack.c.l.b16 %v45
    %v205 = vunpack.c.l.b16 %v46
    %v206 = vunpack.c.l.b16 %v47
    %v207 = vunpack.c.l.b16 %v48
    %v208 = vunpack.c.l.b16 %v49
    %v209 = vunpack.c.l.b16 %v50
    %v210 = vunpack.c.l.b16 %v51
    %v211 = vunpack.c.l.b16 %v52
    %v212 = vunpack.c.l.b16 %v53
    %v213 = vunpack.c.l.b16 %v54
    %v214 = vunpack.c.l.b16 %v55
    %v215 = vunpack.c.l.b16 %v56
    %v216 = vunpack.c.l.b16 %v57
    %v217 = vunpack.c.l.b16 %v58
    %v218 = vunpack.c.l.b16 %v59
    %v219 = vunpack.c.l.b16 %v60
    %v220 = vunpack.c.l.b16 %v61
    %v221 = vunpack.c.l.b16 %v62
    %v222 = vunpack.c.l.b16 %v63
    %v223 = vunpack.c.l.b16 %v64
    %v224 = vunpack.c.l.b16 %v65
    %v225 = vunpack.c.l.b16 %v66
    %v226 = vunpack.c.l.b16 %v67
    %v227 = vunpack.c.l.b16 %v68
    %v228 = vunpack.c.l.b16 %v69
    %v229 = vunpack.c.l.b16 %v70
    %v230 = vunpack.c.l.b16 %v71
    %v231 = vunpack.c.l.b16 %v72
    %v232 = vunpack.c.l.b16 %v73
    %v233 = vunpack.c.l.b16 %v74
    %v234 = vunpack.c.l.b16 %v75
    %v235 = vunpack.c.l.b16 %v76
    %v236 = vunpack.c.l.b16 %v77
    %v237 = vunpack.c.l.b16 %v78
    %v238 = vunpack.c.l.b16 %v79
    %v239 = vunpack.c.l.b16 %v80
    %v240 = vunpack.c.l.b16 %v81
    %v241 = vunpack.c.l.b16 %v82
    %v242 = vunpack.c.l.b16 %v83
    %v243 = vunpack.c.l.b16 %v84
    %v244 = vunpack.c.l.b16 %v85
    %v245 = vunpack.c.l.b16 %v86
    %v246 = vunpack.c.l.b16 %v87
    %v247 = vunpack.c.l.b16 %v88
    %v248 = vunpack.c.l.b16 %v89
    %v249 = vunpack.c.l.b16 %v90
    %v250 = vunpack.c.l.b16 %v91
    %v251 = vunpack.c.l.b16 %v92
    %v252 = vunpack.c.l.b16 %v93
    %v253 = vunpack.c.l.b16 %v94
    %v254 = vpack.c.b16 %v183, %v182
    %v255 = vpack.c.b16 %v185, %v184
    %v256 = vpack.c.b16 %v187, %v186
    %v257 = vpack.c.b16 %v189, %v188
    %v258 = vpack.c.b16 %v191, %v190
    %v259 = vpack.c.b16 %v193, %v192
    %v260 = vpack.c.b16 %v195, %v194
    %v261 = vpack.c.b16 %v197, %v196
    %v262 = vpack.c.b16 %v199, %v198
    %v263 = vpack.c.b16 %v201, %v200
    %v264 = vpack.c.b16 %v203, %v202
    %v265 = vpack.c.b16 %v205, %v204
    %v266 = vpack.c.b16 %v207, %v206
    %v267 = vpack.c.b16 %v209, %v208
    %v268 = vpack.c.b16 %v211, %v210
    %v269 = vpack.c.b16 %v213, %v212
    %v270 = vpack.c.b16 %v215, %v214
    %v271 = vpack.c.b16 %v217, %v216
    %v272 = vpack.c.b16 %v219, %v218
    %v273 = vpack.c.b16 %v221, %v220
    %v274 = vpack.c.b16 %v223, %v222
    %v275 = vpack.c.b16 %v225, %v224
    %v276 = vpack.c.b16 %v227, %v226
    %v277 = vpack.c.b16 %v229, %v228
    %v278 = vpack.c.b16 %v231, %v230
    %v279 = vpack.c.b16 %v233, %v232
    %v280 = vpack.c.b16 %v235, %v234
    %v281 = vpack.c.b16 %v237, %v236
    %v282 = vpack.c.b16 %v239, %v238
    %v283 = vpack.c.b16 %v241, %v240
    %v284 = vpack.c.b16 %v243, %v242
    %v285 = vpack.c.b16 %v245, %v244
    %v286 = vpack.c.b16 %v247, %v246
    %v287 = vpack.c.b16 %v249, %v248
    %v288 = vpack.c.b16 %v251, %v250
    %v289 = vpack.c.b16 %v253, %v252
    %vm326 = vcmask 523264
    %v327 = vsel %vm326, %v105, 0
    %329 = vmatpush.bf16.msra.mxu0 %v261
    %330 = vmatpush.bf16.msra.mxu0 %v260
    %331 = vmatpush.bf16.msra.mxu0 %v259
    %332 = vmatpush.bf16.msra.mxu0 %v258
    %333 = vmatpush.bf16.msra.mxu0 %v257
    %334 = vmatpush.bf16.msra.mxu0 %v256
    %335 = vmatpush.bf16.msra.mxu0 %v255
    %336 = vmatpush.bf16.msra.mxu0 %v254
    %337 = vmatmul.bf16.gmra.mxu0 %v101
    %v338 = vpop.f32.mrf.mxu0
    %v339 = vadd.f32 %v97, %v338
    %v340 = vpop.f32.mrf.mxu0
    %341 = vdwg.mxu0
    %342 = vmatpush.bf16.msra.mxu0 %v269
    %343 = vmatpush.bf16.msra.mxu0 %v268
    %344 = vmatpush.bf16.msra.mxu0 %v267
    %345 = vmatpush.bf16.msra.mxu0 %v266
    %346 = vmatpush.bf16.msra.mxu0 %v265
    %347 = vmatpush.bf16.msra.mxu0 %v264
    %348 = vmatpush.bf16.msra.mxu0 %v263
    %349 = vmatpush.bf16.msra.mxu0 %v262
    %350 = vmatmul.bf16.gmra.mxu0 %v102
    %v351 = vpop.f32.mrf.mxu0
    %v352 = vadd.f32 %v339, %v351
    %v353 = vpop.f32.mrf.mxu0
    %354 = vdwg.mxu0
    %355 = vmatpush.bf16.msra.mxu0 %v277
    %356 = vmatpush.bf16.msra.mxu0 %v276
    %357 = vmatpush.bf16.msra.mxu0 %v275
    %358 = vmatpush.bf16.msra.mxu0 %v274
    %359 = vmatpush.bf16.msra.mxu0 %v273
    %360 = vmatpush.bf16.msra.mxu0 %v272
    %361 = vmatpush.bf16.msra.mxu0 %v271
    %362 = vmatpush.bf16.msra.mxu0 %v270
    %363 = vmatmul.bf16.gmra.mxu0 %v103
    %v364 = vpop.f32.mrf.mxu0
    %v365 = vadd.f32 %v352, %v364
    %v366 = vpop.f32.mrf.mxu0
    %367 = vdwg.mxu0
    %368 = vmatpush.bf16.msra.mxu0 %v285
    %369 = vmatpush.bf16.msra.mxu0 %v284
    %370 = vmatpush.bf16.msra.mxu0 %v283
    %371 = vmatpush.bf16.msra.mxu0 %v282
    %372 = vmatpush.bf16.msra.mxu0 %v281
    %373 = vmatpush.bf16.msra.mxu0 %v280
    %374 = vmatpush.bf16.msra.mxu0 %v279
    %375 = vmatpush.bf16.msra.mxu0 %v278
    %376 = vmatmul.bf16.gmra.mxu0 %v104
    %v377 = vpop.f32.mrf.mxu0
    %v378 = vadd.f32 %v365, %v377
    %v379 = vpop.f32.mrf.mxu0
    %380 = vdwg.mxu0
    %381 = vmatpush.bf16.msra.mxu0 0
    %382 = vmatpush.bf16.msra.mxu0 0
    %383 = vmatpush.bf16.msra.mxu0 0
    %384 = vmatpush.bf16.msra.mxu0 0
    %385 = vmatpush.bf16.msra.mxu0 %v289
    %386 = vmatpush.bf16.msra.mxu0 %v288
    %387 = vmatpush.bf16.msra.mxu0 %v287
    %388 = vmatpush.bf16.msra.mxu0 %v286
    %389 = vmatmul.bf16.gmra.mxu0 %v327
    %v390 = vpop.f32.mrf.mxu0
    %v391 = vadd.f32 %v378, %v390
    %v392 = vpop.f32.mrf.mxu0
    %393 = vdwg.mxu0
    %v394 = vpack.c.bf16 %v391, %v391
    %v395 = vld [vmem:[%s3] sm:$0xf]
    %v396 = vld [vmem:[%s3 + $0x4] sm:$0xf]
    %v397 = vld [vmem:[%s3 + $0x8] sm:$0xf]
    %v398 = vld [vmem:[%s3 + $0xc] sm:$0xf]
    %v399 = vld [vmem:[%s3 + $0x10] sm:$0xf]
    %v400 = vld [vmem:[%s3 + $0x14] sm:$0xf]
    %v401 = vld [vmem:[%s3 + $0x18] sm:$0xf]
    %v402 = vld [vmem:[%s3 + $0x1c] sm:$0xf]
    %v403 = vld [vmem:[%s4] sm:$0x1]
    %v405 = vperm.slane %v403, 0
    %v415 = vunpack.c.l.b16 %v395
    %v416 = vunpack.c.l.b16 %v396
    %v417 = vunpack.c.l.b16 %v397
    %v418 = vunpack.c.l.b16 %v398
    %v419 = vunpack.c.l.b16 %v399
    %v420 = vunpack.c.l.b16 %v400
    %v421 = vunpack.c.l.b16 %v401
    %v422 = vunpack.c.l.b16 %v402
    %v423 = vpack.c.b16 %v416, %v415
    %v424 = vpack.c.b16 %v418, %v417
    %v425 = vpack.c.b16 %v420, %v419
    %v426 = vpack.c.b16 %v422, %v421
    %v432 = vsel %vm326, %v394, 0
    %434 = vmatpush.bf16.msra.mxu0 0
    %435 = vmatpush.bf16.msra.mxu0 0
    %436 = vmatpush.bf16.msra.mxu0 0
    %437 = vmatpush.bf16.msra.mxu0 0
    %438 = vmatpush.bf16.msra.mxu0 %v426
    %439 = vmatpush.bf16.msra.mxu0 %v425
    %440 = vmatpush.bf16.msra.mxu0 %v424
    %441 = vmatpush.bf16.msra.mxu0 %v423
    %442 = vmatmul.bf16.gmra.mxu0 %v432
    %v443 = vpop.f32.mrf.mxu0
    %v444 = vadd.f32 %v405, %v443
    %v445 = vpop.f32.mrf.mxu0
    %446 = vdwg.mxu0
    %vm447 = vcmask 812032
    %448 = vst.msk [vmem:[#allocation2] sm:$0x3] %vm447, %v444
    // Predicated region
    $region22: #{inverse_dcgan_forward.13} parent=1 // pred_check
      _
    $region23: #{inverse_dcgan_forward.13} parent=1 // pred_check_branch
      %450 = sbr.rel (0) target = $region25
    $region24: #{inverse_dcgan_forward.13} parent=1 // pred_region
      %452 = vsyncadd [#allocation3], 0
      %s454 = sshll.u32 [#allocation2], 4
      %s455 = int_to_ptr.vmem [resolvable:$true] %s454
      %s456 = sshll.u32 %s5, 4
      %s457 = int_to_ptr.hbm [resolvable:$true] %s456
      %459 = dma.vmem_to_hbm [thread:$0]  %s455, 32, %s457, [#allocation3]
    $region25: #{inverse_dcgan_forward.13} parent=1 // pred_fallthru
      _
    // Predicated region
    $region26: #{inverse_dcgan_forward.13} parent=1 // pred_check
      _
    $region27: #{inverse_dcgan_forward.13} parent=1 // pred_check_branch
      %461 = sbr.rel (0) target = $region29
    $region28: #{inverse_dcgan_forward.13} parent=1 // pred_region
      %463 = dma.done [#allocation3], 32
    $region29: #{inverse_dcgan_forward.13} parent=1 // pred_fallthru
      _
    %464 = vsyncpa [#allocation3], 1

</llo_original>
